<compile_context>
chip_gen: v7x
topology: tpu7x:2x2x1
jax: 0.10.0
libtpu: 0.0.40
codegen_flags: <defaults>
</compile_context>

<pallas_src>
import functools
import math

import jax
import jax.numpy as jnp
from jax.experimental import pallas as pl
from jax.experimental.pallas import tpu as pltpu


def _timevar_kp_kernel(res_ref, w_enc_ref, b_enc_ref, w_dec_ref, b_dec_ref,
                       rec_ref, pred_ref, *, bb, freq, step, dyn_dim):
    # res_ref   : (bb*freq, d_in)   bb batch elements' segmented inputs
    # w_enc_ref : (d_in, E),  b_enc_ref : (1, E)
    # w_dec_ref : (E, d_in),  b_dec_ref : (1, d_in)
    # rec_ref   : (bb*freq, d_in)   decoded reconstruction
    # pred_ref  : (bb*step, d_in)   decoded multi-step prediction
    m = freq - 1
    E = dyn_dim

    # ---- fused encoder: ONE (bb*freq, d_in) @ (d_in, E) matmul -------------
    z2 = jnp.dot(res_ref[...], w_enc_ref[...],
                 preferred_element_type=jnp.float32) + b_enc_ref[...]
    z3 = z2.reshape(bb, freq, E)                       # small latent, cheap relayout

    xk = z3[:, :m, :]                                  # (bb, m, E)
    yk = z3[:, 1:, :]                                  # (bb, m, E)

    # ---- batched DMD: K_b = xk_b^T (xk_b xk_b^T)^{-1} yk_b  ----------------
    # Gram (bb, m, m), then unpivoted Gauss-Jordan batched over bb: the
    # dependent chain is only m iterations of broadcasted VPU ops.
    G = jax.lax.dot_general(xk, xk, (((2,), (2,)), ((0,), (0,))),
                            preferred_element_type=jnp.float32)       # (bb, m, m)
    A = yk
    Gc = G
    iota_mid = jax.lax.broadcasted_iota(jnp.int32, (1, m, 1), 1)
    # TODO(synk): Inf / rank-deficient Gram is not handled (unpivoted solve;
    # the module only checks NaN, torch.lstsq would return a finite solution).
    for i in range(m):                                 # m tiny & static, serial chain
        is_i = iota_mid == i                           # (1, m, 1)
        inv_piv = 1.0 / Gc[:, i:i + 1, i:i + 1]        # (bb, 1, 1)
        rowG = Gc[:, i:i + 1, :] * inv_piv             # (bb, 1, m)
        rowA = A[:, i:i + 1, :] * inv_piv              # (bb, 1, E)
        colG = Gc[:, :, i:i + 1]                       # (bb, m, 1)
        Gc = jnp.where(is_i, rowG, Gc - colG * rowG)
        A = jnp.where(is_i, rowA, A - colG * rowA)
    # A == G^{-1} yk ;  K = xk^T @ A   (bb, E, E)
    K = jax.lax.dot_general(xk, A, (((1,), (1,)), ((0,), (0,))),
                            preferred_element_type=jnp.float32)

    # ---- NaN fallback: K <- identity (matches KPLayer_AR behaviour) --------
    # TODO(synk): torch checks isnan(K).any() over the WHOLE batch and replaces
    # K for every element; here the check/fallback is per batch element.
    nan_f = jnp.where(jnp.isnan(K), 1.0, 0.0)
    nan_f = jnp.max(jnp.max(nan_f, axis=2, keepdims=True), axis=1, keepdims=True)
    has_nan = nan_f > 0.0                                              # (bb, 1, 1)
    eye3 = (jax.lax.broadcasted_iota(jnp.int32, (1, E, E), 1)
            == jax.lax.broadcasted_iota(jnp.int32, (1, E, E), 2)).astype(jnp.float32)
    K = jnp.where(has_nan, eye3, K)

    # ---- latent reconstruction: xk @ K == yk exactly (min-norm lstsq) ------
    rec_rows = jnp.where(has_nan, xk, yk)                              # (bb, m, E)
    zrec3 = jnp.concatenate([z3[:, :1, :], rec_rows], axis=1)          # (bb, freq, E)

    # ---- multi-step rollout, batched over bb (t-outer / b-inner) -----------
    zp = jax.lax.dot_general(z3[:, m:, :], K, (((2,), (1,)), ((0,), (0,))),
                             preferred_element_type=jnp.float32)       # (bb, 1, E)
    preds = [zp]
    for _ in range(1, step):
        zp = jax.lax.dot_general(zp, K, (((2,), (1,)), ((0,), (0,))),
                                 preferred_element_type=jnp.float32)
        preds.append(zp)
    zpred3 = jnp.concatenate(preds, axis=1)                            # (bb, step, E)

    # ---- single fused decoder matmul + full lane-dense block stores --------
    lat = jnp.concatenate([zrec3.reshape(bb * freq, E),
                           zpred3.reshape(bb * step, E)], axis=0)
    dec = jnp.dot(lat, w_dec_ref[...],
                  preferred_element_type=jnp.float32) + b_dec_ref[...]
    rec_ref[...] = dec[:bb * freq, :]        # bb*freq is a multiple of 8 (aligned slice)
    pred_ref[...] = dec[bb * freq:, :]


def _round_up(x, n):
    return -(-x // n) * n


def _pick_batch_block(B, freq, step, d_in, dyn_dim, *,
                      vmem_budget=8 << 20, target_rows=256):
    """Pick bb: multiple of the (8,128)-tiling unit, sized for MXU M-fill & VMEM.

    bb*freq and bb*step must be multiples of 8 sublanes.  bb grows until the
    encoder matmul's M (= bb*freq) reaches ~target_rows or a conservative
    per-grid-step VMEM estimate binds (safe for v5e's 16 MiB scoped default).
    """
    unit_f = 8 // math.gcd(8, freq)
    unit_s = 8 // math.gcd(8, step)
    unit = unit_f * unit_s // math.gcd(unit_f, unit_s)
    # rough f32 bytes per batch element per grid step: double-buffered in/out
    # blocks + latents + per-batch Koopman operator K + decoded block.
    per_b = 4 * (2 * freq * d_in + 2 * (freq + step) * d_in
                 + (freq + step) * d_in
                 + 4 * (freq + step) * dyn_dim
                 + dyn_dim * dyn_dim)
    cap = max(unit, (vmem_budget // per_b) // unit * unit)
    bb = unit
    while bb * 2 <= cap and bb * freq < target_rows:
        bb *= 2
    bb = min(bb, _round_up(B, unit))         # don't grossly over-pad tiny batches
    # keep >=2 grid steps when cheap (v7x shards the "parallel" axis over 2 TCs)
    if (bb >= _round_up(B, unit) and B > bb // 2 >= unit
            and (bb // 2) % unit == 0 and (bb // 2) * freq >= 128):
        bb //= 2
    return bb


def build_pallas_forward(B_pad, freq, step, d_in, dyn_dim, bb):
    assert B_pad % bb == 0
    assert (bb * freq) % 8 == 0 and (bb * step) % 8 == 0
    kernel = functools.partial(_timevar_kp_kernel, bb=bb, freq=freq, step=step,
                               dyn_dim=dyn_dim)
    return pl.pallas_call(
        kernel,
        out_shape=(
            jax.ShapeDtypeStruct((B_pad * freq, d_in), jnp.float32),
            jax.ShapeDtypeStruct((B_pad * step, d_in), jnp.float32),
        ),
        grid_spec=pltpu.PrefetchScalarGridSpec(
            num_scalar_prefetch=0,
            grid=(B_pad // bb,),
            in_specs=[
                pl.BlockSpec((bb * freq, d_in), lambda g: (g, 0)),
                pl.BlockSpec((d_in, dyn_dim), lambda g: (0, 0)),
                pl.BlockSpec((1, dyn_dim), lambda g: (0, 0)),
                pl.BlockSpec((dyn_dim, d_in), lambda g: (0, 0)),
                pl.BlockSpec((1, d_in), lambda g: (0, 0)),
            ],
            out_specs=(
                pl.BlockSpec((bb * freq, d_in), lambda g: (g, 0)),
                pl.BlockSpec((bb * step, d_in), lambda g: (g, 0)),
            ),
        ),
        compiler_params=pltpu.CompilerParams(
            dimension_semantics=("parallel",)),
    )


def timevar_kp_ar_forward(x, w_enc, b_enc, w_dec, b_dec, *,
                          input_len, pred_len, seg_len, enc_in, dynamic_dim,
                          batch_block=None):
    """JAX/Pallas equivalent of TimeVarKP_AR.forward (layout glue + Pallas kernel)."""
    B, L, C = x.shape
    assert L == input_len and C == enc_in
    freq = math.ceil(input_len / seg_len)
    step = math.ceil(pred_len / seg_len)
    padding_len = seg_len * freq - input_len
    d_in = seg_len * enc_in
    assert freq > 1, "need at least 2 snapshots for DMD"
    assert freq - 1 <= dynamic_dim, \
        "kernel implements the min-norm (underdetermined) lstsq branch"

    if padding_len > 0:
        res = jnp.concatenate([x[:, L - padding_len:, :], x], axis=1)
    else:
        res = x
    # cat -> chunk(freq) -> stack -> reshape  ==  contiguous reshape (free in XLA)
    res = res.reshape(B, freq, d_in)

    bb = (_pick_batch_block(B, freq, step, d_in, dynamic_dim)
          if batch_block is None else batch_block)
    assert (bb * freq) % 8 == 0 and (bb * step) % 8 == 0, \
        "batch_block breaks (8,128) block tiling"

    # Pad the batch (edge replication) to a multiple of bb; padded rows are
    # computed but discarded, never contaminating real batch elements.
    B_pad = _round_up(B, bb)
    if B_pad > B:
        pad = jnp.broadcast_to(res[-1:], (B_pad - B, freq, d_in))
        res = jnp.concatenate([res, pad], axis=0)
    res2 = res.reshape(B_pad * freq, d_in)

    pallas_fn = build_pallas_forward(B_pad, freq, step, d_in, dynamic_dim, bb)
    rec_flat, pred_flat = pallas_fn(res2, w_enc, b_enc, w_dec, b_dec)

    x_rec = rec_flat.reshape(B_pad, freq * seg_len, enc_in)[:B, :input_len, :]
    x_pred = pred_flat.reshape(B_pad, step * seg_len, enc_in)[:B, :pred_len, :]
    return x_rec, x_pred


def reference_forward(x, w_enc, b_enc, w_dec, b_dec, *,
                      input_len, pred_len, seg_len, enc_in, dynamic_dim):
    """Pure-JAX reference (same math, jnp.linalg.solve for the Gram system)."""
    B, L, C = x.shape
    freq = math.ceil(input_len / seg_len)
    step = math.ceil(pred_len / seg_len)
    padding_len = seg_len * freq - input_len
    d_in = seg_len * enc_in
    if padding_len > 0:
        res = jnp.concatenate([x[:, L - padding_len:, :], x], axis=1)
    else:
        res = x
    res = res.reshape(B, freq, d_in)
    z = res @ w_enc + b_enc                                  # (B, freq, E)
    xk, yk = z[:, :-1], z[:, 1:]                             # (B, m, E)
    G = jnp.einsum('bme,bne->bmn', xk, xk)                   # (B, m, m)
    A = jnp.linalg.solve(G, yk)                              # (B, m, E)
    K = jnp.einsum('bme,bmf->bef', xk, A)                    # (B, E, E)
    z_rec = jnp.concatenate([z[:, :1], jnp.einsum('bme,bef->bmf', xk, K)], axis=1)
    zp = jnp.einsum('bme,bef->bmf', z[:, -1:], K)
    preds = [zp]
    for _ in range(1, step):
        zp = jnp.einsum('bme,bef->bmf', zp, K)
        preds.append(zp)
    z_preds = jnp.concatenate(preds, axis=1)
    x_rec = (z_rec @ w_dec + b_dec).reshape(B, freq * seg_len, enc_in)[:, :input_len]
    x_pred = (z_preds @ w_dec + b_dec).reshape(B, step * seg_len, enc_in)[:, :pred_len]
    return x_rec, x_pred


if __name__ == "__main__":
    # Small, module-consistent shapes (B=5 also exercises batch padding).
    B = 5
    enc_in = 4
    input_len = 14
    pred_len = 14
    seg_len = 4            # -> freq = 4, step = 4, padding_len = 2
    dynamic_dim = 32
    d_in = seg_len * enc_in

    key = jax.random.PRNGKey(0)
    k1, k2, k3, k4, k5 = jax.random.split(key, 5)
    x = jax.random.normal(k1, (B, input_len, enc_in), dtype=jnp.float32)
    # Deterministic synthetic encoder/decoder parameters (Linear layers).
    w_enc = jax.random.normal(k2, (d_in, dynamic_dim), jnp.float32) / jnp.sqrt(float(d_in))
    b_enc = jax.random.normal(k3, (1, dynamic_dim), jnp.float32) * 0.01
    w_dec = jax.random.normal(k4, (dynamic_dim, d_in), jnp.float32) / jnp.sqrt(float(dynamic_dim))
    b_dec = jax.random.normal(k5, (1, d_in), jnp.float32) * 0.01

    cfg = dict(input_len=input_len, pred_len=pred_len, seg_len=seg_len,
               enc_in=enc_in, dynamic_dim=dynamic_dim)

    r_rec, r_pred = reference_forward(x, w_enc, b_enc, w_dec, b_dec, **cfg)
    jax.block_until_ready((r_rec, r_pred))

    # Run 1: auto batch block (single grid step, padded batch).
    x_rec, x_pred = timevar_kp_ar_forward(x, w_enc, b_enc, w_dec, b_dec, **cfg)
    jax.block_until_ready((x_rec, x_pred))
    assert x_rec.shape == (B, input_len, enc_in)
    assert x_pred.shape == (B, pred_len, enc_in)
    assert jnp.allclose(x_rec, r_rec, rtol=1e-3, atol=1e-3), "reconstruction mismatch"
    assert jnp.allclose(x_pred, r_pred, rtol=1e-3, atol=1e-3), "prediction mismatch"

    # Run 2: explicit small batch block -> multiple grid steps + batch padding.
    x_rec2, x_pred2 = timevar_kp_ar_forward(x, w_enc, b_enc, w_dec, b_dec,
                                            batch_block=2, **cfg)
    jax.block_until_ready((x_rec2, x_pred2))
    assert jnp.allclose(x_rec2, r_rec, rtol=1e-3, atol=1e-3), "reconstruction mismatch (bb=2)"
    assert jnp.allclose(x_pred2, r_pred, rtol=1e-3, atol=1e-3), "prediction mismatch (bb=2)"

    print("KERNEL_OK")
</pallas_src>

<mosaic_0001>
module attributes {stable_mosaic.version = 11 : i64} {
  func.func @_timevar_kp_kernel(%arg0: i32, %arg1: memref<24x16xf32, #tpu.memory_space<vmem>>, %arg2: memref<16x32xf32, #tpu.memory_space<vmem>>, %arg3: memref<1x32xf32, #tpu.memory_space<vmem>>, %arg4: memref<32x16xf32, #tpu.memory_space<vmem>>, %arg5: memref<1x16xf32, #tpu.memory_space<vmem>>, %arg6: memref<24x16xf32, #tpu.memory_space<vmem>>, %arg7: memref<24x16xf32, #tpu.memory_space<vmem>>) attributes {dimension_semantics = [#tpu.dimension_semantics<parallel>], iteration_bounds = array<i64: 1>, scalar_prefetch = 0 : i64, scratch_operands = 0 : i64, tpu.core_type = #tpu.core_type<tc>, window_params = [{transform_indices = @transform_0, window_bounds = array<i64: 24, 16>}, {pipeline_mode = #tpu.pipeline_mode<synchronous>, transform_indices = @transform_1, window_bounds = array<i64: 16, 32>}, {pipeline_mode = #tpu.pipeline_mode<synchronous>, transform_indices = @transform_2, window_bounds = array<i64: 1, 32>}, {pipeline_mode = #tpu.pipeline_mode<synchronous>, transform_indices = @transform_3, window_bounds = array<i64: 32, 16>}, {pipeline_mode = #tpu.pipeline_mode<synchronous>, transform_indices = @transform_4, window_bounds = array<i64: 1, 16>}, {transform_indices = @transform_5, window_bounds = array<i64: 24, 16>}, {transform_indices = @transform_6, window_bounds = array<i64: 24, 16>}]} {
    %c0 = arith.constant 0 : index
    %c0_0 = arith.constant 0 : index
    %0 = vector.load %arg1[%c0, %c0_0] : memref<24x16xf32, #tpu.memory_space<vmem>>, vector<24x16xf32>
    %c0_1 = arith.constant 0 : index
    %c0_2 = arith.constant 0 : index
    %1 = vector.load %arg2[%c0_1, %c0_2] : memref<16x32xf32, #tpu.memory_space<vmem>>, vector<16x32xf32>
    %cst = arith.constant dense<0.000000e+00> : vector<24x32xf32>
    %2 = tpu.matmul %0, %1, %cst {dimension_numbers = #tpu.dot_dimension_numbers<[1], [0], [0], [1], [0, 0, 1, 1], [], []>} : vector<24x16xf32>, vector<16x32xf32>, vector<24x32xf32> -> vector<24x32xf32>
    %c0_3 = arith.constant 0 : index
    %c0_4 = arith.constant 0 : index
    %3 = vector.load %arg3[%c0_3, %c0_4] : memref<1x32xf32, #tpu.memory_space<vmem>>, vector<1x32xf32>
    %4 = vector.broadcast %3 : vector<1x32xf32> to vector<24x32xf32>
    %5 = arith.addf %2, %4 : vector<24x32xf32>
    %6 = vector.shape_cast %5 : vector<24x32xf32> to vector<6x4x32xf32>
    %7 = vector.extract_strided_slice %6 {offsets = [0, 0, 0], sizes = [6, 3, 32], strides = [1, 1, 1]} : vector<6x4x32xf32> to vector<6x3x32xf32>
    %8 = vector.extract_strided_slice %6 {offsets = [0, 1, 0], sizes = [6, 3, 32], strides = [1, 1, 1]} : vector<6x4x32xf32> to vector<6x3x32xf32>
    %cst_5 = arith.constant dense<0.000000e+00> : vector<6x3x3xf32>
    %9 = tpu.matmul %7, %7, %cst_5 {dimension_numbers = #tpu.dot_dimension_numbers<[2], [2], [1], [1], [0, 0, 0, 1, 1, 1], [0], [0]>} : vector<6x3x32xf32>, vector<6x3x32xf32>, vector<6x3x3xf32> -> vector<6x3x3xf32>
    %10 = tpu.iota {dimensions = array<i32: 1>} : vector<1x3x1xi32>
    %c0_i32 = arith.constant 0 : i32
    %11 = vector.broadcast %c0_i32 : i32 to vector<1x3x1xi32>
    %12 = arith.cmpi eq, %10, %11 : vector<1x3x1xi32>
    %13 = vector.extract_strided_slice %9 {offsets = [0, 0, 0], sizes = [6, 1, 1], strides = [1, 1, 1]} : vector<6x3x3xf32> to vector<6x1x1xf32>
    %cst_6 = arith.constant 1.000000e+00 : f32
    %14 = vector.broadcast %cst_6 : f32 to vector<6x1x1xf32>
    %15 = arith.divf %14, %13 : vector<6x1x1xf32>
    %16 = vector.extract_strided_slice %9 {offsets = [0, 0, 0], sizes = [6, 1, 3], strides = [1, 1, 1]} : vector<6x3x3xf32> to vector<6x1x3xf32>
    %17 = vector.broadcast %15 : vector<6x1x1xf32> to vector<6x1x3xf32>
    %18 = arith.mulf %16, %17 : vector<6x1x3xf32>
    %19 = vector.extract_strided_slice %8 {offsets = [0, 0, 0], sizes = [6, 1, 32], strides = [1, 1, 1]} : vector<6x3x32xf32> to vector<6x1x32xf32>
    %20 = vector.broadcast %15 : vector<6x1x1xf32> to vector<6x1x32xf32>
    %21 = arith.mulf %19, %20 : vector<6x1x32xf32>
    %22 = vector.extract_strided_slice %9 {offsets = [0, 0, 0], sizes = [6, 3, 1], strides = [1, 1, 1]} : vector<6x3x3xf32> to vector<6x3x1xf32>
    %23 = vector.broadcast %22 : vector<6x3x1xf32> to vector<6x3x3xf32>
    %24 = vector.broadcast %18 : vector<6x1x3xf32> to vector<6x3x3xf32>
    %25 = arith.mulf %23, %24 : vector<6x3x3xf32>
    %26 = arith.subf %9, %25 : vector<6x3x3xf32>
    %27 = vector.shape_cast %12 : vector<1x3x1xi1> to vector<1x3x1xi1>
    %28 = vector.broadcast %27 : vector<1x3x1xi1> to vector<6x3x3xi1>
    %29 = vector.shape_cast %18 : vector<6x1x3xf32> to vector<6x1x3xf32>
    %30 = vector.broadcast %29 : vector<6x1x3xf32> to vector<6x3x3xf32>
    %31 = arith.select %28, %30, %26 : vector<6x3x3xi1>, vector<6x3x3xf32>
    %32 = vector.broadcast %22 : vector<6x3x1xf32> to vector<6x3x32xf32>
    %33 = vector.broadcast %21 : vector<6x1x32xf32> to vector<6x3x32xf32>
    %34 = arith.mulf %32, %33 : vector<6x3x32xf32>
    %35 = arith.subf %8, %34 : vector<6x3x32xf32>
    %36 = vector.shape_cast %12 : vector<1x3x1xi1> to vector<1x3x1xi1>
    %37 = vector.broadcast %36 : vector<1x3x1xi1> to vector<6x3x32xi1>
    %38 = vector.shape_cast %21 : vector<6x1x32xf32> to vector<6x1x32xf32>
    %39 = vector.broadcast %38 : vector<6x1x32xf32> to vector<6x3x32xf32>
    %40 = arith.select %37, %39, %35 : vector<6x3x32xi1>, vector<6x3x32xf32>
    %c1_i32 = arith.constant 1 : i32
    %41 = vector.broadcast %c1_i32 : i32 to vector<1x3x1xi32>
    %42 = arith.cmpi eq, %10, %41 : vector<1x3x1xi32>
    %43 = vector.extract_strided_slice %31 {offsets = [0, 1, 1], sizes = [6, 1, 1], strides = [1, 1, 1]} : vector<6x3x3xf32> to vector<6x1x1xf32>
    %cst_7 = arith.constant 1.000000e+00 : f32
    %44 = vector.broadcast %cst_7 : f32 to vector<6x1x1xf32>
    %45 = arith.divf %44, %43 : vector<6x1x1xf32>
    %46 = vector.extract_strided_slice %31 {offsets = [0, 1, 0], sizes = [6, 1, 3], strides = [1, 1, 1]} : vector<6x3x3xf32> to vector<6x1x3xf32>
    %47 = vector.broadcast %45 : vector<6x1x1xf32> to vector<6x1x3xf32>
    %48 = arith.mulf %46, %47 : vector<6x1x3xf32>
    %49 = vector.extract_strided_slice %40 {offsets = [0, 1, 0], sizes = [6, 1, 32], strides = [1, 1, 1]} : vector<6x3x32xf32> to vector<6x1x32xf32>
    %50 = vector.broadcast %45 : vector<6x1x1xf32> to vector<6x1x32xf32>
    %51 = arith.mulf %49, %50 : vector<6x1x32xf32>
    %52 = vector.extract_strided_slice %31 {offsets = [0, 0, 1], sizes = [6, 3, 1], strides = [1, 1, 1]} : vector<6x3x3xf32> to vector<6x3x1xf32>
    %53 = vector.broadcast %52 : vector<6x3x1xf32> to vector<6x3x3xf32>
    %54 = vector.broadcast %48 : vector<6x1x3xf32> to vector<6x3x3xf32>
    %55 = arith.mulf %53, %54 : vector<6x3x3xf32>
    %56 = arith.subf %31, %55 : vector<6x3x3xf32>
    %57 = vector.shape_cast %42 : vector<1x3x1xi1> to vector<1x3x1xi1>
    %58 = vector.broadcast %57 : vector<1x3x1xi1> to vector<6x3x3xi1>
    %59 = vector.shape_cast %48 : vector<6x1x3xf32> to vector<6x1x3xf32>
    %60 = vector.broadcast %59 : vector<6x1x3xf32> to vector<6x3x3xf32>
    %61 = arith.select %58, %60, %56 : vector<6x3x3xi1>, vector<6x3x3xf32>
    %62 = vector.broadcast %52 : vector<6x3x1xf32> to vector<6x3x32xf32>
    %63 = vector.broadcast %51 : vector<6x1x32xf32> to vector<6x3x32xf32>
    %64 = arith.mulf %62, %63 : vector<6x3x32xf32>
    %65 = arith.subf %40, %64 : vector<6x3x32xf32>
    %66 = vector.shape_cast %42 : vector<1x3x1xi1> to vector<1x3x1xi1>
    %67 = vector.broadcast %66 : vector<1x3x1xi1> to vector<6x3x32xi1>
    %68 = vector.shape_cast %51 : vector<6x1x32xf32> to vector<6x1x32xf32>
    %69 = vector.broadcast %68 : vector<6x1x32xf32> to vector<6x3x32xf32>
    %70 = arith.select %67, %69, %65 : vector<6x3x32xi1>, vector<6x3x32xf32>
    %c2_i32 = arith.constant 2 : i32
    %71 = vector.broadcast %c2_i32 : i32 to vector<1x3x1xi32>
    %72 = arith.cmpi eq, %10, %71 : vector<1x3x1xi32>
    %73 = vector.extract_strided_slice %61 {offsets = [0, 2, 2], sizes = [6, 1, 1], strides = [1, 1, 1]} : vector<6x3x3xf32> to vector<6x1x1xf32>
    %cst_8 = arith.constant 1.000000e+00 : f32
    %74 = vector.broadcast %cst_8 : f32 to vector<6x1x1xf32>
    %75 = arith.divf %74, %73 : vector<6x1x1xf32>
    %76 = vector.extract_strided_slice %70 {offsets = [0, 2, 0], sizes = [6, 1, 32], strides = [1, 1, 1]} : vector<6x3x32xf32> to vector<6x1x32xf32>
    %77 = vector.broadcast %75 : vector<6x1x1xf32> to vector<6x1x32xf32>
    %78 = arith.mulf %76, %77 : vector<6x1x32xf32>
    %79 = vector.extract_strided_slice %61 {offsets = [0, 0, 2], sizes = [6, 3, 1], strides = [1, 1, 1]} : vector<6x3x3xf32> to vector<6x3x1xf32>
    %80 = vector.broadcast %79 : vector<6x3x1xf32> to vector<6x3x32xf32>
    %81 = vector.broadcast %78 : vector<6x1x32xf32> to vector<6x3x32xf32>
    %82 = arith.mulf %80, %81 : vector<6x3x32xf32>
    %83 = arith.subf %70, %82 : vector<6x3x32xf32>
    %84 = vector.shape_cast %72 : vector<1x3x1xi1> to vector<1x3x1xi1>
    %85 = vector.broadcast %84 : vector<1x3x1xi1> to vector<6x3x32xi1>
    %86 = vector.shape_cast %78 : vector<6x1x32xf32> to vector<6x1x32xf32>
    %87 = vector.broadcast %86 : vector<6x1x32xf32> to vector<6x3x32xf32>
    %88 = arith.select %85, %87, %83 : vector<6x3x32xi1>, vector<6x3x32xf32>
    %cst_9 = arith.constant dense<0.000000e+00> : vector<6x32x32xf32>
    %89 = tpu.matmul %7, %88, %cst_9 {dimension_numbers = #tpu.dot_dimension_numbers<[1], [1], [2], [2], [0, 0, 0, 2, 1, 2], [0], [0]>} : vector<6x3x32xf32>, vector<6x3x32xf32>, vector<6x32x32xf32> -> vector<6x32x32xf32>
    %90 = arith.cmpf one, %89, %89 : vector<6x32x32xf32>
    %cst_10 = arith.constant 1.000000e+00 : f32
    %cst_11 = arith.constant 0.000000e+00 : f32
    %91 = vector.broadcast %cst_10 : f32 to vector<6x32x32xf32>
    %92 = vector.broadcast %cst_11 : f32 to vector<6x32x32xf32>
    %93 = arith.select %90, %91, %92 : vector<6x32x32xi1>, vector<6x32x32xf32>
    %cst_12 = arith.constant dense<0xFF800000> : vector<6x32xf32>
    %94 = vector.multi_reduction <maximumf>, %93, %cst_12 [2] : vector<6x32x32xf32> to vector<6x32xf32>
    %95 = vector.shape_cast %94 : vector<6x32xf32> to vector<6x32x1xf32>
    %cst_13 = arith.constant dense<0xFF800000> : vector<6x1xf32>
    %96 = vector.multi_reduction <maximumf>, %95, %cst_13 [1] : vector<6x32x1xf32> to vector<6x1xf32>
    %97 = vector.shape_cast %96 : vector<6x1xf32> to vector<6x1x1xf32>
    %cst_14 = arith.constant 0.000000e+00 : f32
    %98 = vector.broadcast %cst_14 : f32 to vector<6x1x1xf32>
    %99 = arith.cmpf ogt, %97, %98 : vector<6x1x1xf32>
    %100 = tpu.iota {dimensions = array<i32: 1>} : vector<1x32x32xi32>
    %101 = tpu.iota {dimensions = array<i32: 2>} : vector<1x32x32xi32>
    %102 = arith.cmpi eq, %100, %101 : vector<1x32x32xi32>
    %103 = arith.extui %102 : vector<1x32x32xi1> to vector<1x32x32xi32>
    %104 = arith.sitofp %103 : vector<1x32x32xi32> to vector<1x32x32xf32>
    %105 = vector.shape_cast %99 : vector<6x1x1xi1> to vector<6x1x1xi1>
    %106 = vector.broadcast %105 : vector<6x1x1xi1> to vector<6x32x32xi1>
    %107 = vector.shape_cast %104 : vector<1x32x32xf32> to vector<1x32x32xf32>
    %108 = vector.broadcast %107 : vector<1x32x32xf32> to vector<6x32x32xf32>
    %109 = arith.select %106, %108, %89 : vector<6x32x32xi1>, vector<6x32x32xf32>
    %110 = vector.shape_cast %99 : vector<6x1x1xi1> to vector<6x1x1xi1>
    %111 = vector.broadcast %110 : vector<6x1x1xi1> to vector<6x3x32xi1>
    %112 = arith.select %111, %7, %8 : vector<6x3x32xi1>, vector<6x3x32xf32>
    %113 = vector.extract_strided_slice %6 {offsets = [0, 0, 0], sizes = [6, 1, 32], strides = [1, 1, 1]} : vector<6x4x32xf32> to vector<6x1x32xf32>
    %114 = tpu.concatenate %113, %112 in 1 : vector<6x1x32xf32>, vector<6x3x32xf32> -> vector<6x4x32xf32>
    %115 = vector.extract_strided_slice %6 {offsets = [0, 3, 0], sizes = [6, 1, 32], strides = [1, 1, 1]} : vector<6x4x32xf32> to vector<6x1x32xf32>
    %cst_15 = arith.constant dense<0.000000e+00> : vector<6x1x32xf32>
    %116 = tpu.matmul %115, %109, %cst_15 {dimension_numbers = #tpu.dot_dimension_numbers<[2], [1], [1], [2], [0, 0, 0, 1, 1, 2], [0], [0]>} : vector<6x1x32xf32>, vector<6x32x32xf32>, vector<6x1x32xf32> -> vector<6x1x32xf32>
    %cst_16 = arith.constant dense<0.000000e+00> : vector<6x1x32xf32>
    %117 = tpu.matmul %116, %109, %cst_16 {dimension_numbers = #tpu.dot_dimension_numbers<[2], [1], [1], [2], [0, 0, 0, 1, 1, 2], [0], [0]>} : vector<6x1x32xf32>, vector<6x32x32xf32>, vector<6x1x32xf32> -> vector<6x1x32xf32>
    %cst_17 = arith.constant dense<0.000000e+00> : vector<6x1x32xf32>
    %118 = tpu.matmul %117, %109, %cst_17 {dimension_numbers = #tpu.dot_dimension_numbers<[2], [1], [1], [2], [0, 0, 0, 1, 1, 2], [0], [0]>} : vector<6x1x32xf32>, vector<6x32x32xf32>, vector<6x1x32xf32> -> vector<6x1x32xf32>
    %cst_18 = arith.constant dense<0.000000e+00> : vector<6x1x32xf32>
    %119 = tpu.matmul %118, %109, %cst_18 {dimension_numbers = #tpu.dot_dimension_numbers<[2], [1], [1], [2], [0, 0, 0, 1, 1, 2], [0], [0]>} : vector<6x1x32xf32>, vector<6x32x32xf32>, vector<6x1x32xf32> -> vector<6x1x32xf32>
    %120 = tpu.concatenate %116, %117, %118, %119 in 1 : vector<6x1x32xf32>, vector<6x1x32xf32>, vector<6x1x32xf32>, vector<6x1x32xf32> -> vector<6x4x32xf32>
    %121 = vector.shape_cast %114 : vector<6x4x32xf32> to vector<24x32xf32>
    %122 = vector.shape_cast %120 : vector<6x4x32xf32> to vector<24x32xf32>
    %123 = tpu.concatenate %121, %122 in 0 : vector<24x32xf32>, vector<24x32xf32> -> vector<48x32xf32>
    %c0_19 = arith.constant 0 : index
    %c0_20 = arith.constant 0 : index
    %124 = vector.load %arg4[%c0_19, %c0_20] : memref<32x16xf32, #tpu.memory_space<vmem>>, vector<32x16xf32>
    %cst_21 = arith.constant dense<0.000000e+00> : vector<48x16xf32>
    %125 = tpu.matmul %123, %124, %cst_21 {dimension_numbers = #tpu.dot_dimension_numbers<[1], [0], [0], [1], [0, 0, 1, 1], [], []>} : vector<48x32xf32>, vector<32x16xf32>, vector<48x16xf32> -> vector<48x16xf32>
    %c0_22 = arith.constant 0 : index
    %c0_23 = arith.constant 0 : index
    %126 = vector.load %arg5[%c0_22, %c0_23] : memref<1x16xf32, #tpu.memory_space<vmem>>, vector<1x16xf32>
    %127 = vector.broadcast %126 : vector<1x16xf32> to vector<48x16xf32>
    %128 = arith.addf %125, %127 : vector<48x16xf32>
    %129 = vector.extract_strided_slice %128 {offsets = [0, 0], sizes = [24, 16], strides = [1, 1]} : vector<48x16xf32> to vector<24x16xf32>
    %c0_24 = arith.constant 0 : index
    %c0_25 = arith.constant 0 : index
    %130 = vector.load %arg6[%c0_24, %c0_25] : memref<24x16xf32, #tpu.memory_space<vmem>>, vector<24x16xf32>
    tpu.vector_store %arg6[%c0_24, %c0_25], %129 {strides = array<i32>} : memref<24x16xf32, #tpu.memory_space<vmem>>, vector<24x16xf32>,
    %131 = vector.extract_strided_slice %128 {offsets = [24, 0], sizes = [24, 16], strides = [1, 1]} : vector<48x16xf32> to vector<24x16xf32>
    %c0_26 = arith.constant 0 : index
    %c0_27 = arith.constant 0 : index
    %132 = vector.load %arg7[%c0_26, %c0_27] : memref<24x16xf32, #tpu.memory_space<vmem>>, vector<24x16xf32>
    tpu.vector_store %arg7[%c0_26, %c0_27], %131 {strides = array<i32>} : memref<24x16xf32, #tpu.memory_space<vmem>>, vector<24x16xf32>,
    return
  }
  func.func @transform_0(%arg0: i32) -> (i32, i32) {
    %c0_i32 = arith.constant 0 : i32
    %c0_i32_0 = arith.constant 0 : i32
    return %arg0, %c0_i32 : i32, i32
  }
  func.func @transform_1(%arg0: i32) -> (i32, i32) {
    %c0_i32 = arith.constant 0 : i32
    %c0_i32_0 = arith.constant 0 : i32
    %c0_i32_1 = arith.constant 0 : i32
    return %c0_i32, %c0_i32_0 : i32, i32
  }
  func.func @transform_2(%arg0: i32) -> (i32, i32) {
    %c0_i32 = arith.constant 0 : i32
    %c0_i32_0 = arith.constant 0 : i32
    %c0_i32_1 = arith.constant 0 : i32
    return %c0_i32, %c0_i32_0 : i32, i32
  }
  func.func @transform_3(%arg0: i32) -> (i32, i32) {
    %c0_i32 = arith.constant 0 : i32
    %c0_i32_0 = arith.constant 0 : i32
    %c0_i32_1 = arith.constant 0 : i32
    return %c0_i32, %c0_i32_0 : i32, i32
  }
  func.func @transform_4(%arg0: i32) -> (i32, i32) {
    %c0_i32 = arith.constant 0 : i32
    %c0_i32_0 = arith.constant 0 : i32
    %c0_i32_1 = arith.constant 0 : i32
    return %c0_i32, %c0_i32_0 : i32, i32
  }
  func.func @transform_5(%arg0: i32) -> (i32, i32) {
    %c0_i32 = arith.constant 0 : i32
    %c0_i32_0 = arith.constant 0 : i32
    return %arg0, %c0_i32 : i32, i32
  }
  func.func @transform_6(%arg0: i32) -> (i32, i32) {
    %c0_i32 = arith.constant 0 : i32
    %c0_i32_0 = arith.constant 0 : i32
    return %arg0, %c0_i32 : i32, i32
  }
}

</mosaic_0001>

<llo_original>
// kernel: tpu_custom_call.1
$region0: #{tpu_custom_call.1}
  #allocation0 [shape = 'u32[]', space=smem, size = 0x4, offset = 0x4, fixed_abs, tag = 'smem constant byte address 0x4 - core index']
  #allocation1 [shape = 'u32[144,128]{1,0:T(1,128)}', space=vmem, size = 0x12000, scoped, tag = 'internal scratch']
  %s0 = inlined_call_operand.vmem [shape: f32[24,16], index: 0, kind: input, shape index: {}]
  %s1 = inlined_call_operand.vmem [shape: f32[16,32], index: 1, kind: input, shape index: {}]
  %s2 = inlined_call_operand.vmem [shape: f32[1,32], index: 2, kind: input, shape index: {}]
  %s3 = inlined_call_operand.vmem [shape: f32[32,16], index: 3, kind: input, shape index: {}]
  %s4 = inlined_call_operand.vmem [shape: f32[1,16], index: 4, kind: input, shape index: {}]
  %s5 = inlined_call_operand.vmem [shape: f32[24,16], index: 5, kind: output, shape index: {0}]
  %s6 = inlined_call_operand.vmem [shape: f32[24,16], index: 6, kind: output, shape index: {1}]
  %7 = xla_tuple %s5, %s6
  %s8 = sld [smem:[#allocation0]]
  $region38: #{tpu_custom_call.1} parent=0
    _
  %s10 = ssub.s32 1, %s8
  %s11 = scalar_select 0, %s10, %s8
  // Predicated region
  $region2: #{tpu_custom_call.1} parent=0 // pred_check
    _
  $region3: #{tpu_custom_call.1} parent=0 // pred_check_branch
    %13 = sbr.rel (0) target = $region5
  $region4: #{tpu_custom_call.1} parent=0 // pred_region
    _
  $region5: #{tpu_custom_call.1} parent=0 // pred_fallthru
    _
  // Predicated region
  $region6: #{tpu_custom_call.1} parent=0 // pred_check
    _
  $region7: #{tpu_custom_call.1} parent=0 // pred_check_branch
    %15 = sbr.rel (0) target = $region9
  $region8: #{tpu_custom_call.1} parent=0 // pred_region
    _
  $region9: #{tpu_custom_call.1} parent=0 // pred_fallthru
    _
  // Predicated region
  $region10: #{tpu_custom_call.1} parent=0 // pred_check
    _
  $region11: #{tpu_custom_call.1} parent=0 // pred_check_branch
    %17 = sbr.rel (0) target = $region13
  $region12: #{tpu_custom_call.1} parent=0 // pred_region
    _
  $region13: #{tpu_custom_call.1} parent=0 // pred_fallthru
    _
  // Predicated region
  $region14: #{tpu_custom_call.1} parent=0 // pred_check
    _
  $region15: #{tpu_custom_call.1} parent=0 // pred_check_branch
    %19 = sbr.rel (0) target = $region17
  $region16: #{tpu_custom_call.1} parent=0 // pred_region
    _
  $region17: #{tpu_custom_call.1} parent=0 // pred_fallthru
    _
  // Predicated region
  $region18: #{tpu_custom_call.1} parent=0 // pred_check
    _
  $region19: #{tpu_custom_call.1} parent=0 // pred_check_branch
    %21 = sbr.rel (0) target = $region21
  $region20: #{tpu_custom_call.1} parent=0 // pred_region
    _
  $region21: #{tpu_custom_call.1} parent=0 // pred_fallthru
    _
  %v22 = vld [vmem:[%s0] sm:$0xff]
  %v23 = vld [vmem:[%s0 + $0x8] sm:$0xff]
  %v24 = vld [vmem:[%s0 + $0x10] sm:$0xff]
  %v25 = vld [vmem:[%s1] sm:$0xff]
  %v26 = vld [vmem:[%s1 + $0x8] sm:$0xff]
  %v27 = vld [vmem:[%s2] sm:$0x1]
  %v29 = vlaneseq
  %v30 = vshrl.u32 %v29, 7
  %v31 = vsub.s32 0, %v30
  %v32 = vrot.slane %v27, %v31
  %vm34 = vcmask 130048
  %v36 = vsel %vm34, %v22, 0
  %v39 = vsel %vm34, %v23, 0
  %v42 = vsel %vm34, %v24, 0
  %44 = vmatprep.subr.mxu0 0.0
  %45 = vmatpush1.msra.mxu0 %v25
  %46 = vmatprep.subr.mxu0 0.0
  %47 = vmatpush1.msra.mxu0 %v26
  %48 = vmatprep.subr.mxu0 0.0
  %49 = vmatpush1.msra.mxu0 0.0
  %50 = vmatprep.subr.mxu0 0.0
  %51 = vmatpush1.msra.mxu0 0.0
  %52 = vmatprep.subr.mxu0 0.0
  %53 = vmatpush1.msra.mxu0 0.0
  %54 = vmatprep.subr.mxu0 0.0
  %55 = vmatpush1.msra.mxu0 0.0
  %56 = vmatprep.subr.mxu0 0.0
  %57 = vmatpush1.msra.mxu0 0.0
  %58 = vmatprep.subr.mxu0 0.0
  %59 = vmatpush1.msra.mxu0 0.0
  %60 = vmatprep.subr.mxu0 0.0
  %61 = vmatpush1.msra.mxu0 0.0
  %62 = vmatprep.subr.mxu0 0.0
  %63 = vmatpush1.msra.mxu0 0.0
  %64 = vmatprep.subr.mxu0 0.0
  %65 = vmatpush1.msra.mxu0 0.0
  %66 = vmatprep.subr.mxu0 0.0
  %67 = vmatpush1.msra.mxu0 0.0
  %68 = vmatprep.subr.mxu0 0.0
  %69 = vmatpush1.msra.mxu0 0.0
  %70 = vmatprep.subr.mxu0 0.0
  %71 = vmatpush1.msra.mxu0 0.0
  %72 = vmatprep.subr.mxu0 0.0
  %73 = vmatpush1.msra.mxu0 0.0
  %74 = vmatprep.subr.mxu0 0.0
  %75 = vmatpush1.msra.mxu0 0.0
  %76 = vmatprep.subr.mxu0 0.0
  %77 = vmatpush1.msra.mxu0 0.0
  %78 = vmatprep.subr.mxu0 0.0
  %79 = vmatpush1.msra.mxu0 0.0
  %80 = vmatprep.subr.mxu0 0.0
  %81 = vmatpush1.msra.mxu0 0.0
  %82 = vmatprep.subr.mxu0 0.0
  %83 = vmatpush1.msra.mxu0 0.0
  %84 = vmatprep.subr.mxu0 0.0
  %85 = vmatpush1.msra.mxu0 0.0
  %86 = vmatprep.subr.mxu0 0.0
  %87 = vmatpush1.msra.mxu0 0.0
  %88 = vmatprep.subr.mxu0 0.0
  %89 = vmatpush1.msra.mxu0 0.0
  %90 = vmatprep.subr.mxu0 0.0
  %91 = vmatpush1.msra.mxu0 0.0
  %92 = vmatprep.subr.mxu0 0.0
  %93 = vmatpush1.msra.mxu0 0.0
  %94 = vmatprep.subr.mxu0 0.0
  %95 = vmatpush1.msra.mxu0 0.0
  %96 = vmatprep.subr.mxu0 0.0
  %97 = vmatpush1.msra.mxu0 0.0
  %98 = vmatprep.subr.mxu0 0.0
  %99 = vmatpush1.msra.mxu0 0.0
  %100 = vmatprep.subr.mxu0 0.0
  %101 = vmatpush1.msra.mxu0 0.0
  %102 = vmatprep.subr.mxu0 0.0
  %103 = vmatpush1.msra.mxu0 0.0
  %104 = vmatprep.subr.mxu0 0.0
  %105 = vmatpush1.msra.mxu0 0.0
  %106 = vmatprep.subr.mxu0 0.0
  %107 = vmatpush1.msra.mxu0 0.0
  %108 = vmatprep.mubr.f32.mxu0 0.0
  %109 = vmatmul.mubr.f32.gmra.mrb[0].mxu0 %v36
  %v110 = vpop.f32.mrb[0].mxu0
  %v111 = vadd.f32 %v32, %v110
  %v112 = vpop.f32.mrb[0].mxu0
  %113 = vmatprep.mubr.f32.mxu0 0.0
  %114 = vmatmul.mubr.f32.gmra.mrb[0].mxu0 %v39
  %v115 = vpop.f32.mrb[0].mxu0
  %v116 = vadd.f32 %v32, %v115
  %v117 = vpop.f32.mrb[0].mxu0
  %118 = vmatprep.mubr.f32.mxu0 0.0
  %119 = vmatmul.mubr.f32.gmra.mrb[0].mxu0 %v42
  %v120 = vpop.f32.mrb[0].mxu0
  %v121 = vadd.f32 %v32, %v120
  %v122 = vpop.f32.mrb[0].mxu0
  %123 = vdwg.mxu0
  %v127 = vcombine.high %v111, %v111
  %v128 = vcombine.high %v116, %v116
  %v129 = vcombine.high %v121, %v121
  %vm133 = vcmask 261120
  %v134 = vsel %vm133, %v111, 0
  %136 = vmatprep.subr.mxu0 0.0
  %137 = vmatpush1.xpose.msra.mxu0 %v134
  %138 = vmatprep.subr.mxu0 0.0
  %139 = vmatpush1.xpose.msra.mxu0 0.0
  %140 = vmatprep.subr.mxu0 0.0
  %141 = vmatpush1.xpose.msra.mxu0 0.0
  %142 = vmatprep.subr.mxu0 0.0
  %143 = vmatpush1.xpose.msra.mxu0 0.0
  %144 = vmatprep.subr.mxu0 0.0
  %145 = vmatpush1.xpose.msra.mxu0 0.0
  %146 = vmatprep.subr.mxu0 0.0
  %147 = vmatpush1.xpose.msra.mxu0 0.0
  %148 = vmatprep.subr.mxu0 0.0
  %149 = vmatpush1.xpose.msra.mxu0 0.0
  %150 = vmatprep.subr.mxu0 0.0
  %151 = vmatpush1.xpose.msra.mxu0 0.0
  %152 = vmatprep.subr.mxu0 0.0
  %153 = vmatpush1.xpose.msra.mxu0 0.0
  %154 = vmatprep.subr.mxu0 0.0
  %155 = vmatpush1.xpose.msra.mxu0 0.0
  %156 = vmatprep.subr.mxu0 0.0
  %157 = vmatpush1.xpose.msra.mxu0 0.0
  %158 = vmatprep.subr.mxu0 0.0
  %159 = vmatpush1.xpose.msra.mxu0 0.0
  %160 = vmatprep.subr.mxu0 0.0
  %161 = vmatpush1.xpose.msra.mxu0 0.0
  %162 = vmatprep.subr.mxu0 0.0
  %163 = vmatpush1.xpose.msra.mxu0 0.0
  %164 = vmatprep.subr.mxu0 0.0
  %165 = vmatpush1.xpose.msra.mxu0 0.0
  %166 = vmatprep.subr.mxu0 0.0
  %167 = vmatpush1.xpose.msra.mxu0 0.0
  %168 = vmatprep.subr.mxu0 0.0
  %169 = vmatpush1.xpose.msra.mxu0 0.0
  %170 = vmatprep.subr.mxu0 0.0
  %171 = vmatpush1.xpose.msra.mxu0 0.0
  %172 = vmatprep.subr.mxu0 0.0
  %173 = vmatpush1.xpose.msra.mxu0 0.0
  %174 = vmatprep.subr.mxu0 0.0
  %175 = vmatpush1.xpose.msra.mxu0 0.0
  %176 = vmatprep.subr.mxu0 0.0
  %177 = vmatpush1.xpose.msra.mxu0 0.0
  %178 = vmatprep.subr.mxu0 0.0
  %179 = vmatpush1.xpose.msra.mxu0 0.0
  %180 = vmatprep.subr.mxu0 0.0
  %181 = vmatpush1.xpose.msra.mxu0 0.0
  %182 = vmatprep.subr.mxu0 0.0
  %183 = vmatpush1.xpose.msra.mxu0 0.0
  %184 = vmatprep.subr.mxu0 0.0
  %185 = vmatpush1.xpose.msra.mxu0 0.0
  %186 = vmatprep.subr.mxu0 0.0
  %187 = vmatpush1.xpose.msra.mxu0 0.0
  %188 = vmatprep.subr.mxu0 0.0
  %189 = vmatpush1.xpose.msra.mxu0 0.0
  %190 = vmatprep.subr.mxu0 0.0
  %191 = vmatpush1.xpose.msra.mxu0 0.0
  %192 = vmatprep.subr.mxu0 0.0
  %193 = vmatpush1.xpose.msra.mxu0 0.0
  %194 = vmatprep.subr.mxu0 0.0
  %195 = vmatpush1.xpose.msra.mxu0 0.0
  %196 = vmatprep.subr.mxu0 0.0
  %197 = vmatpush1.xpose.msra.mxu0 0.0
  %198 = vmatprep.subr.mxu0 0.0
  %199 = vmatpush1.xpose.msra.mxu0 0.0
  %200 = vmatprep.mubr.f32.mxu0 0.0
  %201 = vmatmul.mubr.f32.gmra.mrb[0].mxu0 %v134
  %v202 = vpop.f32.mrb[0].mxu0
  %v203 = vadd.f32 0.0, %v202
  %v204 = vpop.f32.mrb[0].mxu0
  %205 = vdwg.mxu0
  %v206 = vsel %vm133, %v127, 0
  %208 = vmatprep.subr.mxu0 0.0
  %209 = vmatpush1.xpose.msra.mxu0 %v206
  %210 = vmatprep.subr.mxu0 0.0
  %211 = vmatpush1.xpose.msra.mxu0 0.0
  %212 = vmatprep.subr.mxu0 0.0
  %213 = vmatpush1.xpose.msra.mxu0 0.0
  %214 = vmatprep.subr.mxu0 0.0
  %215 = vmatpush1.xpose.msra.mxu0 0.0
  %216 = vmatprep.subr.mxu0 0.0
  %217 = vmatpush1.xpose.msra.mxu0 0.0
  %218 = vmatprep.subr.mxu0 0.0
  %219 = vmatpush1.xpose.msra.mxu0 0.0
  %220 = vmatprep.subr.mxu0 0.0
  %221 = vmatpush1.xpose.msra.mxu0 0.0
  %222 = vmatprep.subr.mxu0 0.0
  %223 = vmatpush1.xpose.msra.mxu0 0.0
  %224 = vmatprep.subr.mxu0 0.0
  %225 = vmatpush1.xpose.msra.mxu0 0.0
  %226 = vmatprep.subr.mxu0 0.0
  %227 = vmatpush1.xpose.msra.mxu0 0.0
  %228 = vmatprep.subr.mxu0 0.0
  %229 = vmatpush1.xpose.msra.mxu0 0.0
  %230 = vmatprep.subr.mxu0 0.0
  %231 = vmatpush1.xpose.msra.mxu0 0.0
  %232 = vmatprep.subr.mxu0 0.0
  %233 = vmatpush1.xpose.msra.mxu0 0.0
  %234 = vmatprep.subr.mxu0 0.0
  %235 = vmatpush1.xpose.msra.mxu0 0.0
  %236 = vmatprep.subr.mxu0 0.0
  %237 = vmatpush1.xpose.msra.mxu0 0.0
  %238 = vmatprep.subr.mxu0 0.0
  %239 = vmatpush1.xpose.msra.mxu0 0.0
  %240 = vmatprep.subr.mxu0 0.0
  %241 = vmatpush1.xpose.msra.mxu0 0.0
  %242 = vmatprep.subr.mxu0 0.0
  %243 = vmatpush1.xpose.msra.mxu0 0.0
  %244 = vmatprep.subr.mxu0 0.0
  %245 = vmatpush1.xpose.msra.mxu0 0.0
  %246 = vmatprep.subr.mxu0 0.0
  %247 = vmatpush1.xpose.msra.mxu0 0.0
  %248 = vmatprep.subr.mxu0 0.0
  %249 = vmatpush1.xpose.msra.mxu0 0.0
  %250 = vmatprep.subr.mxu0 0.0
  %251 = vmatpush1.xpose.msra.mxu0 0.0
  %252 = vmatprep.subr.mxu0 0.0
  %253 = vmatpush1.xpose.msra.mxu0 0.0
  %254 = vmatprep.subr.mxu0 0.0
  %255 = vmatpush1.xpose.msra.mxu0 0.0
  %256 = vmatprep.subr.mxu0 0.0
  %257 = vmatpush1.xpose.msra.mxu0 0.0
  %258 = vmatprep.subr.mxu0 0.0
  %259 = vmatpush1.xpose.msra.mxu0 0.0
  %260 = vmatprep.subr.mxu0 0.0
  %261 = vmatpush1.xpose.msra.mxu0 0.0
  %262 = vmatprep.subr.mxu0 0.0
  %263 = vmatpush1.xpose.msra.mxu0 0.0
  %264 = vmatprep.subr.mxu0 0.0
  %265 = vmatpush1.xpose.msra.mxu0 0.0
  %266 = vmatprep.subr.mxu0 0.0
  %267 = vmatpush1.xpose.msra.mxu0 0.0
  %268 = vmatprep.subr.mxu0 0.0
  %269 = vmatpush1.xpose.msra.mxu0 0.0
  %270 = vmatprep.subr.mxu0 0.0
  %271 = vmatpush1.xpose.msra.mxu0 0.0
  %272 = vmatprep.mubr.f32.mxu0 0.0
  %273 = vmatmul.mubr.f32.gmra.mrb[0].mxu0 %v206
  %v274 = vpop.f32.mrb[0].mxu0
  %v275 = vadd.f32 0.0, %v274
  %v276 = vpop.f32.mrb[0].mxu0
  %277 = vdwg.mxu0
  %v278 = vsel %vm133, %v116, 0
  %280 = vmatprep.subr.mxu0 0.0
  %281 = vmatpush1.xpose.msra.mxu0 %v278
  %282 = vmatprep.subr.mxu0 0.0
  %283 = vmatpush1.xpose.msra.mxu0 0.0
  %284 = vmatprep.subr.mxu0 0.0
  %285 = vmatpush1.xpose.msra.mxu0 0.0
  %286 = vmatprep.subr.mxu0 0.0
  %287 = vmatpush1.xpose.msra.mxu0 0.0
  %288 = vmatprep.subr.mxu0 0.0
  %289 = vmatpush1.xpose.msra.mxu0 0.0
  %290 = vmatprep.subr.mxu0 0.0
  %291 = vmatpush1.xpose.msra.mxu0 0.0
  %292 = vmatprep.subr.mxu0 0.0
  %293 = vmatpush1.xpose.msra.mxu0 0.0
  %294 = vmatprep.subr.mxu0 0.0
  %295 = vmatpush1.xpose.msra.mxu0 0.0
  %296 = vmatprep.subr.mxu0 0.0
  %297 = vmatpush1.xpose.msra.mxu0 0.0
  %298 = vmatprep.subr.mxu0 0.0
  %299 = vmatpush1.xpose.msra.mxu0 0.0
  %300 = vmatprep.subr.mxu0 0.0
  %301 = vmatpush1.xpose.msra.mxu0 0.0
  %302 = vmatprep.subr.mxu0 0.0
  %303 = vmatpush1.xpose.msra.mxu0 0.0
  %304 = vmatprep.subr.mxu0 0.0
  %305 = vmatpush1.xpose.msra.mxu0 0.0
  %306 = vmatprep.subr.mxu0 0.0
  %307 = vmatpush1.xpose.msra.mxu0 0.0
  %308 = vmatprep.subr.mxu0 0.0
  %309 = vmatpush1.xpose.msra.mxu0 0.0
  %310 = vmatprep.subr.mxu0 0.0
  %311 = vmatpush1.xpose.msra.mxu0 0.0
  %312 = vmatprep.subr.mxu0 0.0
  %313 = vmatpush1.xpose.msra.mxu0 0.0
  %314 = vmatprep.subr.mxu0 0.0
  %315 = vmatpush1.xpose.msra.mxu0 0.0
  %316 = vmatprep.subr.mxu0 0.0
  %317 = vmatpush1.xpose.msra.mxu0 0.0
  %318 = vmatprep.subr.mxu0 0.0
  %319 = vmatpush1.xpose.msra.mxu0 0.0
  %320 = vmatprep.subr.mxu0 0.0
  %321 = vmatpush1.xpose.msra.mxu0 0.0
  %322 = vmatprep.subr.mxu0 0.0
  %323 = vmatpush1.xpose.msra.mxu0 0.0
  %324 = vmatprep.subr.mxu0 0.0
  %325 = vmatpush1.xpose.msra.mxu0 0.0
  %326 = vmatprep.subr.mxu0 0.0
  %327 = vmatpush1.xpose.msra.mxu0 0.0
  %328 = vmatprep.subr.mxu0 0.0
  %329 = vmatpush1.xpose.msra.mxu0 0.0
  %330 = vmatprep.subr.mxu0 0.0
  %331 = vmatpush1.xpose.msra.mxu0 0.0
  %332 = vmatprep.subr.mxu0 0.0
  %333 = vmatpush1.xpose.msra.mxu0 0.0
  %334 = vmatprep.subr.mxu0 0.0
  %335 = vmatpush1.xpose.msra.mxu0 0.0
  %336 = vmatprep.subr.mxu0 0.0
  %337 = vmatpush1.xpose.msra.mxu0 0.0
  %338 = vmatprep.subr.mxu0 0.0
  %339 = vmatpush1.xpose.msra.mxu0 0.0
  %340 = vmatprep.subr.mxu0 0.0
  %341 = vmatpush1.xpose.msra.mxu0 0.0
  %342 = vmatprep.subr.mxu0 0.0
  %343 = vmatpush1.xpose.msra.mxu0 0.0
  %344 = vmatprep.mubr.f32.mxu0 0.0
  %345 = vmatmul.mubr.f32.gmra.mrb[0].mxu0 %v278
  %v346 = vpop.f32.mrb[0].mxu0
  %v347 = vadd.f32 0.0, %v346
  %v348 = vpop.f32.mrb[0].mxu0
  %349 = vdwg.mxu0
  %v350 = vsel %vm133, %v128, 0
  %352 = vmatprep.subr.mxu0 0.0
  %353 = vmatpush1.xpose.msra.mxu0 %v350
  %354 = vmatprep.subr.mxu0 0.0
  %355 = vmatpush1.xpose.msra.mxu0 0.0
  %356 = vmatprep.subr.mxu0 0.0
  %357 = vmatpush1.xpose.msra.mxu0 0.0
  %358 = vmatprep.subr.mxu0 0.0
  %359 = vmatpush1.xpose.msra.mxu0 0.0
  %360 = vmatprep.subr.mxu0 0.0
  %361 = vmatpush1.xpose.msra.mxu0 0.0
  %362 = vmatprep.subr.mxu0 0.0
  %363 = vmatpush1.xpose.msra.mxu0 0.0
  %364 = vmatprep.subr.mxu0 0.0
  %365 = vmatpush1.xpose.msra.mxu0 0.0
  %366 = vmatprep.subr.mxu0 0.0
  %367 = vmatpush1.xpose.msra.mxu0 0.0
  %368 = vmatprep.subr.mxu0 0.0
  %369 = vmatpush1.xpose.msra.mxu0 0.0
  %370 = vmatprep.subr.mxu0 0.0
  %371 = vmatpush1.xpose.msra.mxu0 0.0
  %372 = vmatprep.subr.mxu0 0.0
  %373 = vmatpush1.xpose.msra.mxu0 0.0
  %374 = vmatprep.subr.mxu0 0.0
  %375 = vmatpush1.xpose.msra.mxu0 0.0
  %376 = vmatprep.subr.mxu0 0.0
  %377 = vmatpush1.xpose.msra.mxu0 0.0
  %378 = vmatprep.subr.mxu0 0.0
  %379 = vmatpush1.xpose.msra.mxu0 0.0
  %380 = vmatprep.subr.mxu0 0.0
  %381 = vmatpush1.xpose.msra.mxu0 0.0
  %382 = vmatprep.subr.mxu0 0.0
  %383 = vmatpush1.xpose.msra.mxu0 0.0
  %384 = vmatprep.subr.mxu0 0.0
  %385 = vmatpush1.xpose.msra.mxu0 0.0
  %386 = vmatprep.subr.mxu0 0.0
  %387 = vmatpush1.xpose.msra.mxu0 0.0
  %388 = vmatprep.subr.mxu0 0.0
  %389 = vmatpush1.xpose.msra.mxu0 0.0
  %390 = vmatprep.subr.mxu0 0.0
  %391 = vmatpush1.xpose.msra.mxu0 0.0
  %392 = vmatprep.subr.mxu0 0.0
  %393 = vmatpush1.xpose.msra.mxu0 0.0
  %394 = vmatprep.subr.mxu0 0.0
  %395 = vmatpush1.xpose.msra.mxu0 0.0
  %396 = vmatprep.subr.mxu0 0.0
  %397 = vmatpush1.xpose.msra.mxu0 0.0
  %398 = vmatprep.subr.mxu0 0.0
  %399 = vmatpush1.xpose.msra.mxu0 0.0
  %400 = vmatprep.subr.mxu0 0.0
  %401 = vmatpush1.xpose.msra.mxu0 0.0
  %402 = vmatprep.subr.mxu0 0.0
  %403 = vmatpush1.xpose.msra.mxu0 0.0
  %404 = vmatprep.subr.mxu0 0.0
  %405 = vmatpush1.xpose.msra.mxu0 0.0
  %406 = vmatprep.subr.mxu0 0.0
  %407 = vmatpush1.xpose.msra.mxu0 0.0
  %408 = vmatprep.subr.mxu0 0.0
  %409 = vmatpush1.xpose.msra.mxu0 0.0
  %410 = vmatprep.subr.mxu0 0.0
  %411 = vmatpush1.xpose.msra.mxu0 0.0
  %412 = vmatprep.subr.mxu0 0.0
  %413 = vmatpush1.xpose.msra.mxu0 0.0
  %414 = vmatprep.subr.mxu0 0.0
  %415 = vmatpush1.xpose.msra.mxu0 0.0
  %416 = vmatprep.mubr.f32.mxu0 0.0
  %417 = vmatmul.mubr.f32.gmra.mrb[0].mxu0 %v350
  %v418 = vpop.f32.mrb[0].mxu0
  %v419 = vadd.f32 0.0, %v418
  %v420 = vpop.f32.mrb[0].mxu0
  %421 = vdwg.mxu0
  %v422 = vsel %vm133, %v121, 0
  %424 = vmatprep.subr.mxu0 0.0
  %425 = vmatpush1.xpose.msra.mxu0 %v422
  %426 = vmatprep.subr.mxu0 0.0
  %427 = vmatpush1.xpose.msra.mxu0 0.0
  %428 = vmatprep.subr.mxu0 0.0
  %429 = vmatpush1.xpose.msra.mxu0 0.0
  %430 = vmatprep.subr.mxu0 0.0
  %431 = vmatpush1.xpose.msra.mxu0 0.0
  %432 = vmatprep.subr.mxu0 0.0
  %433 = vmatpush1.xpose.msra.mxu0 0.0
  %434 = vmatprep.subr.mxu0 0.0
  %435 = vmatpush1.xpose.msra.mxu0 0.0
  %436 = vmatprep.subr.mxu0 0.0
  %437 = vmatpush1.xpose.msra.mxu0 0.0
  %438 = vmatprep.subr.mxu0 0.0
  %439 = vmatpush1.xpose.msra.mxu0 0.0
  %440 = vmatprep.subr.mxu0 0.0
  %441 = vmatpush1.xpose.msra.mxu0 0.0
  %442 = vmatprep.subr.mxu0 0.0
  %443 = vmatpush1.xpose.msra.mxu0 0.0
  %444 = vmatprep.subr.mxu0 0.0
  %445 = vmatpush1.xpose.msra.mxu0 0.0
  %446 = vmatprep.subr.mxu0 0.0
  %447 = vmatpush1.xpose.msra.mxu0 0.0
  %448 = vmatprep.subr.mxu0 0.0
  %449 = vmatpush1.xpose.msra.mxu0 0.0
  %450 = vmatprep.subr.mxu0 0.0
  %451 = vmatpush1.xpose.msra.mxu0 0.0
  %452 = vmatprep.subr.mxu0 0.0
  %453 = vmatpush1.xpose.msra.mxu0 0.0
  %454 = vmatprep.subr.mxu0 0.0
  %455 = vmatpush1.xpose.msra.mxu0 0.0
  %456 = vmatprep.subr.mxu0 0.0
  %457 = vmatpush1.xpose.msra.mxu0 0.0
  %458 = vmatprep.subr.mxu0 0.0
  %459 = vmatpush1.xpose.msra.mxu0 0.0
  %460 = vmatprep.subr.mxu0 0.0
  %461 = vmatpush1.xpose.msra.mxu0 0.0
  %462 = vmatprep.subr.mxu0 0.0
  %463 = vmatpush1.xpose.msra.mxu0 0.0
  %464 = vmatprep.subr.mxu0 0.0
  %465 = vmatpush1.xpose.msra.mxu0 0.0
  %466 = vmatprep.subr.mxu0 0.0
  %467 = vmatpush1.xpose.msra.mxu0 0.0
  %468 = vmatprep.subr.mxu0 0.0
  %469 = vmatpush1.xpose.msra.mxu0 0.0
  %470 = vmatprep.subr.mxu0 0.0
  %471 = vmatpush1.xpose.msra.mxu0 0.0
  %472 = vmatprep.subr.mxu0 0.0
  %473 = vmatpush1.xpose.msra.mxu0 0.0
  %474 = vmatprep.subr.mxu0 0.0
  %475 = vmatpush1.xpose.msra.mxu0 0.0
  %476 = vmatprep.subr.mxu0 0.0
  %477 = vmatpush1.xpose.msra.mxu0 0.0
  %478 = vmatprep.subr.mxu0 0.0
  %479 = vmatpush1.xpose.msra.mxu0 0.0
  %480 = vmatprep.subr.mxu0 0.0
  %481 = vmatpush1.xpose.msra.mxu0 0.0
  %482 = vmatprep.subr.mxu0 0.0
  %483 = vmatpush1.xpose.msra.mxu0 0.0
  %484 = vmatprep.subr.mxu0 0.0
  %485 = vmatpush1.xpose.msra.mxu0 0.0
  %486 = vmatprep.subr.mxu0 0.0
  %487 = vmatpush1.xpose.msra.mxu0 0.0
  %488 = vmatprep.mubr.f32.mxu0 0.0
  %489 = vmatmul.mubr.f32.gmra.mrb[0].mxu0 %v422
  %v490 = vpop.f32.mrb[0].mxu0
  %v491 = vadd.f32 0.0, %v490
  %v492 = vpop.f32.mrb[0].mxu0
  %493 = vdwg.mxu0
  %v494 = vsel %vm133, %v129, 0
  %496 = vmatprep.subr.mxu0 0.0
  %497 = vmatpush1.xpose.msra.mxu0 %v494
  %498 = vmatprep.subr.mxu0 0.0
  %499 = vmatpush1.xpose.msra.mxu0 0.0
  %500 = vmatprep.subr.mxu0 0.0
  %501 = vmatpush1.xpose.msra.mxu0 0.0
  %502 = vmatprep.subr.mxu0 0.0
  %503 = vmatpush1.xpose.msra.mxu0 0.0
  %504 = vmatprep.subr.mxu0 0.0
  %505 = vmatpush1.xpose.msra.mxu0 0.0
  %506 = vmatprep.subr.mxu0 0.0
  %507 = vmatpush1.xpose.msra.mxu0 0.0
  %508 = vmatprep.subr.mxu0 0.0
  %509 = vmatpush1.xpose.msra.mxu0 0.0
  %510 = vmatprep.subr.mxu0 0.0
  %511 = vmatpush1.xpose.msra.mxu0 0.0
  %512 = vmatprep.subr.mxu0 0.0
  %513 = vmatpush1.xpose.msra.mxu0 0.0
  %514 = vmatprep.subr.mxu0 0.0
  %515 = vmatpush1.xpose.msra.mxu0 0.0
  %516 = vmatprep.subr.mxu0 0.0
  %517 = vmatpush1.xpose.msra.mxu0 0.0
  %518 = vmatprep.subr.mxu0 0.0
  %519 = vmatpush1.xpose.msra.mxu0 0.0
  %520 = vmatprep.subr.mxu0 0.0
  %521 = vmatpush1.xpose.msra.mxu0 0.0
  %522 = vmatprep.subr.mxu0 0.0
  %523 = vmatpush1.xpose.msra.mxu0 0.0
  %524 = vmatprep.subr.mxu0 0.0
  %525 = vmatpush1.xpose.msra.mxu0 0.0
  %526 = vmatprep.subr.mxu0 0.0
  %527 = vmatpush1.xpose.msra.mxu0 0.0
  %528 = vmatprep.subr.mxu0 0.0
  %529 = vmatpush1.xpose.msra.mxu0 0.0
  %530 = vmatprep.subr.mxu0 0.0
  %531 = vmatpush1.xpose.msra.mxu0 0.0
  %532 = vmatprep.subr.mxu0 0.0
  %533 = vmatpush1.xpose.msra.mxu0 0.0
  %534 = vmatprep.subr.mxu0 0.0
  %535 = vmatpush1.xpose.msra.mxu0 0.0
  %536 = vmatprep.subr.mxu0 0.0
  %537 = vmatpush1.xpose.msra.mxu0 0.0
  %538 = vmatprep.subr.mxu0 0.0
  %539 = vmatpush1.xpose.msra.mxu0 0.0
  %540 = vmatprep.subr.mxu0 0.0
  %541 = vmatpush1.xpose.msra.mxu0 0.0
  %542 = vmatprep.subr.mxu0 0.0
  %543 = vmatpush1.xpose.msra.mxu0 0.0
  %544 = vmatprep.subr.mxu0 0.0
  %545 = vmatpush1.xpose.msra.mxu0 0.0
  %546 = vmatprep.subr.mxu0 0.0
  %547 = vmatpush1.xpose.msra.mxu0 0.0
  %548 = vmatprep.subr.mxu0 0.0
  %549 = vmatpush1.xpose.msra.mxu0 0.0
  %550 = vmatprep.subr.mxu0 0.0
  %551 = vmatpush1.xpose.msra.mxu0 0.0
  %552 = vmatprep.subr.mxu0 0.0
  %553 = vmatpush1.xpose.msra.mxu0 0.0
  %554 = vmatprep.subr.mxu0 0.0
  %555 = vmatpush1.xpose.msra.mxu0 0.0
  %556 = vmatprep.subr.mxu0 0.0
  %557 = vmatpush1.xpose.msra.mxu0 0.0
  %558 = vmatprep.subr.mxu0 0.0
  %559 = vmatpush1.xpose.msra.mxu0 0.0
  %560 = vmatprep.mubr.f32.mxu0 0.0
  %561 = vmatmul.mubr.f32.gmra.mrb[0].mxu0 %v494
  %v562 = vpop.f32.mrb[0].mxu0
  %v563 = vadd.f32 0.0, %v562
  %v564 = vpop.f32.mrb[0].mxu0
  %565 = vdwg.mxu0
  %v566 = vlaneseq
  %v567 = vshrl.u32 %v566, 7
  %vm568 = vcmp.eq.s32.totalorder %v567, 0
  %v569 = vrcp.pop %v203
  %v570 = vmul.f32 1.0, %v569
  %v571 = vrcp.pop %v275
  %v572 = vmul.f32 1.0, %v571
  %v573 = vrcp.pop %v347
  %v574 = vmul.f32 1.0, %v573
  %v575 = vrcp.pop %v419
  %v576 = vmul.f32 1.0, %v575
  %v577 = vrcp.pop %v491
  %v578 = vmul.f32 1.0, %v577
  %v579 = vrcp.pop %v563
  %v580 = vmul.f32 1.0, %v579
  %582 = vset.pattern.permute.xlu0 0
  %583 = vperm.xlu0 %582, %v570
  %v584 = vpop.permute.xlu0 %583
  %587 = vset.pattern.permute.xlu0 0
  %588 = vperm.xlu0 %587, %v572
  %v589 = vpop.permute.xlu0 %588
  %592 = vset.pattern.permute.xlu0 0
  %593 = vperm.xlu0 %592, %v574
  %v594 = vpop.permute.xlu0 %593
  %597 = vset.pattern.permute.xlu0 0
  %598 = vperm.xlu0 %597, %v576
  %v599 = vpop.permute.xlu0 %598
  %602 = vset.pattern.permute.xlu0 0
  %603 = vperm.xlu0 %602, %v578
  %v604 = vpop.permute.xlu0 %603
  %607 = vset.pattern.permute.xlu0 0
  %608 = vperm.xlu0 %607, %v580
  %v609 = vpop.permute.xlu0 %608
  %v611 = vmul.f32 %v203, %v584
  %v612 = vmul.f32 %v275, %v589
  %v613 = vmul.f32 %v347, %v594
  %v614 = vmul.f32 %v419, %v599
  %v615 = vmul.f32 %v491, %v604
  %v616 = vmul.f32 %v563, %v609
  %v618 = vunpack.c.l.s4 839922192
  %v619 = vunpack.c.0.s8 %v618
  %v620 = vlaneseq
  %v621 = vshrl.u32 %v620, 7
  %v622 = vsub.s32 %v619, %v621
  %v623 = vrot.slane %v584, %v622
  %v625 = vunpack.c.l.s4 839922192
  %v626 = vunpack.c.0.s8 %v625
  %v627 = vlaneseq
  %v628 = vshrl.u32 %v627, 7
  %v629 = vsub.s32 %v626, %v628
  %v630 = vrot.slane %v589, %v629
  %v632 = vunpack.c.l.s4 839922192
  %v633 = vunpack.c.0.s8 %v632
  %v634 = vlaneseq
  %v635 = vshrl.u32 %v634, 7
  %v636 = vsub.s32 %v633, %v635
  %v637 = vrot.slane %v594, %v636
  %v639 = vunpack.c.l.s4 839922192
  %v640 = vunpack.c.0.s8 %v639
  %v641 = vlaneseq
  %v642 = vshrl.u32 %v641, 7
  %v643 = vsub.s32 %v640, %v642
  %v644 = vrot.slane %v599, %v643
  %v646 = vunpack.c.l.s4 839922192
  %v647 = vunpack.c.0.s8 %v646
  %v648 = vlaneseq
  %v649 = vshrl.u32 %v648, 7
  %v650 = vsub.s32 %v647, %v649
  %v651 = vrot.slane %v604, %v650
  %v653 = vunpack.c.l.s4 839922192
  %v654 = vunpack.c.0.s8 %v653
  %v655 = vlaneseq
  %v656 = vshrl.u32 %v655, 7
  %v657 = vsub.s32 %v654, %v656
  %v658 = vrot.slane %v609, %v657
  %v659 = vrot.slane %v623, 7
  %v660 = vrot.slane %v630, 7
  %v661 = vrot.slane %v637, 7
  %v662 = vrot.slane %v644, 7
  %v663 = vrot.slane %v651, 7
  %v664 = vrot.slane %v658, 7
  %v671 = vmul.f32 %v111, %v659
  %v672 = vmul.f32 %v127, %v660
  %v673 = vmul.f32 %v116, %v661
  %v674 = vmul.f32 %v128, %v662
  %v675 = vmul.f32 %v121, %v663
  %v676 = vmul.f32 %v129, %v664
  %678 = vset.pattern.permute.xlu0 0
  %679 = vperm.xlu0 %678, %v203
  %v680 = vpop.permute.xlu0 %679
  %683 = vset.pattern.permute.xlu0 0
  %684 = vperm.xlu0 %683, %v275
  %v685 = vpop.permute.xlu0 %684
  %688 = vset.pattern.permute.xlu0 0
  %689 = vperm.xlu0 %688, %v347
  %v690 = vpop.permute.xlu0 %689
  %693 = vset.pattern.permute.xlu0 0
  %694 = vperm.xlu0 %693, %v419
  %v695 = vpop.permute.xlu0 %694
  %698 = vset.pattern.permute.xlu0 0
  %699 = vperm.xlu0 %698, %v491
  %v700 = vpop.permute.xlu0 %699
  %703 = vset.pattern.permute.xlu0 0
  %704 = vperm.xlu0 %703, %v563
  %v705 = vpop.permute.xlu0 %704
  %v707 = vlaneseq
  %v708 = vshrl.u32 %v707, 7
  %v709 = vsub.s32 0, %v708
  %v710 = vrot.slane %v611, %v709
  %v711 = vlaneseq
  %v712 = vshrl.u32 %v711, 7
  %v713 = vsub.s32 0, %v712
  %v714 = vrot.slane %v612, %v713
  %v715 = vlaneseq
  %v716 = vshrl.u32 %v715, 7
  %v717 = vsub.s32 0, %v716
  %v718 = vrot.slane %v613, %v717
  %v719 = vlaneseq
  %v720 = vshrl.u32 %v719, 7
  %v721 = vsub.s32 0, %v720
  %v722 = vrot.slane %v614, %v721
  %v723 = vlaneseq
  %v724 = vshrl.u32 %v723, 7
  %v725 = vsub.s32 0, %v724
  %v726 = vrot.slane %v615, %v725
  %v727 = vlaneseq
  %v728 = vshrl.u32 %v727, 7
  %v729 = vsub.s32 0, %v728
  %v730 = vrot.slane %v616, %v729
  %v731 = vmul.f32 %v680, %v710
  %v732 = vmul.f32 %v685, %v714
  %v733 = vmul.f32 %v690, %v718
  %v734 = vmul.f32 %v695, %v722
  %v735 = vmul.f32 %v700, %v726
  %v736 = vmul.f32 %v705, %v730
  %v737 = vsub.f32 %v203, %v731
  %v738 = vsub.f32 %v275, %v732
  %v739 = vsub.f32 %v347, %v733
  %v740 = vsub.f32 %v419, %v734
  %v741 = vsub.f32 %v491, %v735
  %v742 = vsub.f32 %v563, %v736
  %v743 = vsel %vm568, 1, 0
  %vm744 = vcmp.eq.s32.totalorder %v743, 1
  %v745 = vsel %vm744, %v710, %v737
  %v746 = vsel %vm744, %v714, %v738
  %v747 = vsel %vm744, %v718, %v739
  %v748 = vsel %vm744, %v722, %v740
  %v749 = vsel %vm744, %v726, %v741
  %v750 = vsel %vm744, %v730, %v742
  %v751 = vlaneseq
  %v752 = vshrl.u32 %v751, 7
  %v753 = vsub.s32 1, %v752
  %v754 = vrot.slane %v671, %v753
  %v755 = vlaneseq
  %v756 = vshrl.u32 %v755, 7
  %v757 = vsub.s32 1, %v756
  %v758 = vrot.slane %v672, %v757
  %v759 = vlaneseq
  %v760 = vshrl.u32 %v759, 7
  %v761 = vsub.s32 1, %v760
  %v762 = vrot.slane %v673, %v761
  %v763 = vlaneseq
  %v764 = vshrl.u32 %v763, 7
  %v765 = vsub.s32 1, %v764
  %v766 = vrot.slane %v674, %v765
  %v767 = vlaneseq
  %v768 = vshrl.u32 %v767, 7
  %v769 = vsub.s32 1, %v768
  %v770 = vrot.slane %v675, %v769
  %v771 = vlaneseq
  %v772 = vshrl.u32 %v771, 7
  %v773 = vsub.s32 1, %v772
  %v774 = vrot.slane %v676, %v773
  %v775 = vmul.f32 %v680, %v754
  %v776 = vmul.f32 %v685, %v758
  %v777 = vmul.f32 %v690, %v762
  %v778 = vmul.f32 %v695, %v766
  %v779 = vmul.f32 %v700, %v770
  %v780 = vmul.f32 %v705, %v774
  %v787 = vrot.slane %v775, 7
  %v788 = vrot.slane %v776, 7
  %v789 = vrot.slane %v777, 7
  %v790 = vrot.slane %v778, 7
  %v791 = vrot.slane %v779, 7
  %v792 = vrot.slane %v780, 7
  %v799 = vsub.f32 %v111, %v787
  %v800 = vsub.f32 %v127, %v788
  %v801 = vsub.f32 %v116, %v789
  %v802 = vsub.f32 %v128, %v790
  %v803 = vsub.f32 %v121, %v791
  %v804 = vsub.f32 %v129, %v792
  %v811 = vrot.slane %v799, 1
  %v812 = vrot.slane %v800, 1
  %v813 = vrot.slane %v801, 1
  %v814 = vrot.slane %v802, 1
  %v815 = vrot.slane %v803, 1
  %v816 = vrot.slane %v804, 1
  %v823 = vsel %vm744, %v754, %v811
  %v824 = vsel %vm744, %v758, %v812
  %v825 = vsel %vm744, %v762, %v813
  %v826 = vsel %vm744, %v766, %v814
  %v827 = vsel %vm744, %v770, %v815
  %v828 = vsel %vm744, %v774, %v816
  %vm829 = vcmp.eq.s32.totalorder %v567, 1
  %v830 = vrcp.pop %v745
  %v831 = vmul.f32 1.0, %v830
  %v832 = vrcp.pop %v746
  %v833 = vmul.f32 1.0, %v832
  %v834 = vrcp.pop %v747
  %v835 = vmul.f32 1.0, %v834
  %v836 = vrcp.pop %v748
  %v837 = vmul.f32 1.0, %v836
  %v838 = vrcp.pop %v749
  %v839 = vmul.f32 1.0, %v838
  %v840 = vrcp.pop %v750
  %v841 = vmul.f32 1.0, %v840
  %843 = vset.pattern.permute.xlu0 1
  %844 = vperm.xlu0 %843, %v831
  %v845 = vpop.permute.xlu0 %844
  %848 = vset.pattern.permute.xlu0 1
  %849 = vperm.xlu0 %848, %v833
  %v850 = vpop.permute.xlu0 %849
  %853 = vset.pattern.permute.xlu0 1
  %854 = vperm.xlu0 %853, %v835
  %v855 = vpop.permute.xlu0 %854
  %858 = vset.pattern.permute.xlu0 1
  %859 = vperm.xlu0 %858, %v837
  %v860 = vpop.permute.xlu0 %859
  %863 = vset.pattern.permute.xlu0 1
  %864 = vperm.xlu0 %863, %v839
  %v865 = vpop.permute.xlu0 %864
  %868 = vset.pattern.permute.xlu0 1
  %869 = vperm.xlu0 %868, %v841
  %v870 = vpop.permute.xlu0 %869
  %v872 = vmul.f32 %v745, %v845
  %v873 = vmul.f32 %v746, %v850
  %v874 = vmul.f32 %v747, %v855
  %v875 = vmul.f32 %v748, %v860
  %v876 = vmul.f32 %v749, %v865
  %v877 = vmul.f32 %v750, %v870
  %v878 = vmul.f32 %v823, %v845
  %v879 = vmul.f32 %v824, %v850
  %v880 = vmul.f32 %v825, %v855
  %v881 = vmul.f32 %v826, %v860
  %v882 = vmul.f32 %v827, %v865
  %v883 = vmul.f32 %v828, %v870
  %885 = vset.pattern.permute.xlu0 1
  %886 = vperm.xlu0 %885, %v745
  %v887 = vpop.permute.xlu0 %886
  %890 = vset.pattern.permute.xlu0 1
  %891 = vperm.xlu0 %890, %v746
  %v892 = vpop.permute.xlu0 %891
  %895 = vset.pattern.permute.xlu0 1
  %896 = vperm.xlu0 %895, %v747
  %v897 = vpop.permute.xlu0 %896
  %900 = vset.pattern.permute.xlu0 1
  %901 = vperm.xlu0 %900, %v748
  %v902 = vpop.permute.xlu0 %901
  %905 = vset.pattern.permute.xlu0 1
  %906 = vperm.xlu0 %905, %v749
  %v907 = vpop.permute.xlu0 %906
  %910 = vset.pattern.permute.xlu0 1
  %911 = vperm.xlu0 %910, %v750
  %v912 = vpop.permute.xlu0 %911
  %v914 = vlaneseq
  %v915 = vshrl.u32 %v914, 7
  %v916 = vsub.s32 1, %v915
  %v917 = vrot.slane %v872, %v916
  %v918 = vlaneseq
  %v919 = vshrl.u32 %v918, 7
  %v920 = vsub.s32 1, %v919
  %v921 = vrot.slane %v873, %v920
  %v922 = vlaneseq
  %v923 = vshrl.u32 %v922, 7
  %v924 = vsub.s32 1, %v923
  %v925 = vrot.slane %v874, %v924
  %v926 = vlaneseq
  %v927 = vshrl.u32 %v926, 7
  %v928 = vsub.s32 1, %v927
  %v929 = vrot.slane %v875, %v928
  %v930 = vlaneseq
  %v931 = vshrl.u32 %v930, 7
  %v932 = vsub.s32 1, %v931
  %v933 = vrot.slane %v876, %v932
  %v934 = vlaneseq
  %v935 = vshrl.u32 %v934, 7
  %v936 = vsub.s32 1, %v935
  %v937 = vrot.slane %v877, %v936
  %v938 = vmul.f32 %v887, %v917
  %v939 = vmul.f32 %v892, %v921
  %v940 = vmul.f32 %v897, %v925
  %v941 = vmul.f32 %v902, %v929
  %v942 = vmul.f32 %v907, %v933
  %v943 = vmul.f32 %v912, %v937
  %v944 = vsub.f32 %v745, %v938
  %v945 = vsub.f32 %v746, %v939
  %v946 = vsub.f32 %v747, %v940
  %v947 = vsub.f32 %v748, %v941
  %v948 = vsub.f32 %v749, %v942
  %v949 = vsub.f32 %v750, %v943
  %v950 = vsel %vm829, 1, 0
  %vm951 = vcmp.eq.s32.totalorder %v950, 1
  %v952 = vsel %vm951, %v917, %v944
  %v953 = vsel %vm951, %v921, %v945
  %v954 = vsel %vm951, %v925, %v946
  %v955 = vsel %vm951, %v929, %v947
  %v956 = vsel %vm951, %v933, %v948
  %v957 = vsel %vm951, %v937, %v949
  %v958 = vlaneseq
  %v959 = vshrl.u32 %v958, 7
  %v960 = vsub.s32 1, %v959
  %v961 = vrot.slane %v878, %v960
  %v962 = vlaneseq
  %v963 = vshrl.u32 %v962, 7
  %v964 = vsub.s32 1, %v963
  %v965 = vrot.slane %v879, %v964
  %v966 = vlaneseq
  %v967 = vshrl.u32 %v966, 7
  %v968 = vsub.s32 1, %v967
  %v969 = vrot.slane %v880, %v968
  %v970 = vlaneseq
  %v971 = vshrl.u32 %v970, 7
  %v972 = vsub.s32 1, %v971
  %v973 = vrot.slane %v881, %v972
  %v974 = vlaneseq
  %v975 = vshrl.u32 %v974, 7
  %v976 = vsub.s32 1, %v975
  %v977 = vrot.slane %v882, %v976
  %v978 = vlaneseq
  %v979 = vshrl.u32 %v978, 7
  %v980 = vsub.s32 1, %v979
  %v981 = vrot.slane %v883, %v980
  %v982 = vmul.f32 %v887, %v961
  %v983 = vmul.f32 %v892, %v965
  %v984 = vmul.f32 %v897, %v969
  %v985 = vmul.f32 %v902, %v973
  %v986 = vmul.f32 %v907, %v977
  %v987 = vmul.f32 %v912, %v981
  %v988 = vsub.f32 %v823, %v982
  %v989 = vsub.f32 %v824, %v983
  %v990 = vsub.f32 %v825, %v984
  %v991 = vsub.f32 %v826, %v985
  %v992 = vsub.f32 %v827, %v986
  %v993 = vsub.f32 %v828, %v987
  %v994 = vsel %vm951, %v961, %v988
  %v995 = vsel %vm951, %v965, %v989
  %v996 = vsel %vm951, %v969, %v990
  %v997 = vsel %vm951, %v973, %v991
  %v998 = vsel %vm951, %v977, %v992
  %v999 = vsel %vm951, %v981, %v993
  %vm1000 = vcmp.eq.s32.totalorder %v567, 2
  %v1001 = vrcp.pop %v952
  %v1002 = vmul.f32 1.0, %v1001
  %v1003 = vrcp.pop %v953
  %v1004 = vmul.f32 1.0, %v1003
  %v1005 = vrcp.pop %v954
  %v1006 = vmul.f32 1.0, %v1005
  %v1007 = vrcp.pop %v955
  %v1008 = vmul.f32 1.0, %v1007
  %v1009 = vrcp.pop %v956
  %v1010 = vmul.f32 1.0, %v1009
  %v1011 = vrcp.pop %v957
  %v1012 = vmul.f32 1.0, %v1011
  %1014 = vset.pattern.permute.xlu0 2
  %1015 = vperm.xlu0 %1014, %v1002
  %v1016 = vpop.permute.xlu0 %1015
  %1019 = vset.pattern.permute.xlu0 2
  %1020 = vperm.xlu0 %1019, %v1004
  %v1021 = vpop.permute.xlu0 %1020
  %1024 = vset.pattern.permute.xlu0 2
  %1025 = vperm.xlu0 %1024, %v1006
  %v1026 = vpop.permute.xlu0 %1025
  %1029 = vset.pattern.permute.xlu0 2
  %1030 = vperm.xlu0 %1029, %v1008
  %v1031 = vpop.permute.xlu0 %1030
  %1034 = vset.pattern.permute.xlu0 2
  %1035 = vperm.xlu0 %1034, %v1010
  %v1036 = vpop.permute.xlu0 %1035
  %1039 = vset.pattern.permute.xlu0 2
  %1040 = vperm.xlu0 %1039, %v1012
  %v1041 = vpop.permute.xlu0 %1040
  %v1043 = vmul.f32 %v994, %v1016
  %v1044 = vmul.f32 %v995, %v1021
  %v1045 = vmul.f32 %v996, %v1026
  %v1046 = vmul.f32 %v997, %v1031
  %v1047 = vmul.f32 %v998, %v1036
  %v1048 = vmul.f32 %v999, %v1041
  %1050 = vset.pattern.permute.xlu0 2
  %1051 = vperm.xlu0 %1050, %v952
  %v1052 = vpop.permute.xlu0 %1051
  %1055 = vset.pattern.permute.xlu0 2
  %1056 = vperm.xlu0 %1055, %v953
  %v1057 = vpop.permute.xlu0 %1056
  %1060 = vset.pattern.permute.xlu0 2
  %1061 = vperm.xlu0 %1060, %v954
  %v1062 = vpop.permute.xlu0 %1061
  %1065 = vset.pattern.permute.xlu0 2
  %1066 = vperm.xlu0 %1065, %v955
  %v1067 = vpop.permute.xlu0 %1066
  %1070 = vset.pattern.permute.xlu0 2
  %1071 = vperm.xlu0 %1070, %v956
  %v1072 = vpop.permute.xlu0 %1071
  %1075 = vset.pattern.permute.xlu0 2
  %1076 = vperm.xlu0 %1075, %v957
  %v1077 = vpop.permute.xlu0 %1076
  %v1079 = vlaneseq
  %v1080 = vshrl.u32 %v1079, 7
  %v1081 = vsub.s32 2, %v1080
  %v1082 = vrot.slane %v1043, %v1081
  %v1083 = vlaneseq
  %v1084 = vshrl.u32 %v1083, 7
  %v1085 = vsub.s32 2, %v1084
  %v1086 = vrot.slane %v1044, %v1085
  %v1087 = vlaneseq
  %v1088 = vshrl.u32 %v1087, 7
  %v1089 = vsub.s32 2, %v1088
  %v1090 = vrot.slane %v1045, %v1089
  %v1091 = vlaneseq
  %v1092 = vshrl.u32 %v1091, 7
  %v1093 = vsub.s32 2, %v1092
  %v1094 = vrot.slane %v1046, %v1093
  %v1095 = vlaneseq
  %v1096 = vshrl.u32 %v1095, 7
  %v1097 = vsub.s32 2, %v1096
  %v1098 = vrot.slane %v1047, %v1097
  %v1099 = vlaneseq
  %v1100 = vshrl.u32 %v1099, 7
  %v1101 = vsub.s32 2, %v1100
  %v1102 = vrot.slane %v1048, %v1101
  %v1103 = vmul.f32 %v1052, %v1082
  %v1104 = vmul.f32 %v1057, %v1086
  %v1105 = vmul.f32 %v1062, %v1090
  %v1106 = vmul.f32 %v1067, %v1094
  %v1107 = vmul.f32 %v1072, %v1098
  %v1108 = vmul.f32 %v1077, %v1102
  %v1109 = vsub.f32 %v994, %v1103
  %v1110 = vsub.f32 %v995, %v1104
  %v1111 = vsub.f32 %v996, %v1105
  %v1112 = vsub.f32 %v997, %v1106
  %v1113 = vsub.f32 %v998, %v1107
  %v1114 = vsub.f32 %v999, %v1108
  %v1115 = vsel %vm1000, 1, 0
  %vm1116 = vcmp.eq.s32.totalorder %v1115, 1
  %v1117 = vsel %vm1116, %v1082, %v1109
  %v1118 = vsel %vm1116, %v1086, %v1110
  %v1119 = vsel %vm1116, %v1090, %v1111
  %v1120 = vsel %vm1116, %v1094, %v1112
  %v1121 = vsel %vm1116, %v1098, %v1113
  %v1122 = vsel %vm1116, %v1102, %v1114
  %1123 = vxpose.xlu0.b32.start [1/16] %v111, 128
  %1124 = vxpose.xlu0.b32.cont [2/16] 0.0, 128
  %1125 = vxpose.xlu0.b32.cont [3/16] 0.0, 128
  %1126 = vxpose.xlu0.b32.cont [4/16] 0.0, 128
  %1127 = vxpose.xlu0.b32.cont [5/16] 0.0, 128
  %1128 = vxpose.xlu0.b32.cont [6/16] 0.0, 128
  %1129 = vxpose.xlu0.b32.cont [7/16] 0.0, 128
  %1130 = vxpose.xlu0.b32.cont [8/16] 0.0, 128
  %1131 = vxpose.xlu0.b32.cont [9/16] 0.0, 128
  %1132 = vxpose.xlu0.b32.cont [10/16] 0.0, 128
  %1133 = vxpose.xlu0.b32.cont [11/16] 0.0, 128
  %1134 = vxpose.xlu0.b32.cont [12/16] 0.0, 128
  %1135 = vxpose.xlu0.b32.cont [13/16] 0.0, 128
  %1136 = vxpose.xlu0.b32.cont [14/16] 0.0, 128
  %1137 = vxpose.xlu0.b32.cont [15/16] 0.0, 128
  %1138 = vxpose.xlu0.b32.end [16/16] 0.0, 128
  %v1139 = vpop.trf.xlu0
  %v1140 = vpop.trf.xlu0
  %v1141 = vpop.trf.xlu0
  %v1142 = vpop.trf.xlu0
  %v1143 = vpop.trf.xlu0
  %v1144 = vpop.trf.xlu0
  %v1145 = vpop.trf.xlu0
  %v1146 = vpop.trf.xlu0
  %v1147 = vpop.trf.xlu0
  %v1148 = vpop.trf.xlu0
  %v1149 = vpop.trf.xlu0
  %v1150 = vpop.trf.xlu0
  %v1151 = vpop.trf.xlu0
  %v1152 = vpop.trf.xlu0
  %v1153 = vpop.trf.xlu0
  %v1154 = vpop.trf.xlu0
  %vm1155 = vcmask 23552
  %v1157 = vsel %vm1155, %v1139, 0
  %v1160 = vsel %vm1155, %v1140, 0
  %v1163 = vsel %vm1155, %v1141, 0
  %v1166 = vsel %vm1155, %v1142, 0
  %vm1168 = vcmask 1042432
  %v1170 = vsel %vm1168, %v1117, 0
  %1172 = vmatprep.subr.mxu0 0.0
  %1173 = vmatpush1.msra.mxu0 %v1170
  %1174 = vmatprep.subr.mxu0 0.0
  %1175 = vmatpush1.msra.mxu0 0.0
  %1176 = vmatprep.subr.mxu0 0.0
  %1177 = vmatpush1.msra.mxu0 0.0
  %1178 = vmatprep.subr.mxu0 0.0
  %1179 = vmatpush1.msra.mxu0 0.0
  %1180 = vmatprep.subr.mxu0 0.0
  %1181 = vmatpush1.msra.mxu0 0.0
  %1182 = vmatprep.subr.mxu0 0.0
  %1183 = vmatpush1.msra.mxu0 0.0
  %1184 = vmatprep.subr.mxu0 0.0
  %1185 = vmatpush1.msra.mxu0 0.0
  %1186 = vmatprep.subr.mxu0 0.0
  %1187 = vmatpush1.msra.mxu0 0.0
  %1188 = vmatprep.subr.mxu0 0.0
  %1189 = vmatpush1.msra.mxu0 0.0
  %1190 = vmatprep.subr.mxu0 0.0
  %1191 = vmatpush1.msra.mxu0 0.0
  %1192 = vmatprep.subr.mxu0 0.0
  %1193 = vmatpush1.msra.mxu0 0.0
  %1194 = vmatprep.subr.mxu0 0.0
  %1195 = vmatpush1.msra.mxu0 0.0
  %1196 = vmatprep.subr.mxu0 0.0
  %1197 = vmatpush1.msra.mxu0 0.0
  %1198 = vmatprep.subr.mxu0 0.0
  %1199 = vmatpush1.msra.mxu0 0.0
  %1200 = vmatprep.subr.mxu0 0.0
  %1201 = vmatpush1.msra.mxu0 0.0
  %1202 = vmatprep.subr.mxu0 0.0
  %1203 = vmatpush1.msra.mxu0 0.0
  %1204 = vmatprep.subr.mxu0 0.0
  %1205 = vmatpush1.msra.mxu0 0.0
  %1206 = vmatprep.subr.mxu0 0.0
  %1207 = vmatpush1.msra.mxu0 0.0
  %1208 = vmatprep.subr.mxu0 0.0
  %1209 = vmatpush1.msra.mxu0 0.0
  %1210 = vmatprep.subr.mxu0 0.0
  %1211 = vmatpush1.msra.mxu0 0.0
  %1212 = vmatprep.subr.mxu0 0.0
  %1213 = vmatpush1.msra.mxu0 0.0
  %1214 = vmatprep.subr.mxu0 0.0
  %1215 = vmatpush1.msra.mxu0 0.0
  %1216 = vmatprep.subr.mxu0 0.0
  %1217 = vmatpush1.msra.mxu0 0.0
  %1218 = vmatprep.subr.mxu0 0.0
  %1219 = vmatpush1.msra.mxu0 0.0
  %1220 = vmatprep.subr.mxu0 0.0
  %1221 = vmatpush1.msra.mxu0 0.0
  %1222 = vmatprep.subr.mxu0 0.0
  %1223 = vmatpush1.msra.mxu0 0.0
  %1224 = vmatprep.subr.mxu0 0.0
  %1225 = vmatpush1.msra.mxu0 0.0
  %1226 = vmatprep.subr.mxu0 0.0
  %1227 = vmatpush1.msra.mxu0 0.0
  %1228 = vmatprep.subr.mxu0 0.0
  %1229 = vmatpush1.msra.mxu0 0.0
  %1230 = vmatprep.subr.mxu0 0.0
  %1231 = vmatpush1.msra.mxu0 0.0
  %1232 = vmatprep.subr.mxu0 0.0
  %1233 = vmatpush1.msra.mxu0 0.0
  %1234 = vmatprep.subr.mxu0 0.0
  %1235 = vmatpush1.msra.mxu0 0.0
  %1236 = vmatprep.mubr.f32.mxu0 0.0
  %1237 = vmatmul.mubr.f32.gmra.mrb[0].mxu0 %v1157
  %v1238 = vpop.f32.mrb[0].mxu0
  %v1239 = vadd.f32 0.0, %v1238
  %v1240 = vpop.f32.mrb[0].mxu0
  %1241 = vmatprep.mubr.f32.mxu0 0.0
  %1242 = vmatmul.mubr.f32.gmra.mrb[0].mxu0 %v1160
  %v1243 = vpop.f32.mrb[0].mxu0
  %v1244 = vadd.f32 0.0, %v1243
  %v1245 = vpop.f32.mrb[0].mxu0
  %1246 = vmatprep.mubr.f32.mxu0 0.0
  %1247 = vmatmul.mubr.f32.gmra.mrb[0].mxu0 %v1163
  %v1248 = vpop.f32.mrb[0].mxu0
  %v1249 = vadd.f32 0.0, %v1248
  %v1250 = vpop.f32.mrb[0].mxu0
  %1251 = vmatprep.mubr.f32.mxu0 0.0
  %1252 = vmatmul.mubr.f32.gmra.mrb[0].mxu0 %v1166
  %v1253 = vpop.f32.mrb[0].mxu0
  %v1254 = vadd.f32 0.0, %v1253
  %v1255 = vpop.f32.mrb[0].mxu0
  %1256 = vdwg.mxu0
  %1257 = vxpose.xlu0.b32.start [1/16] %v127, 128
  %1258 = vxpose.xlu0.b32.cont [2/16] 0.0, 128
  %1259 = vxpose.xlu0.b32.cont [3/16] 0.0, 128
  %1260 = vxpose.xlu0.b32.cont [4/16] 0.0, 128
  %1261 = vxpose.xlu0.b32.cont [5/16] 0.0, 128
  %1262 = vxpose.xlu0.b32.cont [6/16] 0.0, 128
  %1263 = vxpose.xlu0.b32.cont [7/16] 0.0, 128
  %1264 = vxpose.xlu0.b32.cont [8/16] 0.0, 128
  %1265 = vxpose.xlu0.b32.cont [9/16] 0.0, 128
  %1266 = vxpose.xlu0.b32.cont [10/16] 0.0, 128
  %1267 = vxpose.xlu0.b32.cont [11/16] 0.0, 128
  %1268 = vxpose.xlu0.b32.cont [12/16] 0.0, 128
  %1269 = vxpose.xlu0.b32.cont [13/16] 0.0, 128
  %1270 = vxpose.xlu0.b32.cont [14/16] 0.0, 128
  %1271 = vxpose.xlu0.b32.cont [15/16] 0.0, 128
  %1272 = vxpose.xlu0.b32.end [16/16] 0.0, 128
  %v1273 = vpop.trf.xlu0
  %v1274 = vpop.trf.xlu0
  %v1275 = vpop.trf.xlu0
  %v1276 = vpop.trf.xlu0
  %v1277 = vpop.trf.xlu0
  %v1278 = vpop.trf.xlu0
  %v1279 = vpop.trf.xlu0
  %v1280 = vpop.trf.xlu0
  %v1281 = vpop.trf.xlu0
  %v1282 = vpop.trf.xlu0
  %v1283 = vpop.trf.xlu0
  %v1284 = vpop.trf.xlu0
  %v1285 = vpop.trf.xlu0
  %v1286 = vpop.trf.xlu0
  %v1287 = vpop.trf.xlu0
  %v1288 = vpop.trf.xlu0
  %v1290 = vsel %vm1155, %v1273, 0
  %v1293 = vsel %vm1155, %v1274, 0
  %v1296 = vsel %vm1155, %v1275, 0
  %v1299 = vsel %vm1155, %v1276, 0
  %v1302 = vsel %vm1168, %v1118, 0
  %1304 = vmatprep.subr.mxu0 0.0
  %1305 = vmatpush1.msra.mxu0 %v1302
  %1306 = vmatprep.subr.mxu0 0.0
  %1307 = vmatpush1.msra.mxu0 0.0
  %1308 = vmatprep.subr.mxu0 0.0
  %1309 = vmatpush1.msra.mxu0 0.0
  %1310 = vmatprep.subr.mxu0 0.0
  %1311 = vmatpush1.msra.mxu0 0.0
  %1312 = vmatprep.subr.mxu0 0.0
  %1313 = vmatpush1.msra.mxu0 0.0
  %1314 = vmatprep.subr.mxu0 0.0
  %1315 = vmatpush1.msra.mxu0 0.0
  %1316 = vmatprep.subr.mxu0 0.0
  %1317 = vmatpush1.msra.mxu0 0.0
  %1318 = vmatprep.subr.mxu0 0.0
  %1319 = vmatpush1.msra.mxu0 0.0
  %1320 = vmatprep.subr.mxu0 0.0
  %1321 = vmatpush1.msra.mxu0 0.0
  %1322 = vmatprep.subr.mxu0 0.0
  %1323 = vmatpush1.msra.mxu0 0.0
  %1324 = vmatprep.subr.mxu0 0.0
  %1325 = vmatpush1.msra.mxu0 0.0
  %1326 = vmatprep.subr.mxu0 0.0
  %1327 = vmatpush1.msra.mxu0 0.0
  %1328 = vmatprep.subr.mxu0 0.0
  %1329 = vmatpush1.msra.mxu0 0.0
  %1330 = vmatprep.subr.mxu0 0.0
  %1331 = vmatpush1.msra.mxu0 0.0
  %1332 = vmatprep.subr.mxu0 0.0
  %1333 = vmatpush1.msra.mxu0 0.0
  %1334 = vmatprep.subr.mxu0 0.0
  %1335 = vmatpush1.msra.mxu0 0.0
  %1336 = vmatprep.subr.mxu0 0.0
  %1337 = vmatpush1.msra.mxu0 0.0
  %1338 = vmatprep.subr.mxu0 0.0
  %1339 = vmatpush1.msra.mxu0 0.0
  %1340 = vmatprep.subr.mxu0 0.0
  %1341 = vmatpush1.msra.mxu0 0.0
  %1342 = vmatprep.subr.mxu0 0.0
  %1343 = vmatpush1.msra.mxu0 0.0
  %1344 = vmatprep.subr.mxu0 0.0
  %1345 = vmatpush1.msra.mxu0 0.0
  %1346 = vmatprep.subr.mxu0 0.0
  %1347 = vmatpush1.msra.mxu0 0.0
  %1348 = vmatprep.subr.mxu0 0.0
  %1349 = vmatpush1.msra.mxu0 0.0
  %1350 = vmatprep.subr.mxu0 0.0
  %1351 = vmatpush1.msra.mxu0 0.0
  %1352 = vmatprep.subr.mxu0 0.0
  %1353 = vmatpush1.msra.mxu0 0.0
  %1354 = vmatprep.subr.mxu0 0.0
  %1355 = vmatpush1.msra.mxu0 0.0
  %1356 = vmatprep.subr.mxu0 0.0
  %1357 = vmatpush1.msra.mxu0 0.0
  %1358 = vmatprep.subr.mxu0 0.0
  %1359 = vmatpush1.msra.mxu0 0.0
  %1360 = vmatprep.subr.mxu0 0.0
  %1361 = vmatpush1.msra.mxu0 0.0
  %1362 = vmatprep.subr.mxu0 0.0
  %1363 = vmatpush1.msra.mxu0 0.0
  %1364 = vmatprep.subr.mxu0 0.0
  %1365 = vmatpush1.msra.mxu0 0.0
  %1366 = vmatprep.subr.mxu0 0.0
  %1367 = vmatpush1.msra.mxu0 0.0
  %1368 = vmatprep.mubr.f32.mxu0 0.0
  %1369 = vmatmul.mubr.f32.gmra.mrb[0].mxu0 %v1290
  %v1370 = vpop.f32.mrb[0].mxu0
  %v1371 = vadd.f32 0.0, %v1370
  %v1372 = vpop.f32.mrb[0].mxu0
  %1373 = vmatprep.mubr.f32.mxu0 0.0
  %1374 = vmatmul.mubr.f32.gmra.mrb[0].mxu0 %v1293
  %v1375 = vpop.f32.mrb[0].mxu0
  %v1376 = vadd.f32 0.0, %v1375
  %v1377 = vpop.f32.mrb[0].mxu0
  %1378 = vmatprep.mubr.f32.mxu0 0.0
  %1379 = vmatmul.mubr.f32.gmra.mrb[0].mxu0 %v1296
  %v1380 = vpop.f32.mrb[0].mxu0
  %v1381 = vadd.f32 0.0, %v1380
  %v1382 = vpop.f32.mrb[0].mxu0
  %1383 = vmatprep.mubr.f32.mxu0 0.0
  %1384 = vmatmul.mubr.f32.gmra.mrb[0].mxu0 %v1299
  %v1385 = vpop.f32.mrb[0].mxu0
  %v1386 = vadd.f32 0.0, %v1385
  %v1387 = vpop.f32.mrb[0].mxu0
  %1388 = vdwg.mxu0
  %1389 = vxpose.xlu0.b32.start [1/16] %v116, 128
  %1390 = vxpose.xlu0.b32.cont [2/16] 0.0, 128
  %1391 = vxpose.xlu0.b32.cont [3/16] 0.0, 128
  %1392 = vxpose.xlu0.b32.cont [4/16] 0.0, 128
  %1393 = vxpose.xlu0.b32.cont [5/16] 0.0, 128
  %1394 = vxpose.xlu0.b32.cont [6/16] 0.0, 128
  %1395 = vxpose.xlu0.b32.cont [7/16] 0.0, 128
  %1396 = vxpose.xlu0.b32.cont [8/16] 0.0, 128
  %1397 = vxpose.xlu0.b32.cont [9/16] 0.0, 128
  %1398 = vxpose.xlu0.b32.cont [10/16] 0.0, 128
  %1399 = vxpose.xlu0.b32.cont [11/16] 0.0, 128
  %1400 = vxpose.xlu0.b32.cont [12/16] 0.0, 128
  %1401 = vxpose.xlu0.b32.cont [13/16] 0.0, 128
  %1402 = vxpose.xlu0.b32.cont [14/16] 0.0, 128
  %1403 = vxpose.xlu0.b32.cont [15/16] 0.0, 128
  %1404 = vxpose.xlu0.b32.end [16/16] 0.0, 128
  %v1405 = vpop.trf.xlu0
  %v1406 = vpop.trf.xlu0
  %v1407 = vpop.trf.xlu0
  %v1408 = vpop.trf.xlu0
  %v1409 = vpop.trf.xlu0
  %v1410 = vpop.trf.xlu0
  %v1411 = vpop.trf.xlu0
  %v1412 = vpop.trf.xlu0
  %v1413 = vpop.trf.xlu0
  %v1414 = vpop.trf.xlu0
  %v1415 = vpop.trf.xlu0
  %v1416 = vpop.trf.xlu0
  %v1417 = vpop.trf.xlu0
  %v1418 = vpop.trf.xlu0
  %v1419 = vpop.trf.xlu0
  %v1420 = vpop.trf.xlu0
  %v1422 = vsel %vm1155, %v1405, 0
  %v1425 = vsel %vm1155, %v1406, 0
  %v1428 = vsel %vm1155, %v1407, 0
  %v1431 = vsel %vm1155, %v1408, 0
  %v1434 = vsel %vm1168, %v1119, 0
  %1436 = vmatprep.subr.mxu0 0.0
  %1437 = vmatpush1.msra.mxu0 %v1434
  %1438 = vmatprep.subr.mxu0 0.0
  %1439 = vmatpush1.msra.mxu0 0.0
  %1440 = vmatprep.subr.mxu0 0.0
  %1441 = vmatpush1.msra.mxu0 0.0
  %1442 = vmatprep.subr.mxu0 0.0
  %1443 = vmatpush1.msra.mxu0 0.0
  %1444 = vmatprep.subr.mxu0 0.0
  %1445 = vmatpush1.msra.mxu0 0.0
  %1446 = vmatprep.subr.mxu0 0.0
  %1447 = vmatpush1.msra.mxu0 0.0
  %1448 = vmatprep.subr.mxu0 0.0
  %1449 = vmatpush1.msra.mxu0 0.0
  %1450 = vmatprep.subr.mxu0 0.0
  %1451 = vmatpush1.msra.mxu0 0.0
  %1452 = vmatprep.subr.mxu0 0.0
  %1453 = vmatpush1.msra.mxu0 0.0
  %1454 = vmatprep.subr.mxu0 0.0
  %1455 = vmatpush1.msra.mxu0 0.0
  %1456 = vmatprep.subr.mxu0 0.0
  %1457 = vmatpush1.msra.mxu0 0.0
  %1458 = vmatprep.subr.mxu0 0.0
  %1459 = vmatpush1.msra.mxu0 0.0
  %1460 = vmatprep.subr.mxu0 0.0
  %1461 = vmatpush1.msra.mxu0 0.0
  %1462 = vmatprep.subr.mxu0 0.0
  %1463 = vmatpush1.msra.mxu0 0.0
  %1464 = vmatprep.subr.mxu0 0.0
  %1465 = vmatpush1.msra.mxu0 0.0
  %1466 = vmatprep.subr.mxu0 0.0
  %1467 = vmatpush1.msra.mxu0 0.0
  %1468 = vmatprep.subr.mxu0 0.0
  %1469 = vmatpush1.msra.mxu0 0.0
  %1470 = vmatprep.subr.mxu0 0.0
  %1471 = vmatpush1.msra.mxu0 0.0
  %1472 = vmatprep.subr.mxu0 0.0
  %1473 = vmatpush1.msra.mxu0 0.0
  %1474 = vmatprep.subr.mxu0 0.0
  %1475 = vmatpush1.msra.mxu0 0.0
  %1476 = vmatprep.subr.mxu0 0.0
  %1477 = vmatpush1.msra.mxu0 0.0
  %1478 = vmatprep.subr.mxu0 0.0
  %1479 = vmatpush1.msra.mxu0 0.0
  %1480 = vmatprep.subr.mxu0 0.0
  %1481 = vmatpush1.msra.mxu0 0.0
  %1482 = vmatprep.subr.mxu0 0.0
  %1483 = vmatpush1.msra.mxu0 0.0
  %1484 = vmatprep.subr.mxu0 0.0
  %1485 = vmatpush1.msra.mxu0 0.0
  %1486 = vmatprep.subr.mxu0 0.0
  %1487 = vmatpush1.msra.mxu0 0.0
  %1488 = vmatprep.subr.mxu0 0.0
  %1489 = vmatpush1.msra.mxu0 0.0
  %1490 = vmatprep.subr.mxu0 0.0
  %1491 = vmatpush1.msra.mxu0 0.0
  %1492 = vmatprep.subr.mxu0 0.0
  %1493 = vmatpush1.msra.mxu0 0.0
  %1494 = vmatprep.subr.mxu0 0.0
  %1495 = vmatpush1.msra.mxu0 0.0
  %1496 = vmatprep.subr.mxu0 0.0
  %1497 = vmatpush1.msra.mxu0 0.0
  %1498 = vmatprep.subr.mxu0 0.0
  %1499 = vmatpush1.msra.mxu0 0.0
  %1500 = vmatprep.mubr.f32.mxu0 0.0
  %1501 = vmatmul.mubr.f32.gmra.mrb[0].mxu0 %v1422
  %v1502 = vpop.f32.mrb[0].mxu0
  %v1503 = vadd.f32 0.0, %v1502
  %v1504 = vpop.f32.mrb[0].mxu0
  %1505 = vmatprep.mubr.f32.mxu0 0.0
  %1506 = vmatmul.mubr.f32.gmra.mrb[0].mxu0 %v1425
  %v1507 = vpop.f32.mrb[0].mxu0
  %v1508 = vadd.f32 0.0, %v1507
  %v1509 = vpop.f32.mrb[0].mxu0
  %1510 = vmatprep.mubr.f32.mxu0 0.0
  %1511 = vmatmul.mubr.f32.gmra.mrb[0].mxu0 %v1428
  %v1512 = vpop.f32.mrb[0].mxu0
  %v1513 = vadd.f32 0.0, %v1512
  %v1514 = vpop.f32.mrb[0].mxu0
  %1515 = vmatprep.mubr.f32.mxu0 0.0
  %1516 = vmatmul.mubr.f32.gmra.mrb[0].mxu0 %v1431
  %v1517 = vpop.f32.mrb[0].mxu0
  %v1518 = vadd.f32 0.0, %v1517
  %v1519 = vpop.f32.mrb[0].mxu0
  %1520 = vdwg.mxu0
  %1521 = vxpose.xlu0.b32.start [1/16] %v128, 128
  %1522 = vxpose.xlu0.b32.cont [2/16] 0.0, 128
  %1523 = vxpose.xlu0.b32.cont [3/16] 0.0, 128
  %1524 = vxpose.xlu0.b32.cont [4/16] 0.0, 128
  %1525 = vxpose.xlu0.b32.cont [5/16] 0.0, 128
  %1526 = vxpose.xlu0.b32.cont [6/16] 0.0, 128
  %1527 = vxpose.xlu0.b32.cont [7/16] 0.0, 128
  %1528 = vxpose.xlu0.b32.cont [8/16] 0.0, 128
  %1529 = vxpose.xlu0.b32.cont [9/16] 0.0, 128
  %1530 = vxpose.xlu0.b32.cont [10/16] 0.0, 128
  %1531 = vxpose.xlu0.b32.cont [11/16] 0.0, 128
  %1532 = vxpose.xlu0.b32.cont [12/16] 0.0, 128
  %1533 = vxpose.xlu0.b32.cont [13/16] 0.0, 128
  %1534 = vxpose.xlu0.b32.cont [14/16] 0.0, 128
  %1535 = vxpose.xlu0.b32.cont [15/16] 0.0, 128
  %1536 = vxpose.xlu0.b32.end [16/16] 0.0, 128
  %v1537 = vpop.trf.xlu0
  %v1538 = vpop.trf.xlu0
  %v1539 = vpop.trf.xlu0
  %v1540 = vpop.trf.xlu0
  %v1541 = vpop.trf.xlu0
  %v1542 = vpop.trf.xlu0
  %v1543 = vpop.trf.xlu0
  %v1544 = vpop.trf.xlu0
  %v1545 = vpop.trf.xlu0
  %v1546 = vpop.trf.xlu0
  %v1547 = vpop.trf.xlu0
  %v1548 = vpop.trf.xlu0
  %v1549 = vpop.trf.xlu0
  %v1550 = vpop.trf.xlu0
  %v1551 = vpop.trf.xlu0
  %v1552 = vpop.trf.xlu0
  %v1554 = vsel %vm1155, %v1537, 0
  %v1557 = vsel %vm1155, %v1538, 0
  %v1560 = vsel %vm1155, %v1539, 0
  %v1563 = vsel %vm1155, %v1540, 0
  %v1566 = vsel %vm1168, %v1120, 0
  %1568 = vmatprep.subr.mxu0 0.0
  %1569 = vmatpush1.msra.mxu0 %v1566
  %1570 = vmatprep.subr.mxu0 0.0
  %1571 = vmatpush1.msra.mxu0 0.0
  %1572 = vmatprep.subr.mxu0 0.0
  %1573 = vmatpush1.msra.mxu0 0.0
  %1574 = vmatprep.subr.mxu0 0.0
  %1575 = vmatpush1.msra.mxu0 0.0
  %1576 = vmatprep.subr.mxu0 0.0
  %1577 = vmatpush1.msra.mxu0 0.0
  %1578 = vmatprep.subr.mxu0 0.0
  %1579 = vmatpush1.msra.mxu0 0.0
  %1580 = vmatprep.subr.mxu0 0.0
  %1581 = vmatpush1.msra.mxu0 0.0
  %1582 = vmatprep.subr.mxu0 0.0
  %1583 = vmatpush1.msra.mxu0 0.0
  %1584 = vmatprep.subr.mxu0 0.0
  %1585 = vmatpush1.msra.mxu0 0.0
  %1586 = vmatprep.subr.mxu0 0.0
  %1587 = vmatpush1.msra.mxu0 0.0
  %1588 = vmatprep.subr.mxu0 0.0
  %1589 = vmatpush1.msra.mxu0 0.0
  %1590 = vmatprep.subr.mxu0 0.0
  %1591 = vmatpush1.msra.mxu0 0.0
  %1592 = vmatprep.subr.mxu0 0.0
  %1593 = vmatpush1.msra.mxu0 0.0
  %1594 = vmatprep.subr.mxu0 0.0
  %1595 = vmatpush1.msra.mxu0 0.0
  %1596 = vmatprep.subr.mxu0 0.0
  %1597 = vmatpush1.msra.mxu0 0.0
  %1598 = vmatprep.subr.mxu0 0.0
  %1599 = vmatpush1.msra.mxu0 0.0
  %1600 = vmatprep.subr.mxu0 0.0
  %1601 = vmatpush1.msra.mxu0 0.0
  %1602 = vmatprep.subr.mxu0 0.0
  %1603 = vmatpush1.msra.mxu0 0.0
  %1604 = vmatprep.subr.mxu0 0.0
  %1605 = vmatpush1.msra.mxu0 0.0
  %1606 = vmatprep.subr.mxu0 0.0
  %1607 = vmatpush1.msra.mxu0 0.0
  %1608 = vmatprep.subr.mxu0 0.0
  %1609 = vmatpush1.msra.mxu0 0.0
  %1610 = vmatprep.subr.mxu0 0.0
  %1611 = vmatpush1.msra.mxu0 0.0
  %1612 = vmatprep.subr.mxu0 0.0
  %1613 = vmatpush1.msra.mxu0 0.0
  %1614 = vmatprep.subr.mxu0 0.0
  %1615 = vmatpush1.msra.mxu0 0.0
  %1616 = vmatprep.subr.mxu0 0.0
  %1617 = vmatpush1.msra.mxu0 0.0
  %1618 = vmatprep.subr.mxu0 0.0
  %1619 = vmatpush1.msra.mxu0 0.0
  %1620 = vmatprep.subr.mxu0 0.0
  %1621 = vmatpush1.msra.mxu0 0.0
  %1622 = vmatprep.subr.mxu0 0.0
  %1623 = vmatpush1.msra.mxu0 0.0
  %1624 = vmatprep.subr.mxu0 0.0
  %1625 = vmatpush1.msra.mxu0 0.0
  %1626 = vmatprep.subr.mxu0 0.0
  %1627 = vmatpush1.msra.mxu0 0.0
  %1628 = vmatprep.subr.mxu0 0.0
  %1629 = vmatpush1.msra.mxu0 0.0
  %1630 = vmatprep.subr.mxu0 0.0
  %1631 = vmatpush1.msra.mxu0 0.0
  %1632 = vmatprep.mubr.f32.mxu0 0.0
  %1633 = vmatmul.mubr.f32.gmra.mrb[0].mxu0 %v1554
  %v1634 = vpop.f32.mrb[0].mxu0
  %v1635 = vadd.f32 0.0, %v1634
  %v1636 = vpop.f32.mrb[0].mxu0
  %1637 = vmatprep.mubr.f32.mxu0 0.0
  %1638 = vmatmul.mubr.f32.gmra.mrb[0].mxu0 %v1557
  %v1639 = vpop.f32.mrb[0].mxu0
  %v1640 = vadd.f32 0.0, %v1639
  %v1641 = vpop.f32.mrb[0].mxu0
  %1642 = vmatprep.mubr.f32.mxu0 0.0
  %1643 = vmatmul.mubr.f32.gmra.mrb[0].mxu0 %v1560
  %v1644 = vpop.f32.mrb[0].mxu0
  %v1645 = vadd.f32 0.0, %v1644
  %v1646 = vpop.f32.mrb[0].mxu0
  %1647 = vmatprep.mubr.f32.mxu0 0.0
  %1648 = vmatmul.mubr.f32.gmra.mrb[0].mxu0 %v1563
  %v1649 = vpop.f32.mrb[0].mxu0
  %v1650 = vadd.f32 0.0, %v1649
  %v1651 = vpop.f32.mrb[0].mxu0
  %1652 = vdwg.mxu0
  %1653 = vxpose.xlu0.b32.start [1/16] %v121, 128
  %1654 = vxpose.xlu0.b32.cont [2/16] 0.0, 128
  %1655 = vxpose.xlu0.b32.cont [3/16] 0.0, 128
  %1656 = vxpose.xlu0.b32.cont [4/16] 0.0, 128
  %1657 = vxpose.xlu0.b32.cont [5/16] 0.0, 128
  %1658 = vxpose.xlu0.b32.cont [6/16] 0.0, 128
  %1659 = vxpose.xlu0.b32.cont [7/16] 0.0, 128
  %1660 = vxpose.xlu0.b32.cont [8/16] 0.0, 128
  %1661 = vxpose.xlu0.b32.cont [9/16] 0.0, 128
  %1662 = vxpose.xlu0.b32.cont [10/16] 0.0, 128
  %1663 = vxpose.xlu0.b32.cont [11/16] 0.0, 128
  %1664 = vxpose.xlu0.b32.cont [12/16] 0.0, 128
  %1665 = vxpose.xlu0.b32.cont [13/16] 0.0, 128
  %1666 = vxpose.xlu0.b32.cont [14/16] 0.0, 128
  %1667 = vxpose.xlu0.b32.cont [15/16] 0.0, 128
  %1668 = vxpose.xlu0.b32.end [16/16] 0.0, 128
  %v1669 = vpop.trf.xlu0
  %v1670 = vpop.trf.xlu0
  %v1671 = vpop.trf.xlu0
  %v1672 = vpop.trf.xlu0
  %v1673 = vpop.trf.xlu0
  %v1674 = vpop.trf.xlu0
  %v1675 = vpop.trf.xlu0
  %v1676 = vpop.trf.xlu0
  %v1677 = vpop.trf.xlu0
  %v1678 = vpop.trf.xlu0
  %v1679 = vpop.trf.xlu0
  %v1680 = vpop.trf.xlu0
  %v1681 = vpop.trf.xlu0
  %v1682 = vpop.trf.xlu0
  %v1683 = vpop.trf.xlu0
  %v1684 = vpop.trf.xlu0
  %v1686 = vsel %vm1155, %v1669, 0
  %v1689 = vsel %vm1155, %v1670, 0
  %v1692 = vsel %vm1155, %v1671, 0
  %v1695 = vsel %vm1155, %v1672, 0
  %v1698 = vsel %vm1168, %v1121, 0
  %1700 = vmatprep.subr.mxu0 0.0
  %1701 = vmatpush1.msra.mxu0 %v1698
  %1702 = vmatprep.subr.mxu0 0.0
  %1703 = vmatpush1.msra.mxu0 0.0
  %1704 = vmatprep.subr.mxu0 0.0
  %1705 = vmatpush1.msra.mxu0 0.0
  %1706 = vmatprep.subr.mxu0 0.0
  %1707 = vmatpush1.msra.mxu0 0.0
  %1708 = vmatprep.subr.mxu0 0.0
  %1709 = vmatpush1.msra.mxu0 0.0
  %1710 = vmatprep.subr.mxu0 0.0
  %1711 = vmatpush1.msra.mxu0 0.0
  %1712 = vmatprep.subr.mxu0 0.0
  %1713 = vmatpush1.msra.mxu0 0.0
  %1714 = vmatprep.subr.mxu0 0.0
  %1715 = vmatpush1.msra.mxu0 0.0
  %1716 = vmatprep.subr.mxu0 0.0
  %1717 = vmatpush1.msra.mxu0 0.0
  %1718 = vmatprep.subr.mxu0 0.0
  %1719 = vmatpush1.msra.mxu0 0.0
  %1720 = vmatprep.subr.mxu0 0.0
  %1721 = vmatpush1.msra.mxu0 0.0
  %1722 = vmatprep.subr.mxu0 0.0
  %1723 = vmatpush1.msra.mxu0 0.0
  %1724 = vmatprep.subr.mxu0 0.0
  %1725 = vmatpush1.msra.mxu0 0.0
  %1726 = vmatprep.subr.mxu0 0.0
  %1727 = vmatpush1.msra.mxu0 0.0
  %1728 = vmatprep.subr.mxu0 0.0
  %1729 = vmatpush1.msra.mxu0 0.0
  %1730 = vmatprep.subr.mxu0 0.0
  %1731 = vmatpush1.msra.mxu0 0.0
  %1732 = vmatprep.subr.mxu0 0.0
  %1733 = vmatpush1.msra.mxu0 0.0
  %1734 = vmatprep.subr.mxu0 0.0
  %1735 = vmatpush1.msra.mxu0 0.0
  %1736 = vmatprep.subr.mxu0 0.0
  %1737 = vmatpush1.msra.mxu0 0.0
  %1738 = vmatprep.subr.mxu0 0.0
  %1739 = vmatpush1.msra.mxu0 0.0
  %1740 = vmatprep.subr.mxu0 0.0
  %1741 = vmatpush1.msra.mxu0 0.0
  %1742 = vmatprep.subr.mxu0 0.0
  %1743 = vmatpush1.msra.mxu0 0.0
  %1744 = vmatprep.subr.mxu0 0.0
  %1745 = vmatpush1.msra.mxu0 0.0
  %1746 = vmatprep.subr.mxu0 0.0
  %1747 = vmatpush1.msra.mxu0 0.0
  %1748 = vmatprep.subr.mxu0 0.0
  %1749 = vmatpush1.msra.mxu0 0.0
  %1750 = vmatprep.subr.mxu0 0.0
  %1751 = vmatpush1.msra.mxu0 0.0
  %1752 = vmatprep.subr.mxu0 0.0
  %1753 = vmatpush1.msra.mxu0 0.0
  %1754 = vmatprep.subr.mxu0 0.0
  %1755 = vmatpush1.msra.mxu0 0.0
  %1756 = vmatprep.subr.mxu0 0.0
  %1757 = vmatpush1.msra.mxu0 0.0
  %1758 = vmatprep.subr.mxu0 0.0
  %1759 = vmatpush1.msra.mxu0 0.0
  %1760 = vmatprep.subr.mxu0 0.0
  %1761 = vmatpush1.msra.mxu0 0.0
  %1762 = vmatprep.subr.mxu0 0.0
  %1763 = vmatpush1.msra.mxu0 0.0
  %1764 = vmatprep.mubr.f32.mxu0 0.0
  %1765 = vmatmul.mubr.f32.gmra.mrb[0].mxu0 %v1686
  %v1766 = vpop.f32.mrb[0].mxu0
  %v1767 = vadd.f32 0.0, %v1766
  %v1768 = vpop.f32.mrb[0].mxu0
  %1769 = vmatprep.mubr.f32.mxu0 0.0
  %1770 = vmatmul.mubr.f32.gmra.mrb[0].mxu0 %v1689
  %v1771 = vpop.f32.mrb[0].mxu0
  %v1772 = vadd.f32 0.0, %v1771
  %v1773 = vpop.f32.mrb[0].mxu0
  %1774 = vmatprep.mubr.f32.mxu0 0.0
  %1775 = vmatmul.mubr.f32.gmra.mrb[0].mxu0 %v1692
  %v1776 = vpop.f32.mrb[0].mxu0
  %v1777 = vadd.f32 0.0, %v1776
  %v1778 = vpop.f32.mrb[0].mxu0
  %1779 = vmatprep.mubr.f32.mxu0 0.0
  %1780 = vmatmul.mubr.f32.gmra.mrb[0].mxu0 %v1695
  %v1781 = vpop.f32.mrb[0].mxu0
  %v1782 = vadd.f32 0.0, %v1781
  %v1783 = vpop.f32.mrb[0].mxu0
  %1784 = vdwg.mxu0
  %1785 = vxpose.xlu0.b32.start [1/16] %v129, 128
  %1786 = vxpose.xlu0.b32.cont [2/16] 0.0, 128
  %1787 = vxpose.xlu0.b32.cont [3/16] 0.0, 128
  %1788 = vxpose.xlu0.b32.cont [4/16] 0.0, 128
  %1789 = vxpose.xlu0.b32.cont [5/16] 0.0, 128
  %1790 = vxpose.xlu0.b32.cont [6/16] 0.0, 128
  %1791 = vxpose.xlu0.b32.cont [7/16] 0.0, 128
  %1792 = vxpose.xlu0.b32.cont [8/16] 0.0, 128
  %1793 = vxpose.xlu0.b32.cont [9/16] 0.0, 128
  %1794 = vxpose.xlu0.b32.cont [10/16] 0.0, 128
  %1795 = vxpose.xlu0.b32.cont [11/16] 0.0, 128
  %1796 = vxpose.xlu0.b32.cont [12/16] 0.0, 128
  %1797 = vxpose.xlu0.b32.cont [13/16] 0.0, 128
  %1798 = vxpose.xlu0.b32.cont [14/16] 0.0, 128
  %1799 = vxpose.xlu0.b32.cont [15/16] 0.0, 128
  %1800 = vxpose.xlu0.b32.end [16/16] 0.0, 128
  %v1801 = vpop.trf.xlu0
  %v1802 = vpop.trf.xlu0
  %v1803 = vpop.trf.xlu0
  %v1804 = vpop.trf.xlu0
  %v1805 = vpop.trf.xlu0
  %v1806 = vpop.trf.xlu0
  %v1807 = vpop.trf.xlu0
  %v1808 = vpop.trf.xlu0
  %v1809 = vpop.trf.xlu0
  %v1810 = vpop.trf.xlu0
  %v1811 = vpop.trf.xlu0
  %v1812 = vpop.trf.xlu0
  %v1813 = vpop.trf.xlu0
  %v1814 = vpop.trf.xlu0
  %v1815 = vpop.trf.xlu0
  %v1816 = vpop.trf.xlu0
  %v1818 = vsel %vm1155, %v1801, 0
  %v1821 = vsel %vm1155, %v1802, 0
  %v1824 = vsel %vm1155, %v1803, 0
  %v1827 = vsel %vm1155, %v1804, 0
  %v1830 = vsel %vm1168, %v1122, 0
  %1832 = vmatprep.subr.mxu0 0.0
  %1833 = vmatpush1.msra.mxu0 %v1830
  %1834 = vmatprep.subr.mxu0 0.0
  %1835 = vmatpush1.msra.mxu0 0.0
  %1836 = vmatprep.subr.mxu0 0.0
  %1837 = vmatpush1.msra.mxu0 0.0
  %1838 = vmatprep.subr.mxu0 0.0
  %1839 = vmatpush1.msra.mxu0 0.0
  %1840 = vmatprep.subr.mxu0 0.0
  %1841 = vmatpush1.msra.mxu0 0.0
  %1842 = vmatprep.subr.mxu0 0.0
  %1843 = vmatpush1.msra.mxu0 0.0
  %1844 = vmatprep.subr.mxu0 0.0
  %1845 = vmatpush1.msra.mxu0 0.0
  %1846 = vmatprep.subr.mxu0 0.0
  %1847 = vmatpush1.msra.mxu0 0.0
  %1848 = vmatprep.subr.mxu0 0.0
  %1849 = vmatpush1.msra.mxu0 0.0
  %1850 = vmatprep.subr.mxu0 0.0
  %1851 = vmatpush1.msra.mxu0 0.0
  %1852 = vmatprep.subr.mxu0 0.0
  %1853 = vmatpush1.msra.mxu0 0.0
  %1854 = vmatprep.subr.mxu0 0.0
  %1855 = vmatpush1.msra.mxu0 0.0
  %1856 = vmatprep.subr.mxu0 0.0
  %1857 = vmatpush1.msra.mxu0 0.0
  %1858 = vmatprep.subr.mxu0 0.0
  %1859 = vmatpush1.msra.mxu0 0.0
  %1860 = vmatprep.subr.mxu0 0.0
  %1861 = vmatpush1.msra.mxu0 0.0
  %1862 = vmatprep.subr.mxu0 0.0
  %1863 = vmatpush1.msra.mxu0 0.0
  %1864 = vmatprep.subr.mxu0 0.0
  %1865 = vmatpush1.msra.mxu0 0.0
  %1866 = vmatprep.subr.mxu0 0.0
  %1867 = vmatpush1.msra.mxu0 0.0
  %1868 = vmatprep.subr.mxu0 0.0
  %1869 = vmatpush1.msra.mxu0 0.0
  %1870 = vmatprep.subr.mxu0 0.0
  %1871 = vmatpush1.msra.mxu0 0.0
  %1872 = vmatprep.subr.mxu0 0.0
  %1873 = vmatpush1.msra.mxu0 0.0
  %1874 = vmatprep.subr.mxu0 0.0
  %1875 = vmatpush1.msra.mxu0 0.0
  %1876 = vmatprep.subr.mxu0 0.0
  %1877 = vmatpush1.msra.mxu0 0.0
  %1878 = vmatprep.subr.mxu0 0.0
  %1879 = vmatpush1.msra.mxu0 0.0
  %1880 = vmatprep.subr.mxu0 0.0
  %1881 = vmatpush1.msra.mxu0 0.0
  %1882 = vmatprep.subr.mxu0 0.0
  %1883 = vmatpush1.msra.mxu0 0.0
  %1884 = vmatprep.subr.mxu0 0.0
  %1885 = vmatpush1.msra.mxu0 0.0
  %1886 = vmatprep.subr.mxu0 0.0
  %1887 = vmatpush1.msra.mxu0 0.0
  %1888 = vmatprep.subr.mxu0 0.0
  %1889 = vmatpush1.msra.mxu0 0.0
  %1890 = vmatprep.subr.mxu0 0.0
  %1891 = vmatpush1.msra.mxu0 0.0
  %1892 = vmatprep.subr.mxu0 0.0
  %1893 = vmatpush1.msra.mxu0 0.0
  %1894 = vmatprep.subr.mxu0 0.0
  %1895 = vmatpush1.msra.mxu0 0.0
  %1896 = vmatprep.mubr.f32.mxu0 0.0
  %1897 = vmatmul.mubr.f32.gmra.mrb[0].mxu0 %v1818
  %v1898 = vpop.f32.mrb[0].mxu0
  %v1899 = vadd.f32 0.0, %v1898
  %v1900 = vpop.f32.mrb[0].mxu0
  %1901 = vmatprep.mubr.f32.mxu0 0.0
  %1902 = vmatmul.mubr.f32.gmra.mrb[0].mxu0 %v1821
  %v1903 = vpop.f32.mrb[0].mxu0
  %v1904 = vadd.f32 0.0, %v1903
  %v1905 = vpop.f32.mrb[0].mxu0
  %1906 = vmatprep.mubr.f32.mxu0 0.0
  %1907 = vmatmul.mubr.f32.gmra.mrb[0].mxu0 %v1824
  %v1908 = vpop.f32.mrb[0].mxu0
  %v1909 = vadd.f32 0.0, %v1908
  %v1910 = vpop.f32.mrb[0].mxu0
  %1911 = vmatprep.mubr.f32.mxu0 0.0
  %1912 = vmatmul.mubr.f32.gmra.mrb[0].mxu0 %v1827
  %v1913 = vpop.f32.mrb[0].mxu0
  %v1914 = vadd.f32 0.0, %v1913
  %v1915 = vpop.f32.mrb[0].mxu0
  %1916 = vdwg.mxu0
  %vm1917 = vcmp.ne.f32.partialorder %v1239, %v1239
  %vm1918 = vcmp.ne.f32.partialorder %v1244, %v1244
  %vm1919 = vcmp.ne.f32.partialorder %v1249, %v1249
  %vm1920 = vcmp.ne.f32.partialorder %v1254, %v1254
  %vm1921 = vcmp.ne.f32.partialorder %v1371, %v1371
  %vm1922 = vcmp.ne.f32.partialorder %v1376, %v1376
  %vm1923 = vcmp.ne.f32.partialorder %v1381, %v1381
  %vm1924 = vcmp.ne.f32.partialorder %v1386, %v1386
  %vm1925 = vcmp.ne.f32.partialorder %v1503, %v1503
  %vm1926 = vcmp.ne.f32.partialorder %v1508, %v1508
  %vm1927 = vcmp.ne.f32.partialorder %v1513, %v1513
  %vm1928 = vcmp.ne.f32.partialorder %v1518, %v1518
  %vm1929 = vcmp.ne.f32.partialorder %v1635, %v1635
  %vm1930 = vcmp.ne.f32.partialorder %v1640, %v1640
  %vm1931 = vcmp.ne.f32.partialorder %v1645, %v1645
  %vm1932 = vcmp.ne.f32.partialorder %v1650, %v1650
  %vm1933 = vcmp.ne.f32.partialorder %v1767, %v1767
  %vm1934 = vcmp.ne.f32.partialorder %v1772, %v1772
  %vm1935 = vcmp.ne.f32.partialorder %v1777, %v1777
  %vm1936 = vcmp.ne.f32.partialorder %v1782, %v1782
  %vm1937 = vcmp.ne.f32.partialorder %v1899, %v1899
  %vm1938 = vcmp.ne.f32.partialorder %v1904, %v1904
  %vm1939 = vcmp.ne.f32.partialorder %v1909, %v1909
  %vm1940 = vcmp.ne.f32.partialorder %v1914, %v1914
  %v1941 = vsel %vm1917, 1.0, 0.0
  %v1942 = vsel %vm1918, 1.0, 0.0
  %v1943 = vsel %vm1919, 1.0, 0.0
  %v1944 = vsel %vm1920, 1.0, 0.0
  %v1945 = vsel %vm1921, 1.0, 0.0
  %v1946 = vsel %vm1922, 1.0, 0.0
  %v1947 = vsel %vm1923, 1.0, 0.0
  %v1948 = vsel %vm1924, 1.0, 0.0
  %v1949 = vsel %vm1925, 1.0, 0.0
  %v1950 = vsel %vm1926, 1.0, 0.0
  %v1951 = vsel %vm1927, 1.0, 0.0
  %v1952 = vsel %vm1928, 1.0, 0.0
  %v1953 = vsel %vm1929, 1.0, 0.0
  %v1954 = vsel %vm1930, 1.0, 0.0
  %v1955 = vsel %vm1931, 1.0, 0.0
  %v1956 = vsel %vm1932, 1.0, 0.0
  %v1957 = vsel %vm1933, 1.0, 0.0
  %v1958 = vsel %vm1934, 1.0, 0.0
  %v1959 = vsel %vm1935, 1.0, 0.0
  %v1960 = vsel %vm1936, 1.0, 0.0
  %v1961 = vsel %vm1937, 1.0, 0.0
  %v1962 = vsel %vm1938, 1.0, 0.0
  %v1963 = vsel %vm1939, 1.0, 0.0
  %v1964 = vsel %vm1940, 1.0, 0.0
  %v1965 = vsel %vm133, %v1941, -inf
  %1966 = vmax.xlane.f32.xlu0 %v1965
  %v1967 = vpop.xlane.xlu0 %1966
  %v1968 = vsel %vm133, %v1942, -inf
  %1969 = vmax.xlane.f32.xlu0 %v1968
  %v1970 = vpop.xlane.xlu0 %1969
  %v1971 = vsel %vm133, %v1943, -inf
  %1972 = vmax.xlane.f32.xlu0 %v1971
  %v1973 = vpop.xlane.xlu0 %1972
  %v1974 = vsel %vm133, %v1944, -inf
  %1975 = vmax.xlane.f32.xlu0 %v1974
  %v1976 = vpop.xlane.xlu0 %1975
  %v1977 = vsel %vm133, %v1945, -inf
  %1978 = vmax.xlane.f32.xlu0 %v1977
  %v1979 = vpop.xlane.xlu0 %1978
  %v1980 = vsel %vm133, %v1946, -inf
  %1981 = vmax.xlane.f32.xlu0 %v1980
  %v1982 = vpop.xlane.xlu0 %1981
  %v1983 = vsel %vm133, %v1947, -inf
  %1984 = vmax.xlane.f32.xlu0 %v1983
  %v1985 = vpop.xlane.xlu0 %1984
  %v1986 = vsel %vm133, %v1948, -inf
  %1987 = vmax.xlane.f32.xlu0 %v1986
  %v1988 = vpop.xlane.xlu0 %1987
  %v1989 = vsel %vm133, %v1949, -inf
  %1990 = vmax.xlane.f32.xlu0 %v1989
  %v1991 = vpop.xlane.xlu0 %1990
  %v1992 = vsel %vm133, %v1950, -inf
  %1993 = vmax.xlane.f32.xlu0 %v1992
  %v1994 = vpop.xlane.xlu0 %1993
  %v1995 = vsel %vm133, %v1951, -inf
  %1996 = vmax.xlane.f32.xlu0 %v1995
  %v1997 = vpop.xlane.xlu0 %1996
  %v1998 = vsel %vm133, %v1952, -inf
  %1999 = vmax.xlane.f32.xlu0 %v1998
  %v2000 = vpop.xlane.xlu0 %1999
  %v2001 = vsel %vm133, %v1953, -inf
  %2002 = vmax.xlane.f32.xlu0 %v2001
  %v2003 = vpop.xlane.xlu0 %2002
  %v2004 = vsel %vm133, %v1954, -inf
  %2005 = vmax.xlane.f32.xlu0 %v2004
  %v2006 = vpop.xlane.xlu0 %2005
  %v2007 = vsel %vm133, %v1955, -inf
  %2008 = vmax.xlane.f32.xlu0 %v2007
  %v2009 = vpop.xlane.xlu0 %2008
  %v2010 = vsel %vm133, %v1956, -inf
  %2011 = vmax.xlane.f32.xlu0 %v2010
  %v2012 = vpop.xlane.xlu0 %2011
  %v2013 = vsel %vm133, %v1957, -inf
  %2014 = vmax.xlane.f32.xlu0 %v2013
  %v2015 = vpop.xlane.xlu0 %2014
  %v2016 = vsel %vm133, %v1958, -inf
  %2017 = vmax.xlane.f32.xlu0 %v2016
  %v2018 = vpop.xlane.xlu0 %2017
  %v2019 = vsel %vm133, %v1959, -inf
  %2020 = vmax.xlane.f32.xlu0 %v2019
  %v2021 = vpop.xlane.xlu0 %2020
  %v2022 = vsel %vm133, %v1960, -inf
  %2023 = vmax.xlane.f32.xlu0 %v2022
  %v2024 = vpop.xlane.xlu0 %2023
  %v2025 = vsel %vm133, %v1961, -inf
  %2026 = vmax.xlane.f32.xlu0 %v2025
  %v2027 = vpop.xlane.xlu0 %2026
  %v2028 = vsel %vm133, %v1962, -inf
  %2029 = vmax.xlane.f32.xlu0 %v2028
  %v2030 = vpop.xlane.xlu0 %2029
  %v2031 = vsel %vm133, %v1963, -inf
  %2032 = vmax.xlane.f32.xlu0 %v2031
  %v2033 = vpop.xlane.xlu0 %2032
  %v2034 = vsel %vm133, %v1964, -inf
  %2035 = vmax.xlane.f32.xlu0 %v2034
  %v2036 = vpop.xlane.xlu0 %2035
  %v2037 = vmax.f32 %v1967, %v1970
  %v2038 = vmax.f32 %v2037, %v1973
  %v2039 = vmax.f32 %v2038, %v1976
  %v2040 = vrot.slane %v2039, 4
  %v2041 = vmax.f32 %v2039, %v2040
  %v2042 = vrot.slane %v2041, 2
  %v2043 = vmax.f32 %v2041, %v2042
  %v2044 = vrot.slane %v2043, 1
  %v2045 = vmax.f32 %v2043, %v2044
  %v2046 = vmax.f32 %v1979, %v1982
  %v2047 = vmax.f32 %v2046, %v1985
  %v2048 = vmax.f32 %v2047, %v1988
  %v2049 = vrot.slane %v2048, 4
  %v2050 = vmax.f32 %v2048, %v2049
  %v2051 = vrot.slane %v2050, 2
  %v2052 = vmax.f32 %v2050, %v2051
  %v2053 = vrot.slane %v2052, 1
  %v2054 = vmax.f32 %v2052, %v2053
  %v2055 = vmax.f32 %v1991, %v1994
  %v2056 = vmax.f32 %v2055, %v1997
  %v2057 = vmax.f32 %v2056, %v2000
  %v2058 = vrot.slane %v2057, 4
  %v2059 = vmax.f32 %v2057, %v2058
  %v2060 = vrot.slane %v2059, 2
  %v2061 = vmax.f32 %v2059, %v2060
  %v2062 = vrot.slane %v2061, 1
  %v2063 = vmax.f32 %v2061, %v2062
  %v2064 = vmax.f32 %v2003, %v2006
  %v2065 = vmax.f32 %v2064, %v2009
  %v2066 = vmax.f32 %v2065, %v2012
  %v2067 = vrot.slane %v2066, 4
  %v2068 = vmax.f32 %v2066, %v2067
  %v2069 = vrot.slane %v2068, 2
  %v2070 = vmax.f32 %v2068, %v2069
  %v2071 = vrot.slane %v2070, 1
  %v2072 = vmax.f32 %v2070, %v2071
  %v2073 = vmax.f32 %v2015, %v2018
  %v2074 = vmax.f32 %v2073, %v2021
  %v2075 = vmax.f32 %v2074, %v2024
  %v2076 = vrot.slane %v2075, 4
  %v2077 = vmax.f32 %v2075, %v2076
  %v2078 = vrot.slane %v2077, 2
  %v2079 = vmax.f32 %v2077, %v2078
  %v2080 = vrot.slane %v2079, 1
  %v2081 = vmax.f32 %v2079, %v2080
  %v2082 = vmax.f32 %v2027, %v2030
  %v2083 = vmax.f32 %v2082, %v2033
  %v2084 = vmax.f32 %v2083, %v2036
  %v2085 = vrot.slane %v2084, 4
  %v2086 = vmax.f32 %v2084, %v2085
  %v2087 = vrot.slane %v2086, 2
  %v2088 = vmax.f32 %v2086, %v2087
  %v2089 = vrot.slane %v2088, 1
  %v2090 = vmax.f32 %v2088, %v2089
  %vm2091 = vcmp.gt.f32.partialorder %v2045, 0.0
  %vm2092 = vcmp.gt.f32.partialorder %v2054, 0.0
  %vm2093 = vcmp.gt.f32.partialorder %v2063, 0.0
  %vm2094 = vcmp.gt.f32.partialorder %v2072, 0.0
  %vm2095 = vcmp.gt.f32.partialorder %v2081, 0.0
  %vm2096 = vcmp.gt.f32.partialorder %v2090, 0.0
  %v2097 = vadd.s32 %v567, 8
  %v2098 = vadd.s32 %v567, 16
  %v2099 = vadd.s32 %v567, 24
  %v2100 = vlaneseq
  %v2101 = vand.u32 %v2100, 127
  %vm2102 = vcmp.eq.s32.totalorder %v567, %v2101
  %vm2103 = vcmp.eq.s32.totalorder %v2097, %v2101
  %vm2104 = vcmp.eq.s32.totalorder %v2098, %v2101
  %vm2105 = vcmp.eq.s32.totalorder %v2099, %v2101
  %v2106 = vsel %vm2102, 1, 0
  %v2107 = vsel %vm2103, 1, 0
  %v2108 = vsel %vm2104, 1, 0
  %v2109 = vsel %vm2105, 1, 0
  %v2110 = vcvt.s32.f32 %v2106
  %v2111 = vcvt.s32.f32 %v2107
  %v2112 = vcvt.s32.f32 %v2108
  %v2113 = vcvt.s32.f32 %v2109
  %v2114 = vsel %vm2091, 1, 0
  %v2115 = vsel %vm2092, 1, 0
  %v2116 = vsel %vm2093, 1, 0
  %v2117 = vsel %vm2094, 1, 0
  %v2118 = vsel %vm2095, 1, 0
  %v2119 = vsel %vm2096, 1, 0
  %vm2120 = vcmp.eq.s32.totalorder %v2114, 1
  %vm2121 = vcmp.eq.s32.totalorder %v2115, 1
  %vm2122 = vcmp.eq.s32.totalorder %v2116, 1
  %vm2123 = vcmp.eq.s32.totalorder %v2117, 1
  %vm2124 = vcmp.eq.s32.totalorder %v2118, 1
  %vm2125 = vcmp.eq.s32.totalorder %v2119, 1
  %v2126 = vsel %vm2120, %v2110, %v1239
  %v2127 = vsel %vm2120, %v2111, %v1244
  %v2128 = vsel %vm2120, %v2112, %v1249
  %v2129 = vsel %vm2120, %v2113, %v1254
  %v2130 = vsel %vm2121, %v2110, %v1371
  %v2131 = vsel %vm2121, %v2111, %v1376
  %v2132 = vsel %vm2121, %v2112, %v1381
  %v2133 = vsel %vm2121, %v2113, %v1386
  %v2134 = vsel %vm2122, %v2110, %v1503
  %v2135 = vsel %vm2122, %v2111, %v1508
  %v2136 = vsel %vm2122, %v2112, %v1513
  %v2137 = vsel %vm2122, %v2113, %v1518
  %v2138 = vsel %vm2123, %v2110, %v1635
  %v2139 = vsel %vm2123, %v2111, %v1640
  %v2140 = vsel %vm2123, %v2112, %v1645
  %v2141 = vsel %vm2123, %v2113, %v1650
  %v2142 = vsel %vm2124, %v2110, %v1767
  %v2143 = vsel %vm2124, %v2111, %v1772
  %v2144 = vsel %vm2124, %v2112, %v1777
  %v2145 = vsel %vm2124, %v2113, %v1782
  %v2146 = vsel %vm2125, %v2110, %v1899
  %v2147 = vsel %vm2125, %v2111, %v1904
  %v2148 = vsel %vm2125, %v2112, %v1909
  %v2149 = vsel %vm2125, %v2113, %v1914
  %v2150 = vrot.slane %v111, 5
  %v2151 = vrot.slane %v2150, 4
  %v2152 = vrot.slane %v127, 5
  %v2153 = vrot.slane %v2152, 4
  %v2154 = vrot.slane %v116, 5
  %v2155 = vrot.slane %v2154, 4
  %v2156 = vrot.slane %v128, 5
  %v2157 = vrot.slane %v2156, 4
  %v2158 = vrot.slane %v121, 5
  %v2159 = vrot.slane %v2158, 4
  %v2160 = vrot.slane %v129, 5
  %v2161 = vrot.slane %v2160, 4
  %v2168 = vsel %vm2120, %v111, %v2151
  %v2169 = vsel %vm2121, %v127, %v2153
  %v2170 = vsel %vm2122, %v116, %v2155
  %v2171 = vsel %vm2123, %v128, %v2157
  %v2172 = vsel %vm2124, %v121, %v2159
  %v2173 = vsel %vm2125, %v129, %v2161
  %v2180 = vrot.slane %v2168, 7
  %v2181 = vrot.slane %v2169, 7
  %v2182 = vrot.slane %v2170, 7
  %v2183 = vrot.slane %v2171, 7
  %v2184 = vrot.slane %v2172, 7
  %v2185 = vrot.slane %v2173, 7
  %vm2192 = vcmask 1040384
  %v2193 = vsel %vm2192, %v111, %v2180
  %v2194 = vsel %vm2192, %v127, %v2181
  %v2195 = vsel %vm2192, %v116, %v2182
  %v2196 = vsel %vm2192, %v128, %v2183
  %v2197 = vsel %vm2192, %v121, %v2184
  %v2198 = vsel %vm2192, %v129, %v2185
  %v2199 = vlaneseq
  %v2200 = vshrl.u32 %v2199, 7
  %v2201 = vsub.s32 3, %v2200
  %v2202 = vrot.slane %v111, %v2201
  %v2203 = vsel %vm133, %v2202, 0
  %2205 = vmatprep.subr.mxu0 0.0
  %2206 = vmatpush1.msra.mxu0 %v2126
  %2207 = vmatprep.subr.mxu0 0.0
  %2208 = vmatpush1.msra.mxu0 %v2127
  %2209 = vmatprep.subr.mxu0 0.0
  %2210 = vmatpush1.msra.mxu0 %v2128
  %2211 = vmatprep.subr.mxu0 0.0
  %2212 = vmatpush1.msra.mxu0 %v2129
  %2213 = vmatprep.subr.mxu0 0.0
  %2214 = vmatpush1.msra.mxu0 0.0
  %2215 = vmatprep.subr.mxu0 0.0
  %2216 = vmatpush1.msra.mxu0 0.0
  %2217 = vmatprep.subr.mxu0 0.0
  %2218 = vmatpush1.msra.mxu0 0.0
  %2219 = vmatprep.subr.mxu0 0.0
  %2220 = vmatpush1.msra.mxu0 0.0
  %2221 = vmatprep.subr.mxu0 0.0
  %2222 = vmatpush1.msra.mxu0 0.0
  %2223 = vmatprep.subr.mxu0 0.0
  %2224 = vmatpush1.msra.mxu0 0.0
  %2225 = vmatprep.subr.mxu0 0.0
  %2226 = vmatpush1.msra.mxu0 0.0
  %2227 = vmatprep.subr.mxu0 0.0
  %2228 = vmatpush1.msra.mxu0 0.0
  %2229 = vmatprep.subr.mxu0 0.0
  %2230 = vmatpush1.msra.mxu0 0.0
  %2231 = vmatprep.subr.mxu0 0.0
  %2232 = vmatpush1.msra.mxu0 0.0
  %2233 = vmatprep.subr.mxu0 0.0
  %2234 = vmatpush1.msra.mxu0 0.0
  %2235 = vmatprep.subr.mxu0 0.0
  %2236 = vmatpush1.msra.mxu0 0.0
  %2237 = vmatprep.subr.mxu0 0.0
  %2238 = vmatpush1.msra.mxu0 0.0
  %2239 = vmatprep.subr.mxu0 0.0
  %2240 = vmatpush1.msra.mxu0 0.0
  %2241 = vmatprep.subr.mxu0 0.0
  %2242 = vmatpush1.msra.mxu0 0.0
  %2243 = vmatprep.subr.mxu0 0.0
  %2244 = vmatpush1.msra.mxu0 0.0
  %2245 = vmatprep.subr.mxu0 0.0
  %2246 = vmatpush1.msra.mxu0 0.0
  %2247 = vmatprep.subr.mxu0 0.0
  %2248 = vmatpush1.msra.mxu0 0.0
  %2249 = vmatprep.subr.mxu0 0.0
  %2250 = vmatpush1.msra.mxu0 0.0
  %2251 = vmatprep.subr.mxu0 0.0
  %2252 = vmatpush1.msra.mxu0 0.0
  %2253 = vmatprep.subr.mxu0 0.0
  %2254 = vmatpush1.msra.mxu0 0.0
  %2255 = vmatprep.subr.mxu0 0.0
  %2256 = vmatpush1.msra.mxu0 0.0
  %2257 = vmatprep.subr.mxu0 0.0
  %2258 = vmatpush1.msra.mxu0 0.0
  %2259 = vmatprep.subr.mxu0 0.0
  %2260 = vmatpush1.msra.mxu0 0.0
  %2261 = vmatprep.subr.mxu0 0.0
  %2262 = vmatpush1.msra.mxu0 0.0
  %2263 = vmatprep.subr.mxu0 0.0
  %2264 = vmatpush1.msra.mxu0 0.0
  %2265 = vmatprep.subr.mxu0 0.0
  %2266 = vmatpush1.msra.mxu0 0.0
  %2267 = vmatprep.subr.mxu0 0.0
  %2268 = vmatpush1.msra.mxu0 0.0
  %2269 = vmatprep.mubr.f32.mxu0 0.0
  %2270 = vmatmul.mubr.f32.gmra.mrb[0].mxu0 %v2203
  %v2271 = vpop.f32.mrb[0].mxu0
  %v2272 = vadd.f32 0.0, %v2271
  %v2273 = vpop.f32.mrb[0].mxu0
  %2274 = vdwg.mxu0
  %v2275 = vlaneseq
  %v2276 = vshrl.u32 %v2275, 7
  %v2277 = vsub.s32 3, %v2276
  %v2278 = vrot.slane %v127, %v2277
  %v2279 = vsel %vm133, %v2278, 0
  %2281 = vmatprep.subr.mxu0 0.0
  %2282 = vmatpush1.msra.mxu0 %v2130
  %2283 = vmatprep.subr.mxu0 0.0
  %2284 = vmatpush1.msra.mxu0 %v2131
  %2285 = vmatprep.subr.mxu0 0.0
  %2286 = vmatpush1.msra.mxu0 %v2132
  %2287 = vmatprep.subr.mxu0 0.0
  %2288 = vmatpush1.msra.mxu0 %v2133
  %2289 = vmatprep.subr.mxu0 0.0
  %2290 = vmatpush1.msra.mxu0 0.0
  %2291 = vmatprep.subr.mxu0 0.0
  %2292 = vmatpush1.msra.mxu0 0.0
  %2293 = vmatprep.subr.mxu0 0.0
  %2294 = vmatpush1.msra.mxu0 0.0
  %2295 = vmatprep.subr.mxu0 0.0
  %2296 = vmatpush1.msra.mxu0 0.0
  %2297 = vmatprep.subr.mxu0 0.0
  %2298 = vmatpush1.msra.mxu0 0.0
  %2299 = vmatprep.subr.mxu0 0.0
  %2300 = vmatpush1.msra.mxu0 0.0
  %2301 = vmatprep.subr.mxu0 0.0
  %2302 = vmatpush1.msra.mxu0 0.0
  %2303 = vmatprep.subr.mxu0 0.0
  %2304 = vmatpush1.msra.mxu0 0.0
  %2305 = vmatprep.subr.mxu0 0.0
  %2306 = vmatpush1.msra.mxu0 0.0
  %2307 = vmatprep.subr.mxu0 0.0
  %2308 = vmatpush1.msra.mxu0 0.0
  %2309 = vmatprep.subr.mxu0 0.0
  %2310 = vmatpush1.msra.mxu0 0.0
  %2311 = vmatprep.subr.mxu0 0.0
  %2312 = vmatpush1.msra.mxu0 0.0
  %2313 = vmatprep.subr.mxu0 0.0
  %2314 = vmatpush1.msra.mxu0 0.0
  %2315 = vmatprep.subr.mxu0 0.0
  %2316 = vmatpush1.msra.mxu0 0.0
  %2317 = vmatprep.subr.mxu0 0.0
  %2318 = vmatpush1.msra.mxu0 0.0
  %2319 = vmatprep.subr.mxu0 0.0
  %2320 = vmatpush1.msra.mxu0 0.0
  %2321 = vmatprep.subr.mxu0 0.0
  %2322 = vmatpush1.msra.mxu0 0.0
  %2323 = vmatprep.subr.mxu0 0.0
  %2324 = vmatpush1.msra.mxu0 0.0
  %2325 = vmatprep.subr.mxu0 0.0
  %2326 = vmatpush1.msra.mxu0 0.0
  %2327 = vmatprep.subr.mxu0 0.0
  %2328 = vmatpush1.msra.mxu0 0.0
  %2329 = vmatprep.subr.mxu0 0.0
  %2330 = vmatpush1.msra.mxu0 0.0
  %2331 = vmatprep.subr.mxu0 0.0
  %2332 = vmatpush1.msra.mxu0 0.0
  %2333 = vmatprep.subr.mxu0 0.0
  %2334 = vmatpush1.msra.mxu0 0.0
  %2335 = vmatprep.subr.mxu0 0.0
  %2336 = vmatpush1.msra.mxu0 0.0
  %2337 = vmatprep.subr.mxu0 0.0
  %2338 = vmatpush1.msra.mxu0 0.0
  %2339 = vmatprep.subr.mxu0 0.0
  %2340 = vmatpush1.msra.mxu0 0.0
  %2341 = vmatprep.subr.mxu0 0.0
  %2342 = vmatpush1.msra.mxu0 0.0
  %2343 = vmatprep.subr.mxu0 0.0
  %2344 = vmatpush1.msra.mxu0 0.0
  %2345 = vmatprep.mubr.f32.mxu0 0.0
  %2346 = vmatmul.mubr.f32.gmra.mrb[0].mxu0 %v2279
  %v2347 = vpop.f32.mrb[0].mxu0
  %v2348 = vadd.f32 0.0, %v2347
  %v2349 = vpop.f32.mrb[0].mxu0
  %2350 = vdwg.mxu0
  %v2351 = vlaneseq
  %v2352 = vshrl.u32 %v2351, 7
  %v2353 = vsub.s32 3, %v2352
  %v2354 = vrot.slane %v116, %v2353
  %v2355 = vsel %vm133, %v2354, 0
  %2357 = vmatprep.subr.mxu0 0.0
  %2358 = vmatpush1.msra.mxu0 %v2134
  %2359 = vmatprep.subr.mxu0 0.0
  %2360 = vmatpush1.msra.mxu0 %v2135
  %2361 = vmatprep.subr.mxu0 0.0
  %2362 = vmatpush1.msra.mxu0 %v2136
  %2363 = vmatprep.subr.mxu0 0.0
  %2364 = vmatpush1.msra.mxu0 %v2137
  %2365 = vmatprep.subr.mxu0 0.0
  %2366 = vmatpush1.msra.mxu0 0.0
  %2367 = vmatprep.subr.mxu0 0.0
  %2368 = vmatpush1.msra.mxu0 0.0
  %2369 = vmatprep.subr.mxu0 0.0
  %2370 = vmatpush1.msra.mxu0 0.0
  %2371 = vmatprep.subr.mxu0 0.0
  %2372 = vmatpush1.msra.mxu0 0.0
  %2373 = vmatprep.subr.mxu0 0.0
  %2374 = vmatpush1.msra.mxu0 0.0
  %2375 = vmatprep.subr.mxu0 0.0
  %2376 = vmatpush1.msra.mxu0 0.0
  %2377 = vmatprep.subr.mxu0 0.0
  %2378 = vmatpush1.msra.mxu0 0.0
  %2379 = vmatprep.subr.mxu0 0.0
  %2380 = vmatpush1.msra.mxu0 0.0
  %2381 = vmatprep.subr.mxu0 0.0
  %2382 = vmatpush1.msra.mxu0 0.0
  %2383 = vmatprep.subr.mxu0 0.0
  %2384 = vmatpush1.msra.mxu0 0.0
  %2385 = vmatprep.subr.mxu0 0.0
  %2386 = vmatpush1.msra.mxu0 0.0
  %2387 = vmatprep.subr.mxu0 0.0
  %2388 = vmatpush1.msra.mxu0 0.0
  %2389 = vmatprep.subr.mxu0 0.0
  %2390 = vmatpush1.msra.mxu0 0.0
  %2391 = vmatprep.subr.mxu0 0.0
  %2392 = vmatpush1.msra.mxu0 0.0
  %2393 = vmatprep.subr.mxu0 0.0
  %2394 = vmatpush1.msra.mxu0 0.0
  %2395 = vmatprep.subr.mxu0 0.0
  %2396 = vmatpush1.msra.mxu0 0.0
  %2397 = vmatprep.subr.mxu0 0.0
  %2398 = vmatpush1.msra.mxu0 0.0
  %2399 = vmatprep.subr.mxu0 0.0
  %2400 = vmatpush1.msra.mxu0 0.0
  %2401 = vmatprep.subr.mxu0 0.0
  %2402 = vmatpush1.msra.mxu0 0.0
  %2403 = vmatprep.subr.mxu0 0.0
  %2404 = vmatpush1.msra.mxu0 0.0
  %2405 = vmatprep.subr.mxu0 0.0
  %2406 = vmatpush1.msra.mxu0 0.0
  %2407 = vmatprep.subr.mxu0 0.0
  %2408 = vmatpush1.msra.mxu0 0.0
  %2409 = vmatprep.subr.mxu0 0.0
  %2410 = vmatpush1.msra.mxu0 0.0
  %2411 = vmatprep.subr.mxu0 0.0
  %2412 = vmatpush1.msra.mxu0 0.0
  %2413 = vmatprep.subr.mxu0 0.0
  %2414 = vmatpush1.msra.mxu0 0.0
  %2415 = vmatprep.subr.mxu0 0.0
  %2416 = vmatpush1.msra.mxu0 0.0
  %2417 = vmatprep.subr.mxu0 0.0
  %2418 = vmatpush1.msra.mxu0 0.0
  %2419 = vmatprep.subr.mxu0 0.0
  %2420 = vmatpush1.msra.mxu0 0.0
  %2421 = vmatprep.mubr.f32.mxu0 0.0
  %2422 = vmatmul.mubr.f32.gmra.mrb[0].mxu0 %v2355
  %v2423 = vpop.f32.mrb[0].mxu0
  %v2424 = vadd.f32 0.0, %v2423
  %v2425 = vpop.f32.mrb[0].mxu0
  %2426 = vdwg.mxu0
  %v2427 = vlaneseq
  %v2428 = vshrl.u32 %v2427, 7
  %v2429 = vsub.s32 3, %v2428
  %v2430 = vrot.slane %v128, %v2429
  %v2431 = vsel %vm133, %v2430, 0
  %2433 = vmatprep.subr.mxu0 0.0
  %2434 = vmatpush1.msra.mxu0 %v2138
  %2435 = vmatprep.subr.mxu0 0.0
  %2436 = vmatpush1.msra.mxu0 %v2139
  %2437 = vmatprep.subr.mxu0 0.0
  %2438 = vmatpush1.msra.mxu0 %v2140
  %2439 = vmatprep.subr.mxu0 0.0
  %2440 = vmatpush1.msra.mxu0 %v2141
  %2441 = vmatprep.subr.mxu0 0.0
  %2442 = vmatpush1.msra.mxu0 0.0
  %2443 = vmatprep.subr.mxu0 0.0
  %2444 = vmatpush1.msra.mxu0 0.0
  %2445 = vmatprep.subr.mxu0 0.0
  %2446 = vmatpush1.msra.mxu0 0.0
  %2447 = vmatprep.subr.mxu0 0.0
  %2448 = vmatpush1.msra.mxu0 0.0
  %2449 = vmatprep.subr.mxu0 0.0
  %2450 = vmatpush1.msra.mxu0 0.0
  %2451 = vmatprep.subr.mxu0 0.0
  %2452 = vmatpush1.msra.mxu0 0.0
  %2453 = vmatprep.subr.mxu0 0.0
  %2454 = vmatpush1.msra.mxu0 0.0
  %2455 = vmatprep.subr.mxu0 0.0
  %2456 = vmatpush1.msra.mxu0 0.0
  %2457 = vmatprep.subr.mxu0 0.0
  %2458 = vmatpush1.msra.mxu0 0.0
  %2459 = vmatprep.subr.mxu0 0.0
  %2460 = vmatpush1.msra.mxu0 0.0
  %2461 = vmatprep.subr.mxu0 0.0
  %2462 = vmatpush1.msra.mxu0 0.0
  %2463 = vmatprep.subr.mxu0 0.0
  %2464 = vmatpush1.msra.mxu0 0.0
  %2465 = vmatprep.subr.mxu0 0.0
  %2466 = vmatpush1.msra.mxu0 0.0
  %2467 = vmatprep.subr.mxu0 0.0
  %2468 = vmatpush1.msra.mxu0 0.0
  %2469 = vmatprep.subr.mxu0 0.0
  %2470 = vmatpush1.msra.mxu0 0.0
  %2471 = vmatprep.subr.mxu0 0.0
  %2472 = vmatpush1.msra.mxu0 0.0
  %2473 = vmatprep.subr.mxu0 0.0
  %2474 = vmatpush1.msra.mxu0 0.0
  %2475 = vmatprep.subr.mxu0 0.0
  %2476 = vmatpush1.msra.mxu0 0.0
  %2477 = vmatprep.subr.mxu0 0.0
  %2478 = vmatpush1.msra.mxu0 0.0
  %2479 = vmatprep.subr.mxu0 0.0
  %2480 = vmatpush1.msra.mxu0 0.0
  %2481 = vmatprep.subr.mxu0 0.0
  %2482 = vmatpush1.msra.mxu0 0.0
  %2483 = vmatprep.subr.mxu0 0.0
  %2484 = vmatpush1.msra.mxu0 0.0
  %2485 = vmatprep.subr.mxu0 0.0
  %2486 = vmatpush1.msra.mxu0 0.0
  %2487 = vmatprep.subr.mxu0 0.0
  %2488 = vmatpush1.msra.mxu0 0.0
  %2489 = vmatprep.subr.mxu0 0.0
  %2490 = vmatpush1.msra.mxu0 0.0
  %2491 = vmatprep.subr.mxu0 0.0
  %2492 = vmatpush1.msra.mxu0 0.0
  %2493 = vmatprep.subr.mxu0 0.0
  %2494 = vmatpush1.msra.mxu0 0.0
  %2495 = vmatprep.subr.mxu0 0.0
  %2496 = vmatpush1.msra.mxu0 0.0
  %2497 = vmatprep.mubr.f32.mxu0 0.0
  %2498 = vmatmul.mubr.f32.gmra.mrb[0].mxu0 %v2431
  %v2499 = vpop.f32.mrb[0].mxu0
  %v2500 = vadd.f32 0.0, %v2499
  %v2501 = vpop.f32.mrb[0].mxu0
  %2502 = vdwg.mxu0
  %v2503 = vlaneseq
  %v2504 = vshrl.u32 %v2503, 7
  %v2505 = vsub.s32 3, %v2504
  %v2506 = vrot.slane %v121, %v2505
  %v2507 = vsel %vm133, %v2506, 0
  %2509 = vmatprep.subr.mxu0 0.0
  %2510 = vmatpush1.msra.mxu0 %v2142
  %2511 = vmatprep.subr.mxu0 0.0
  %2512 = vmatpush1.msra.mxu0 %v2143
  %2513 = vmatprep.subr.mxu0 0.0
  %2514 = vmatpush1.msra.mxu0 %v2144
  %2515 = vmatprep.subr.mxu0 0.0
  %2516 = vmatpush1.msra.mxu0 %v2145
  %2517 = vmatprep.subr.mxu0 0.0
  %2518 = vmatpush1.msra.mxu0 0.0
  %2519 = vmatprep.subr.mxu0 0.0
  %2520 = vmatpush1.msra.mxu0 0.0
  %2521 = vmatprep.subr.mxu0 0.0
  %2522 = vmatpush1.msra.mxu0 0.0
  %2523 = vmatprep.subr.mxu0 0.0
  %2524 = vmatpush1.msra.mxu0 0.0
  %2525 = vmatprep.subr.mxu0 0.0
  %2526 = vmatpush1.msra.mxu0 0.0
  %2527 = vmatprep.subr.mxu0 0.0
  %2528 = vmatpush1.msra.mxu0 0.0
  %2529 = vmatprep.subr.mxu0 0.0
  %2530 = vmatpush1.msra.mxu0 0.0
  %2531 = vmatprep.subr.mxu0 0.0
  %2532 = vmatpush1.msra.mxu0 0.0
  %2533 = vmatprep.subr.mxu0 0.0
  %2534 = vmatpush1.msra.mxu0 0.0
  %2535 = vmatprep.subr.mxu0 0.0
  %2536 = vmatpush1.msra.mxu0 0.0
  %2537 = vmatprep.subr.mxu0 0.0
  %2538 = vmatpush1.msra.mxu0 0.0
  %2539 = vmatprep.subr.mxu0 0.0
  %2540 = vmatpush1.msra.mxu0 0.0
  %2541 = vmatprep.subr.mxu0 0.0
  %2542 = vmatpush1.msra.mxu0 0.0
  %2543 = vmatprep.subr.mxu0 0.0
  %2544 = vmatpush1.msra.mxu0 0.0
  %2545 = vmatprep.subr.mxu0 0.0
  %2546 = vmatpush1.msra.mxu0 0.0
  %2547 = vmatprep.subr.mxu0 0.0
  %2548 = vmatpush1.msra.mxu0 0.0
  %2549 = vmatprep.subr.mxu0 0.0
  %2550 = vmatpush1.msra.mxu0 0.0
  %2551 = vmatprep.subr.mxu0 0.0
  %2552 = vmatpush1.msra.mxu0 0.0
  %2553 = vmatprep.subr.mxu0 0.0
  %2554 = vmatpush1.msra.mxu0 0.0
  %2555 = vmatprep.subr.mxu0 0.0
  %2556 = vmatpush1.msra.mxu0 0.0
  %2557 = vmatprep.subr.mxu0 0.0
  %2558 = vmatpush1.msra.mxu0 0.0
  %2559 = vmatprep.subr.mxu0 0.0
  %2560 = vmatpush1.msra.mxu0 0.0
  %2561 = vmatprep.subr.mxu0 0.0
  %2562 = vmatpush1.msra.mxu0 0.0
  %2563 = vmatprep.subr.mxu0 0.0
  %2564 = vmatpush1.msra.mxu0 0.0
  %2565 = vmatprep.subr.mxu0 0.0
  %2566 = vmatpush1.msra.mxu0 0.0
  %2567 = vmatprep.subr.mxu0 0.0
  %2568 = vmatpush1.msra.mxu0 0.0
  %2569 = vmatprep.subr.mxu0 0.0
  %2570 = vmatpush1.msra.mxu0 0.0
  %2571 = vmatprep.subr.mxu0 0.0
  %2572 = vmatpush1.msra.mxu0 0.0
  %2573 = vmatprep.mubr.f32.mxu0 0.0
  %2574 = vmatmul.mubr.f32.gmra.mrb[0].mxu0 %v2507
  %v2575 = vpop.f32.mrb[0].mxu0
  %v2576 = vadd.f32 0.0, %v2575
  %v2577 = vpop.f32.mrb[0].mxu0
  %2578 = vdwg.mxu0
  %v2579 = vlaneseq
  %v2580 = vshrl.u32 %v2579, 7
  %v2581 = vsub.s32 3, %v2580
  %v2582 = vrot.slane %v129, %v2581
  %v2583 = vsel %vm133, %v2582, 0
  %2585 = vmatprep.subr.mxu0 0.0
  %2586 = vmatpush1.msra.mxu0 %v2146
  %2587 = vmatprep.subr.mxu0 0.0
  %2588 = vmatpush1.msra.mxu0 %v2147
  %2589 = vmatprep.subr.mxu0 0.0
  %2590 = vmatpush1.msra.mxu0 %v2148
  %2591 = vmatprep.subr.mxu0 0.0
  %2592 = vmatpush1.msra.mxu0 %v2149
  %2593 = vmatprep.subr.mxu0 0.0
  %2594 = vmatpush1.msra.mxu0 0.0
  %2595 = vmatprep.subr.mxu0 0.0
  %2596 = vmatpush1.msra.mxu0 0.0
  %2597 = vmatprep.subr.mxu0 0.0
  %2598 = vmatpush1.msra.mxu0 0.0
  %2599 = vmatprep.subr.mxu0 0.0
  %2600 = vmatpush1.msra.mxu0 0.0
  %2601 = vmatprep.subr.mxu0 0.0
  %2602 = vmatpush1.msra.mxu0 0.0
  %2603 = vmatprep.subr.mxu0 0.0
  %2604 = vmatpush1.msra.mxu0 0.0
  %2605 = vmatprep.subr.mxu0 0.0
  %2606 = vmatpush1.msra.mxu0 0.0
  %2607 = vmatprep.subr.mxu0 0.0
  %2608 = vmatpush1.msra.mxu0 0.0
  %2609 = vmatprep.subr.mxu0 0.0
  %2610 = vmatpush1.msra.mxu0 0.0
  %2611 = vmatprep.subr.mxu0 0.0
  %2612 = vmatpush1.msra.mxu0 0.0
  %2613 = vmatprep.subr.mxu0 0.0
  %2614 = vmatpush1.msra.mxu0 0.0
  %2615 = vmatprep.subr.mxu0 0.0
  %2616 = vmatpush1.msra.mxu0 0.0
  %2617 = vmatprep.subr.mxu0 0.0
  %2618 = vmatpush1.msra.mxu0 0.0
  %2619 = vmatprep.subr.mxu0 0.0
  %2620 = vmatpush1.msra.mxu0 0.0
  %2621 = vmatprep.subr.mxu0 0.0
  %2622 = vmatpush1.msra.mxu0 0.0
  %2623 = vmatprep.subr.mxu0 0.0
  %2624 = vmatpush1.msra.mxu0 0.0
  %2625 = vmatprep.subr.mxu0 0.0
  %2626 = vmatpush1.msra.mxu0 0.0
  %2627 = vmatprep.subr.mxu0 0.0
  %2628 = vmatpush1.msra.mxu0 0.0
  %2629 = vmatprep.subr.mxu0 0.0
  %2630 = vmatpush1.msra.mxu0 0.0
  %2631 = vmatprep.subr.mxu0 0.0
  %2632 = vmatpush1.msra.mxu0 0.0
  %2633 = vmatprep.subr.mxu0 0.0
  %2634 = vmatpush1.msra.mxu0 0.0
  %2635 = vmatprep.subr.mxu0 0.0
  %2636 = vmatpush1.msra.mxu0 0.0
  %2637 = vmatprep.subr.mxu0 0.0
  %2638 = vmatpush1.msra.mxu0 0.0
  %2639 = vmatprep.subr.mxu0 0.0
  %2640 = vmatpush1.msra.mxu0 0.0
  %2641 = vmatprep.subr.mxu0 0.0
  %2642 = vmatpush1.msra.mxu0 0.0
  %2643 = vmatprep.subr.mxu0 0.0
  %2644 = vmatpush1.msra.mxu0 0.0
  %2645 = vmatprep.subr.mxu0 0.0
  %2646 = vmatpush1.msra.mxu0 0.0
  %2647 = vmatprep.subr.mxu0 0.0
  %2648 = vmatpush1.msra.mxu0 0.0
  %2649 = vmatprep.mubr.f32.mxu0 0.0
  %2650 = vmatmul.mubr.f32.gmra.mrb[0].mxu0 %v2583
  %v2651 = vpop.f32.mrb[0].mxu0
  %v2652 = vadd.f32 0.0, %v2651
  %v2653 = vpop.f32.mrb[0].mxu0
  %2654 = vdwg.mxu0
  %v2656 = vsel %vm133, %v2272, 0
  %2658 = vmatprep.subr.mxu0 0.0
  %2659 = vmatpush1.msra.mxu0 %v2126
  %2660 = vmatprep.subr.mxu0 0.0
  %2661 = vmatpush1.msra.mxu0 %v2127
  %2662 = vmatprep.subr.mxu0 0.0
  %2663 = vmatpush1.msra.mxu0 %v2128
  %2664 = vmatprep.subr.mxu0 0.0
  %2665 = vmatpush1.msra.mxu0 %v2129
  %2666 = vmatprep.subr.mxu0 0.0
  %2667 = vmatpush1.msra.mxu0 0.0
  %2668 = vmatprep.subr.mxu0 0.0
  %2669 = vmatpush1.msra.mxu0 0.0
  %2670 = vmatprep.subr.mxu0 0.0
  %2671 = vmatpush1.msra.mxu0 0.0
  %2672 = vmatprep.subr.mxu0 0.0
  %2673 = vmatpush1.msra.mxu0 0.0
  %2674 = vmatprep.subr.mxu0 0.0
  %2675 = vmatpush1.msra.mxu0 0.0
  %2676 = vmatprep.subr.mxu0 0.0
  %2677 = vmatpush1.msra.mxu0 0.0
  %2678 = vmatprep.subr.mxu0 0.0
  %2679 = vmatpush1.msra.mxu0 0.0
  %2680 = vmatprep.subr.mxu0 0.0
  %2681 = vmatpush1.msra.mxu0 0.0
  %2682 = vmatprep.subr.mxu0 0.0
  %2683 = vmatpush1.msra.mxu0 0.0
  %2684 = vmatprep.subr.mxu0 0.0
  %2685 = vmatpush1.msra.mxu0 0.0
  %2686 = vmatprep.subr.mxu0 0.0
  %2687 = vmatpush1.msra.mxu0 0.0
  %2688 = vmatprep.subr.mxu0 0.0
  %2689 = vmatpush1.msra.mxu0 0.0
  %2690 = vmatprep.subr.mxu0 0.0
  %2691 = vmatpush1.msra.mxu0 0.0
  %2692 = vmatprep.subr.mxu0 0.0
  %2693 = vmatpush1.msra.mxu0 0.0
  %2694 = vmatprep.subr.mxu0 0.0
  %2695 = vmatpush1.msra.mxu0 0.0
  %2696 = vmatprep.subr.mxu0 0.0
  %2697 = vmatpush1.msra.mxu0 0.0
  %2698 = vmatprep.subr.mxu0 0.0
  %2699 = vmatpush1.msra.mxu0 0.0
  %2700 = vmatprep.subr.mxu0 0.0
  %2701 = vmatpush1.msra.mxu0 0.0
  %2702 = vmatprep.subr.mxu0 0.0
  %2703 = vmatpush1.msra.mxu0 0.0
  %2704 = vmatprep.subr.mxu0 0.0
  %2705 = vmatpush1.msra.mxu0 0.0
  %2706 = vmatprep.subr.mxu0 0.0
  %2707 = vmatpush1.msra.mxu0 0.0
  %2708 = vmatprep.subr.mxu0 0.0
  %2709 = vmatpush1.msra.mxu0 0.0
  %2710 = vmatprep.subr.mxu0 0.0
  %2711 = vmatpush1.msra.mxu0 0.0
  %2712 = vmatprep.subr.mxu0 0.0
  %2713 = vmatpush1.msra.mxu0 0.0
  %2714 = vmatprep.subr.mxu0 0.0
  %2715 = vmatpush1.msra.mxu0 0.0
  %2716 = vmatprep.subr.mxu0 0.0
  %2717 = vmatpush1.msra.mxu0 0.0
  %2718 = vmatprep.subr.mxu0 0.0
  %2719 = vmatpush1.msra.mxu0 0.0
  %2720 = vmatprep.subr.mxu0 0.0
  %2721 = vmatpush1.msra.mxu0 0.0
  %2722 = vmatprep.mubr.f32.mxu0 0.0
  %2723 = vmatmul.mubr.f32.gmra.mrb[0].mxu0 %v2656
  %v2724 = vpop.f32.mrb[0].mxu0
  %v2725 = vadd.f32 0.0, %v2724
  %v2726 = vpop.f32.mrb[0].mxu0
  %2727 = vdwg.mxu0
  %v2729 = vsel %vm133, %v2348, 0
  %2731 = vmatprep.subr.mxu0 0.0
  %2732 = vmatpush1.msra.mxu0 %v2130
  %2733 = vmatprep.subr.mxu0 0.0
  %2734 = vmatpush1.msra.mxu0 %v2131
  %2735 = vmatprep.subr.mxu0 0.0
  %2736 = vmatpush1.msra.mxu0 %v2132
  %2737 = vmatprep.subr.mxu0 0.0
  %2738 = vmatpush1.msra.mxu0 %v2133
  %2739 = vmatprep.subr.mxu0 0.0
  %2740 = vmatpush1.msra.mxu0 0.0
  %2741 = vmatprep.subr.mxu0 0.0
  %2742 = vmatpush1.msra.mxu0 0.0
  %2743 = vmatprep.subr.mxu0 0.0
  %2744 = vmatpush1.msra.mxu0 0.0
  %2745 = vmatprep.subr.mxu0 0.0
  %2746 = vmatpush1.msra.mxu0 0.0
  %2747 = vmatprep.subr.mxu0 0.0
  %2748 = vmatpush1.msra.mxu0 0.0
  %2749 = vmatprep.subr.mxu0 0.0
  %2750 = vmatpush1.msra.mxu0 0.0
  %2751 = vmatprep.subr.mxu0 0.0
  %2752 = vmatpush1.msra.mxu0 0.0
  %2753 = vmatprep.subr.mxu0 0.0
  %2754 = vmatpush1.msra.mxu0 0.0
  %2755 = vmatprep.subr.mxu0 0.0
  %2756 = vmatpush1.msra.mxu0 0.0
  %2757 = vmatprep.subr.mxu0 0.0
  %2758 = vmatpush1.msra.mxu0 0.0
  %2759 = vmatprep.subr.mxu0 0.0
  %2760 = vmatpush1.msra.mxu0 0.0
  %2761 = vmatprep.subr.mxu0 0.0
  %2762 = vmatpush1.msra.mxu0 0.0
  %2763 = vmatprep.subr.mxu0 0.0
  %2764 = vmatpush1.msra.mxu0 0.0
  %2765 = vmatprep.subr.mxu0 0.0
  %2766 = vmatpush1.msra.mxu0 0.0
  %2767 = vmatprep.subr.mxu0 0.0
  %2768 = vmatpush1.msra.mxu0 0.0
  %2769 = vmatprep.subr.mxu0 0.0
  %2770 = vmatpush1.msra.mxu0 0.0
  %2771 = vmatprep.subr.mxu0 0.0
  %2772 = vmatpush1.msra.mxu0 0.0
  %2773 = vmatprep.subr.mxu0 0.0
  %2774 = vmatpush1.msra.mxu0 0.0
  %2775 = vmatprep.subr.mxu0 0.0
  %2776 = vmatpush1.msra.mxu0 0.0
  %2777 = vmatprep.subr.mxu0 0.0
  %2778 = vmatpush1.msra.mxu0 0.0
  %2779 = vmatprep.subr.mxu0 0.0
  %2780 = vmatpush1.msra.mxu0 0.0
  %2781 = vmatprep.subr.mxu0 0.0
  %2782 = vmatpush1.msra.mxu0 0.0
  %2783 = vmatprep.subr.mxu0 0.0
  %2784 = vmatpush1.msra.mxu0 0.0
  %2785 = vmatprep.subr.mxu0 0.0
  %2786 = vmatpush1.msra.mxu0 0.0
  %2787 = vmatprep.subr.mxu0 0.0
  %2788 = vmatpush1.msra.mxu0 0.0
  %2789 = vmatprep.subr.mxu0 0.0
  %2790 = vmatpush1.msra.mxu0 0.0
  %2791 = vmatprep.subr.mxu0 0.0
  %2792 = vmatpush1.msra.mxu0 0.0
  %2793 = vmatprep.subr.mxu0 0.0
  %2794 = vmatpush1.msra.mxu0 0.0
  %2795 = vmatprep.mubr.f32.mxu0 0.0
  %2796 = vmatmul.mubr.f32.gmra.mrb[0].mxu0 %v2729
  %v2797 = vpop.f32.mrb[0].mxu0
  %v2798 = vadd.f32 0.0, %v2797
  %v2799 = vpop.f32.mrb[0].mxu0
  %2800 = vdwg.mxu0
  %v2802 = vsel %vm133, %v2424, 0
  %2804 = vmatprep.subr.mxu0 0.0
  %2805 = vmatpush1.msra.mxu0 %v2134
  %2806 = vmatprep.subr.mxu0 0.0
  %2807 = vmatpush1.msra.mxu0 %v2135
  %2808 = vmatprep.subr.mxu0 0.0
  %2809 = vmatpush1.msra.mxu0 %v2136
  %2810 = vmatprep.subr.mxu0 0.0
  %2811 = vmatpush1.msra.mxu0 %v2137
  %2812 = vmatprep.subr.mxu0 0.0
  %2813 = vmatpush1.msra.mxu0 0.0
  %2814 = vmatprep.subr.mxu0 0.0
  %2815 = vmatpush1.msra.mxu0 0.0
  %2816 = vmatprep.subr.mxu0 0.0
  %2817 = vmatpush1.msra.mxu0 0.0
  %2818 = vmatprep.subr.mxu0 0.0
  %2819 = vmatpush1.msra.mxu0 0.0
  %2820 = vmatprep.subr.mxu0 0.0
  %2821 = vmatpush1.msra.mxu0 0.0
  %2822 = vmatprep.subr.mxu0 0.0
  %2823 = vmatpush1.msra.mxu0 0.0
  %2824 = vmatprep.subr.mxu0 0.0
  %2825 = vmatpush1.msra.mxu0 0.0
  %2826 = vmatprep.subr.mxu0 0.0
  %2827 = vmatpush1.msra.mxu0 0.0
  %2828 = vmatprep.subr.mxu0 0.0
  %2829 = vmatpush1.msra.mxu0 0.0
  %2830 = vmatprep.subr.mxu0 0.0
  %2831 = vmatpush1.msra.mxu0 0.0
  %2832 = vmatprep.subr.mxu0 0.0
  %2833 = vmatpush1.msra.mxu0 0.0
  %2834 = vmatprep.subr.mxu0 0.0
  %2835 = vmatpush1.msra.mxu0 0.0
  %2836 = vmatprep.subr.mxu0 0.0
  %2837 = vmatpush1.msra.mxu0 0.0
  %2838 = vmatprep.subr.mxu0 0.0
  %2839 = vmatpush1.msra.mxu0 0.0
  %2840 = vmatprep.subr.mxu0 0.0
  %2841 = vmatpush1.msra.mxu0 0.0
  %2842 = vmatprep.subr.mxu0 0.0
  %2843 = vmatpush1.msra.mxu0 0.0
  %2844 = vmatprep.subr.mxu0 0.0
  %2845 = vmatpush1.msra.mxu0 0.0
  %2846 = vmatprep.subr.mxu0 0.0
  %2847 = vmatpush1.msra.mxu0 0.0
  %2848 = vmatprep.subr.mxu0 0.0
  %2849 = vmatpush1.msra.mxu0 0.0
  %2850 = vmatprep.subr.mxu0 0.0
  %2851 = vmatpush1.msra.mxu0 0.0
  %2852 = vmatprep.subr.mxu0 0.0
  %2853 = vmatpush1.msra.mxu0 0.0
  %2854 = vmatprep.subr.mxu0 0.0
  %2855 = vmatpush1.msra.mxu0 0.0
  %2856 = vmatprep.subr.mxu0 0.0
  %2857 = vmatpush1.msra.mxu0 0.0
  %2858 = vmatprep.subr.mxu0 0.0
  %2859 = vmatpush1.msra.mxu0 0.0
  %2860 = vmatprep.subr.mxu0 0.0
  %2861 = vmatpush1.msra.mxu0 0.0
  %2862 = vmatprep.subr.mxu0 0.0
  %2863 = vmatpush1.msra.mxu0 0.0
  %2864 = vmatprep.subr.mxu0 0.0
  %2865 = vmatpush1.msra.mxu0 0.0
  %2866 = vmatprep.subr.mxu0 0.0
  %2867 = vmatpush1.msra.mxu0 0.0
  %2868 = vmatprep.mubr.f32.mxu0 0.0
  %2869 = vmatmul.mubr.f32.gmra.mrb[0].mxu0 %v2802
  %v2870 = vpop.f32.mrb[0].mxu0
  %v2871 = vadd.f32 0.0, %v2870
  %v2872 = vpop.f32.mrb[0].mxu0
  %2873 = vdwg.mxu0
  %v2875 = vsel %vm133, %v2500, 0
  %2877 = vmatprep.subr.mxu0 0.0
  %2878 = vmatpush1.msra.mxu0 %v2138
  %2879 = vmatprep.subr.mxu0 0.0
  %2880 = vmatpush1.msra.mxu0 %v2139
  %2881 = vmatprep.subr.mxu0 0.0
  %2882 = vmatpush1.msra.mxu0 %v2140
  %2883 = vmatprep.subr.mxu0 0.0
  %2884 = vmatpush1.msra.mxu0 %v2141
  %2885 = vmatprep.subr.mxu0 0.0
  %2886 = vmatpush1.msra.mxu0 0.0
  %2887 = vmatprep.subr.mxu0 0.0
  %2888 = vmatpush1.msra.mxu0 0.0
  %2889 = vmatprep.subr.mxu0 0.0
  %2890 = vmatpush1.msra.mxu0 0.0
  %2891 = vmatprep.subr.mxu0 0.0
  %2892 = vmatpush1.msra.mxu0 0.0
  %2893 = vmatprep.subr.mxu0 0.0
  %2894 = vmatpush1.msra.mxu0 0.0
  %2895 = vmatprep.subr.mxu0 0.0
  %2896 = vmatpush1.msra.mxu0 0.0
  %2897 = vmatprep.subr.mxu0 0.0
  %2898 = vmatpush1.msra.mxu0 0.0
  %2899 = vmatprep.subr.mxu0 0.0
  %2900 = vmatpush1.msra.mxu0 0.0
  %2901 = vmatprep.subr.mxu0 0.0
  %2902 = vmatpush1.msra.mxu0 0.0
  %2903 = vmatprep.subr.mxu0 0.0
  %2904 = vmatpush1.msra.mxu0 0.0
  %2905 = vmatprep.subr.mxu0 0.0
  %2906 = vmatpush1.msra.mxu0 0.0
  %2907 = vmatprep.subr.mxu0 0.0
  %2908 = vmatpush1.msra.mxu0 0.0
  %2909 = vmatprep.subr.mxu0 0.0
  %2910 = vmatpush1.msra.mxu0 0.0
  %2911 = vmatprep.subr.mxu0 0.0
  %2912 = vmatpush1.msra.mxu0 0.0
  %2913 = vmatprep.subr.mxu0 0.0
  %2914 = vmatpush1.msra.mxu0 0.0
  %2915 = vmatprep.subr.mxu0 0.0
  %2916 = vmatpush1.msra.mxu0 0.0
  %2917 = vmatprep.subr.mxu0 0.0
  %2918 = vmatpush1.msra.mxu0 0.0
  %2919 = vmatprep.subr.mxu0 0.0
  %2920 = vmatpush1.msra.mxu0 0.0
  %2921 = vmatprep.subr.mxu0 0.0
  %2922 = vmatpush1.msra.mxu0 0.0
  %2923 = vmatprep.subr.mxu0 0.0
  %2924 = vmatpush1.msra.mxu0 0.0
  %2925 = vmatprep.subr.mxu0 0.0
  %2926 = vmatpush1.msra.mxu0 0.0
  %2927 = vmatprep.subr.mxu0 0.0
  %2928 = vmatpush1.msra.mxu0 0.0
  %2929 = vmatprep.subr.mxu0 0.0
  %2930 = vmatpush1.msra.mxu0 0.0
  %2931 = vmatprep.subr.mxu0 0.0
  %2932 = vmatpush1.msra.mxu0 0.0
  %2933 = vmatprep.subr.mxu0 0.0
  %2934 = vmatpush1.msra.mxu0 0.0
  %2935 = vmatprep.subr.mxu0 0.0
  %2936 = vmatpush1.msra.mxu0 0.0
  %2937 = vmatprep.subr.mxu0 0.0
  %2938 = vmatpush1.msra.mxu0 0.0
  %2939 = vmatprep.subr.mxu0 0.0
  %2940 = vmatpush1.msra.mxu0 0.0
  %2941 = vmatprep.mubr.f32.mxu0 0.0
  %2942 = vmatmul.mubr.f32.gmra.mrb[0].mxu0 %v2875
  %v2943 = vpop.f32.mrb[0].mxu0
  %v2944 = vadd.f32 0.0, %v2943
  %v2945 = vpop.f32.mrb[0].mxu0
  %2946 = vdwg.mxu0
  %v2948 = vsel %vm133, %v2576, 0
  %2950 = vmatprep.subr.mxu0 0.0
  %2951 = vmatpush1.msra.mxu0 %v2142
  %2952 = vmatprep.subr.mxu0 0.0
  %2953 = vmatpush1.msra.mxu0 %v2143
  %2954 = vmatprep.subr.mxu0 0.0
  %2955 = vmatpush1.msra.mxu0 %v2144
  %2956 = vmatprep.subr.mxu0 0.0
  %2957 = vmatpush1.msra.mxu0 %v2145
  %2958 = vmatprep.subr.mxu0 0.0
  %2959 = vmatpush1.msra.mxu0 0.0
  %2960 = vmatprep.subr.mxu0 0.0
  %2961 = vmatpush1.msra.mxu0 0.0
  %2962 = vmatprep.subr.mxu0 0.0
  %2963 = vmatpush1.msra.mxu0 0.0
  %2964 = vmatprep.subr.mxu0 0.0
  %2965 = vmatpush1.msra.mxu0 0.0
  %2966 = vmatprep.subr.mxu0 0.0
  %2967 = vmatpush1.msra.mxu0 0.0
  %2968 = vmatprep.subr.mxu0 0.0
  %2969 = vmatpush1.msra.mxu0 0.0
  %2970 = vmatprep.subr.mxu0 0.0
  %2971 = vmatpush1.msra.mxu0 0.0
  %2972 = vmatprep.subr.mxu0 0.0
  %2973 = vmatpush1.msra.mxu0 0.0
  %2974 = vmatprep.subr.mxu0 0.0
  %2975 = vmatpush1.msra.mxu0 0.0
  %2976 = vmatprep.subr.mxu0 0.0
  %2977 = vmatpush1.msra.mxu0 0.0
  %2978 = vmatprep.subr.mxu0 0.0
  %2979 = vmatpush1.msra.mxu0 0.0
  %2980 = vmatprep.subr.mxu0 0.0
  %2981 = vmatpush1.msra.mxu0 0.0
  %2982 = vmatprep.subr.mxu0 0.0
  %2983 = vmatpush1.msra.mxu0 0.0
  %2984 = vmatprep.subr.mxu0 0.0
  %2985 = vmatpush1.msra.mxu0 0.0
  %2986 = vmatprep.subr.mxu0 0.0
  %2987 = vmatpush1.msra.mxu0 0.0
  %2988 = vmatprep.subr.mxu0 0.0
  %2989 = vmatpush1.msra.mxu0 0.0
  %2990 = vmatprep.subr.mxu0 0.0
  %2991 = vmatpush1.msra.mxu0 0.0
  %2992 = vmatprep.subr.mxu0 0.0
  %2993 = vmatpush1.msra.mxu0 0.0
  %2994 = vmatprep.subr.mxu0 0.0
  %2995 = vmatpush1.msra.mxu0 0.0
  %2996 = vmatprep.subr.mxu0 0.0
  %2997 = vmatpush1.msra.mxu0 0.0
  %2998 = vmatprep.subr.mxu0 0.0
  %2999 = vmatpush1.msra.mxu0 0.0
  %3000 = vmatprep.subr.mxu0 0.0
  %3001 = vmatpush1.msra.mxu0 0.0
  %3002 = vmatprep.subr.mxu0 0.0
  %3003 = vmatpush1.msra.mxu0 0.0
  %3004 = vmatprep.subr.mxu0 0.0
  %3005 = vmatpush1.msra.mxu0 0.0
  %3006 = vmatprep.subr.mxu0 0.0
  %3007 = vmatpush1.msra.mxu0 0.0
  %3008 = vmatprep.subr.mxu0 0.0
  %3009 = vmatpush1.msra.mxu0 0.0
  %3010 = vmatprep.subr.mxu0 0.0
  %3011 = vmatpush1.msra.mxu0 0.0
  %3012 = vmatprep.subr.mxu0 0.0
  %3013 = vmatpush1.msra.mxu0 0.0
  %3014 = vmatprep.mubr.f32.mxu0 0.0
  %3015 = vmatmul.mubr.f32.gmra.mrb[0].mxu0 %v2948
  %v3016 = vpop.f32.mrb[0].mxu0
  %v3017 = vadd.f32 0.0, %v3016
  %v3018 = vpop.f32.mrb[0].mxu0
  %3019 = vdwg.mxu0
  %v3021 = vsel %vm133, %v2652, 0
  %3023 = vmatprep.subr.mxu0 0.0
  %3024 = vmatpush1.msra.mxu0 %v2146
  %3025 = vmatprep.subr.mxu0 0.0
  %3026 = vmatpush1.msra.mxu0 %v2147
  %3027 = vmatprep.subr.mxu0 0.0
  %3028 = vmatpush1.msra.mxu0 %v2148
  %3029 = vmatprep.subr.mxu0 0.0
  %3030 = vmatpush1.msra.mxu0 %v2149
  %3031 = vmatprep.subr.mxu0 0.0
  %3032 = vmatpush1.msra.mxu0 0.0
  %3033 = vmatprep.subr.mxu0 0.0
  %3034 = vmatpush1.msra.mxu0 0.0
  %3035 = vmatprep.subr.mxu0 0.0
  %3036 = vmatpush1.msra.mxu0 0.0
  %3037 = vmatprep.subr.mxu0 0.0
  %3038 = vmatpush1.msra.mxu0 0.0
  %3039 = vmatprep.subr.mxu0 0.0
  %3040 = vmatpush1.msra.mxu0 0.0
  %3041 = vmatprep.subr.mxu0 0.0
  %3042 = vmatpush1.msra.mxu0 0.0
  %3043 = vmatprep.subr.mxu0 0.0
  %3044 = vmatpush1.msra.mxu0 0.0
  %3045 = vmatprep.subr.mxu0 0.0
  %3046 = vmatpush1.msra.mxu0 0.0
  %3047 = vmatprep.subr.mxu0 0.0
  %3048 = vmatpush1.msra.mxu0 0.0
  %3049 = vmatprep.subr.mxu0 0.0
  %3050 = vmatpush1.msra.mxu0 0.0
  %3051 = vmatprep.subr.mxu0 0.0
  %3052 = vmatpush1.msra.mxu0 0.0
  %3053 = vmatprep.subr.mxu0 0.0
  %3054 = vmatpush1.msra.mxu0 0.0
  %3055 = vmatprep.subr.mxu0 0.0
  %3056 = vmatpush1.msra.mxu0 0.0
  %3057 = vmatprep.subr.mxu0 0.0
  %3058 = vmatpush1.msra.mxu0 0.0
  %3059 = vmatprep.subr.mxu0 0.0
  %3060 = vmatpush1.msra.mxu0 0.0
  %3061 = vmatprep.subr.mxu0 0.0
  %3062 = vmatpush1.msra.mxu0 0.0
  %3063 = vmatprep.subr.mxu0 0.0
  %3064 = vmatpush1.msra.mxu0 0.0
  %3065 = vmatprep.subr.mxu0 0.0
  %3066 = vmatpush1.msra.mxu0 0.0
  %3067 = vmatprep.subr.mxu0 0.0
  %3068 = vmatpush1.msra.mxu0 0.0
  %3069 = vmatprep.subr.mxu0 0.0
  %3070 = vmatpush1.msra.mxu0 0.0
  %3071 = vmatprep.subr.mxu0 0.0
  %3072 = vmatpush1.msra.mxu0 0.0
  %3073 = vmatprep.subr.mxu0 0.0
  %3074 = vmatpush1.msra.mxu0 0.0
  %3075 = vmatprep.subr.mxu0 0.0
  %3076 = vmatpush1.msra.mxu0 0.0
  %3077 = vmatprep.subr.mxu0 0.0
  %3078 = vmatpush1.msra.mxu0 0.0
  %3079 = vmatprep.subr.mxu0 0.0
  %3080 = vmatpush1.msra.mxu0 0.0
  %3081 = vmatprep.subr.mxu0 0.0
  %3082 = vmatpush1.msra.mxu0 0.0
  %3083 = vmatprep.subr.mxu0 0.0
  %3084 = vmatpush1.msra.mxu0 0.0
  %3085 = vmatprep.subr.mxu0 0.0
  %3086 = vmatpush1.msra.mxu0 0.0
  %3087 = vmatprep.mubr.f32.mxu0 0.0
  %3088 = vmatmul.mubr.f32.gmra.mrb[0].mxu0 %v3021
  %v3089 = vpop.f32.mrb[0].mxu0
  %v3090 = vadd.f32 0.0, %v3089
  %v3091 = vpop.f32.mrb[0].mxu0
  %3092 = vdwg.mxu0
  %v3094 = vsel %vm133, %v2725, 0
  %3096 = vmatprep.subr.mxu0 0.0
  %3097 = vmatpush1.msra.mxu0 %v2126
  %3098 = vmatprep.subr.mxu0 0.0
  %3099 = vmatpush1.msra.mxu0 %v2127
  %3100 = vmatprep.subr.mxu0 0.0
  %3101 = vmatpush1.msra.mxu0 %v2128
  %3102 = vmatprep.subr.mxu0 0.0
  %3103 = vmatpush1.msra.mxu0 %v2129
  %3104 = vmatprep.subr.mxu0 0.0
  %3105 = vmatpush1.msra.mxu0 0.0
  %3106 = vmatprep.subr.mxu0 0.0
  %3107 = vmatpush1.msra.mxu0 0.0
  %3108 = vmatprep.subr.mxu0 0.0
  %3109 = vmatpush1.msra.mxu0 0.0
  %3110 = vmatprep.subr.mxu0 0.0
  %3111 = vmatpush1.msra.mxu0 0.0
  %3112 = vmatprep.subr.mxu0 0.0
  %3113 = vmatpush1.msra.mxu0 0.0
  %3114 = vmatprep.subr.mxu0 0.0
  %3115 = vmatpush1.msra.mxu0 0.0
  %3116 = vmatprep.subr.mxu0 0.0
  %3117 = vmatpush1.msra.mxu0 0.0
  %3118 = vmatprep.subr.mxu0 0.0
  %3119 = vmatpush1.msra.mxu0 0.0
  %3120 = vmatprep.subr.mxu0 0.0
  %3121 = vmatpush1.msra.mxu0 0.0
  %3122 = vmatprep.subr.mxu0 0.0
  %3123 = vmatpush1.msra.mxu0 0.0
  %3124 = vmatprep.subr.mxu0 0.0
  %3125 = vmatpush1.msra.mxu0 0.0
  %3126 = vmatprep.subr.mxu0 0.0
  %3127 = vmatpush1.msra.mxu0 0.0
  %3128 = vmatprep.subr.mxu0 0.0
  %3129 = vmatpush1.msra.mxu0 0.0
  %3130 = vmatprep.subr.mxu0 0.0
  %3131 = vmatpush1.msra.mxu0 0.0
  %3132 = vmatprep.subr.mxu0 0.0
  %3133 = vmatpush1.msra.mxu0 0.0
  %3134 = vmatprep.subr.mxu0 0.0
  %3135 = vmatpush1.msra.mxu0 0.0
  %3136 = vmatprep.subr.mxu0 0.0
  %3137 = vmatpush1.msra.mxu0 0.0
  %3138 = vmatprep.subr.mxu0 0.0
  %3139 = vmatpush1.msra.mxu0 0.0
  %3140 = vmatprep.subr.mxu0 0.0
  %3141 = vmatpush1.msra.mxu0 0.0
  %3142 = vmatprep.subr.mxu0 0.0
  %3143 = vmatpush1.msra.mxu0 0.0
  %3144 = vmatprep.subr.mxu0 0.0
  %3145 = vmatpush1.msra.mxu0 0.0
  %3146 = vmatprep.subr.mxu0 0.0
  %3147 = vmatpush1.msra.mxu0 0.0
  %3148 = vmatprep.subr.mxu0 0.0
  %3149 = vmatpush1.msra.mxu0 0.0
  %3150 = vmatprep.subr.mxu0 0.0
  %3151 = vmatpush1.msra.mxu0 0.0
  %3152 = vmatprep.subr.mxu0 0.0
  %3153 = vmatpush1.msra.mxu0 0.0
  %3154 = vmatprep.subr.mxu0 0.0
  %3155 = vmatpush1.msra.mxu0 0.0
  %3156 = vmatprep.subr.mxu0 0.0
  %3157 = vmatpush1.msra.mxu0 0.0
  %3158 = vmatprep.subr.mxu0 0.0
  %3159 = vmatpush1.msra.mxu0 0.0
  %3160 = vmatprep.mubr.f32.mxu0 0.0
  %3161 = vmatmul.mubr.f32.gmra.mrb[0].mxu0 %v3094
  %v3162 = vpop.f32.mrb[0].mxu0
  %v3163 = vadd.f32 0.0, %v3162
  %v3164 = vpop.f32.mrb[0].mxu0
  %3165 = vdwg.mxu0
  %v3167 = vsel %vm133, %v2798, 0
  %3169 = vmatprep.subr.mxu0 0.0
  %3170 = vmatpush1.msra.mxu0 %v2130
  %3171 = vmatprep.subr.mxu0 0.0
  %3172 = vmatpush1.msra.mxu0 %v2131
  %3173 = vmatprep.subr.mxu0 0.0
  %3174 = vmatpush1.msra.mxu0 %v2132
  %3175 = vmatprep.subr.mxu0 0.0
  %3176 = vmatpush1.msra.mxu0 %v2133
  %3177 = vmatprep.subr.mxu0 0.0
  %3178 = vmatpush1.msra.mxu0 0.0
  %3179 = vmatprep.subr.mxu0 0.0
  %3180 = vmatpush1.msra.mxu0 0.0
  %3181 = vmatprep.subr.mxu0 0.0
  %3182 = vmatpush1.msra.mxu0 0.0
  %3183 = vmatprep.subr.mxu0 0.0
  %3184 = vmatpush1.msra.mxu0 0.0
  %3185 = vmatprep.subr.mxu0 0.0
  %3186 = vmatpush1.msra.mxu0 0.0
  %3187 = vmatprep.subr.mxu0 0.0
  %3188 = vmatpush1.msra.mxu0 0.0
  %3189 = vmatprep.subr.mxu0 0.0
  %3190 = vmatpush1.msra.mxu0 0.0
  %3191 = vmatprep.subr.mxu0 0.0
  %3192 = vmatpush1.msra.mxu0 0.0
  %3193 = vmatprep.subr.mxu0 0.0
  %3194 = vmatpush1.msra.mxu0 0.0
  %3195 = vmatprep.subr.mxu0 0.0
  %3196 = vmatpush1.msra.mxu0 0.0
  %3197 = vmatprep.subr.mxu0 0.0
  %3198 = vmatpush1.msra.mxu0 0.0
  %3199 = vmatprep.subr.mxu0 0.0
  %3200 = vmatpush1.msra.mxu0 0.0
  %3201 = vmatprep.subr.mxu0 0.0
  %3202 = vmatpush1.msra.mxu0 0.0
  %3203 = vmatprep.subr.mxu0 0.0
  %3204 = vmatpush1.msra.mxu0 0.0
  %3205 = vmatprep.subr.mxu0 0.0
  %3206 = vmatpush1.msra.mxu0 0.0
  %3207 = vmatprep.subr.mxu0 0.0
  %3208 = vmatpush1.msra.mxu0 0.0
  %3209 = vmatprep.subr.mxu0 0.0
  %3210 = vmatpush1.msra.mxu0 0.0
  %3211 = vmatprep.subr.mxu0 0.0
  %3212 = vmatpush1.msra.mxu0 0.0
  %3213 = vmatprep.subr.mxu0 0.0
  %3214 = vmatpush1.msra.mxu0 0.0
  %3215 = vmatprep.subr.mxu0 0.0
  %3216 = vmatpush1.msra.mxu0 0.0
  %3217 = vmatprep.subr.mxu0 0.0
  %3218 = vmatpush1.msra.mxu0 0.0
  %3219 = vmatprep.subr.mxu0 0.0
  %3220 = vmatpush1.msra.mxu0 0.0
  %3221 = vmatprep.subr.mxu0 0.0
  %3222 = vmatpush1.msra.mxu0 0.0
  %3223 = vmatprep.subr.mxu0 0.0
  %3224 = vmatpush1.msra.mxu0 0.0
  %3225 = vmatprep.subr.mxu0 0.0
  %3226 = vmatpush1.msra.mxu0 0.0
  %3227 = vmatprep.subr.mxu0 0.0
  %3228 = vmatpush1.msra.mxu0 0.0
  %3229 = vmatprep.subr.mxu0 0.0
  %3230 = vmatpush1.msra.mxu0 0.0
  %3231 = vmatprep.subr.mxu0 0.0
  %3232 = vmatpush1.msra.mxu0 0.0
  %3233 = vmatprep.mubr.f32.mxu0 0.0
  %3234 = vmatmul.mubr.f32.gmra.mrb[0].mxu0 %v3167
  %v3235 = vpop.f32.mrb[0].mxu0
  %v3236 = vadd.f32 0.0, %v3235
  %v3237 = vpop.f32.mrb[0].mxu0
  %3238 = vdwg.mxu0
  %v3240 = vsel %vm133, %v2871, 0
  %3242 = vmatprep.subr.mxu0 0.0
  %3243 = vmatpush1.msra.mxu0 %v2134
  %3244 = vmatprep.subr.mxu0 0.0
  %3245 = vmatpush1.msra.mxu0 %v2135
  %3246 = vmatprep.subr.mxu0 0.0
  %3247 = vmatpush1.msra.mxu0 %v2136
  %3248 = vmatprep.subr.mxu0 0.0
  %3249 = vmatpush1.msra.mxu0 %v2137
  %3250 = vmatprep.subr.mxu0 0.0
  %3251 = vmatpush1.msra.mxu0 0.0
  %3252 = vmatprep.subr.mxu0 0.0
  %3253 = vmatpush1.msra.mxu0 0.0
  %3254 = vmatprep.subr.mxu0 0.0
  %3255 = vmatpush1.msra.mxu0 0.0
  %3256 = vmatprep.subr.mxu0 0.0
  %3257 = vmatpush1.msra.mxu0 0.0
  %3258 = vmatprep.subr.mxu0 0.0
  %3259 = vmatpush1.msra.mxu0 0.0
  %3260 = vmatprep.subr.mxu0 0.0
  %3261 = vmatpush1.msra.mxu0 0.0
  %3262 = vmatprep.subr.mxu0 0.0
  %3263 = vmatpush1.msra.mxu0 0.0
  %3264 = vmatprep.subr.mxu0 0.0
  %3265 = vmatpush1.msra.mxu0 0.0
  %3266 = vmatprep.subr.mxu0 0.0
  %3267 = vmatpush1.msra.mxu0 0.0
  %3268 = vmatprep.subr.mxu0 0.0
  %3269 = vmatpush1.msra.mxu0 0.0
  %3270 = vmatprep.subr.mxu0 0.0
  %3271 = vmatpush1.msra.mxu0 0.0
  %3272 = vmatprep.subr.mxu0 0.0
  %3273 = vmatpush1.msra.mxu0 0.0
  %3274 = vmatprep.subr.mxu0 0.0
  %3275 = vmatpush1.msra.mxu0 0.0
  %3276 = vmatprep.subr.mxu0 0.0
  %3277 = vmatpush1.msra.mxu0 0.0
  %3278 = vmatprep.subr.mxu0 0.0
  %3279 = vmatpush1.msra.mxu0 0.0
  %3280 = vmatprep.subr.mxu0 0.0
  %3281 = vmatpush1.msra.mxu0 0.0
  %3282 = vmatprep.subr.mxu0 0.0
  %3283 = vmatpush1.msra.mxu0 0.0
  %3284 = vmatprep.subr.mxu0 0.0
  %3285 = vmatpush1.msra.mxu0 0.0
  %3286 = vmatprep.subr.mxu0 0.0
  %3287 = vmatpush1.msra.mxu0 0.0
  %3288 = vmatprep.subr.mxu0 0.0
  %3289 = vmatpush1.msra.mxu0 0.0
  %3290 = vmatprep.subr.mxu0 0.0
  %3291 = vmatpush1.msra.mxu0 0.0
  %3292 = vmatprep.subr.mxu0 0.0
  %3293 = vmatpush1.msra.mxu0 0.0
  %3294 = vmatprep.subr.mxu0 0.0
  %3295 = vmatpush1.msra.mxu0 0.0
  %3296 = vmatprep.subr.mxu0 0.0
  %3297 = vmatpush1.msra.mxu0 0.0
  %3298 = vmatprep.subr.mxu0 0.0
  %3299 = vmatpush1.msra.mxu0 0.0
  %3300 = vmatprep.subr.mxu0 0.0
  %3301 = vmatpush1.msra.mxu0 0.0
  %3302 = vmatprep.subr.mxu0 0.0
  %3303 = vmatpush1.msra.mxu0 0.0
  %3304 = vmatprep.subr.mxu0 0.0
  %3305 = vmatpush1.msra.mxu0 0.0
  %3306 = vmatprep.mubr.f32.mxu0 0.0
  %3307 = vmatmul.mubr.f32.gmra.mrb[0].mxu0 %v3240
  %v3308 = vpop.f32.mrb[0].mxu0
  %v3309 = vadd.f32 0.0, %v3308
  %v3310 = vpop.f32.mrb[0].mxu0
  %3311 = vdwg.mxu0
  %v3313 = vsel %vm133, %v2944, 0
  %3315 = vmatprep.subr.mxu0 0.0
  %3316 = vmatpush1.msra.mxu0 %v2138
  %3317 = vmatprep.subr.mxu0 0.0
  %3318 = vmatpush1.msra.mxu0 %v2139
  %3319 = vmatprep.subr.mxu0 0.0
  %3320 = vmatpush1.msra.mxu0 %v2140
  %3321 = vmatprep.subr.mxu0 0.0
  %3322 = vmatpush1.msra.mxu0 %v2141
  %3323 = vmatprep.subr.mxu0 0.0
  %3324 = vmatpush1.msra.mxu0 0.0
  %3325 = vmatprep.subr.mxu0 0.0
  %3326 = vmatpush1.msra.mxu0 0.0
  %3327 = vmatprep.subr.mxu0 0.0
  %3328 = vmatpush1.msra.mxu0 0.0
  %3329 = vmatprep.subr.mxu0 0.0
  %3330 = vmatpush1.msra.mxu0 0.0
  %3331 = vmatprep.subr.mxu0 0.0
  %3332 = vmatpush1.msra.mxu0 0.0
  %3333 = vmatprep.subr.mxu0 0.0
  %3334 = vmatpush1.msra.mxu0 0.0
  %3335 = vmatprep.subr.mxu0 0.0
  %3336 = vmatpush1.msra.mxu0 0.0
  %3337 = vmatprep.subr.mxu0 0.0
  %3338 = vmatpush1.msra.mxu0 0.0
  %3339 = vmatprep.subr.mxu0 0.0
  %3340 = vmatpush1.msra.mxu0 0.0
  %3341 = vmatprep.subr.mxu0 0.0
  %3342 = vmatpush1.msra.mxu0 0.0
  %3343 = vmatprep.subr.mxu0 0.0
  %3344 = vmatpush1.msra.mxu0 0.0
  %3345 = vmatprep.subr.mxu0 0.0
  %3346 = vmatpush1.msra.mxu0 0.0
  %3347 = vmatprep.subr.mxu0 0.0
  %3348 = vmatpush1.msra.mxu0 0.0
  %3349 = vmatprep.subr.mxu0 0.0
  %3350 = vmatpush1.msra.mxu0 0.0
  %3351 = vmatprep.subr.mxu0 0.0
  %3352 = vmatpush1.msra.mxu0 0.0
  %3353 = vmatprep.subr.mxu0 0.0
  %3354 = vmatpush1.msra.mxu0 0.0
  %3355 = vmatprep.subr.mxu0 0.0
  %3356 = vmatpush1.msra.mxu0 0.0
  %3357 = vmatprep.subr.mxu0 0.0
  %3358 = vmatpush1.msra.mxu0 0.0
  %3359 = vmatprep.subr.mxu0 0.0
  %3360 = vmatpush1.msra.mxu0 0.0
  %3361 = vmatprep.subr.mxu0 0.0
  %3362 = vmatpush1.msra.mxu0 0.0
  %3363 = vmatprep.subr.mxu0 0.0
  %3364 = vmatpush1.msra.mxu0 0.0
  %3365 = vmatprep.subr.mxu0 0.0
  %3366 = vmatpush1.msra.mxu0 0.0
  %3367 = vmatprep.subr.mxu0 0.0
  %3368 = vmatpush1.msra.mxu0 0.0
  %3369 = vmatprep.subr.mxu0 0.0
  %3370 = vmatpush1.msra.mxu0 0.0
  %3371 = vmatprep.subr.mxu0 0.0
  %3372 = vmatpush1.msra.mxu0 0.0
  %3373 = vmatprep.subr.mxu0 0.0
  %3374 = vmatpush1.msra.mxu0 0.0
  %3375 = vmatprep.subr.mxu0 0.0
  %3376 = vmatpush1.msra.mxu0 0.0
  %3377 = vmatprep.subr.mxu0 0.0
  %3378 = vmatpush1.msra.mxu0 0.0
  %3379 = vmatprep.mubr.f32.mxu0 0.0
  %3380 = vmatmul.mubr.f32.gmra.mrb[0].mxu0 %v3313
  %v3381 = vpop.f32.mrb[0].mxu0
  %v3382 = vadd.f32 0.0, %v3381
  %v3383 = vpop.f32.mrb[0].mxu0
  %3384 = vdwg.mxu0
  %v3386 = vsel %vm133, %v3017, 0
  %3388 = vmatprep.subr.mxu0 0.0
  %3389 = vmatpush1.msra.mxu0 %v2142
  %3390 = vmatprep.subr.mxu0 0.0
  %3391 = vmatpush1.msra.mxu0 %v2143
  %3392 = vmatprep.subr.mxu0 0.0
  %3393 = vmatpush1.msra.mxu0 %v2144
  %3394 = vmatprep.subr.mxu0 0.0
  %3395 = vmatpush1.msra.mxu0 %v2145
  %3396 = vmatprep.subr.mxu0 0.0
  %3397 = vmatpush1.msra.mxu0 0.0
  %3398 = vmatprep.subr.mxu0 0.0
  %3399 = vmatpush1.msra.mxu0 0.0
  %3400 = vmatprep.subr.mxu0 0.0
  %3401 = vmatpush1.msra.mxu0 0.0
  %3402 = vmatprep.subr.mxu0 0.0
  %3403 = vmatpush1.msra.mxu0 0.0
  %3404 = vmatprep.subr.mxu0 0.0
  %3405 = vmatpush1.msra.mxu0 0.0
  %3406 = vmatprep.subr.mxu0 0.0
  %3407 = vmatpush1.msra.mxu0 0.0
  %3408 = vmatprep.subr.mxu0 0.0
  %3409 = vmatpush1.msra.mxu0 0.0
  %3410 = vmatprep.subr.mxu0 0.0
  %3411 = vmatpush1.msra.mxu0 0.0
  %3412 = vmatprep.subr.mxu0 0.0
  %3413 = vmatpush1.msra.mxu0 0.0
  %3414 = vmatprep.subr.mxu0 0.0
  %3415 = vmatpush1.msra.mxu0 0.0
  %3416 = vmatprep.subr.mxu0 0.0
  %3417 = vmatpush1.msra.mxu0 0.0
  %3418 = vmatprep.subr.mxu0 0.0
  %3419 = vmatpush1.msra.mxu0 0.0
  %3420 = vmatprep.subr.mxu0 0.0
  %3421 = vmatpush1.msra.mxu0 0.0
  %3422 = vmatprep.subr.mxu0 0.0
  %3423 = vmatpush1.msra.mxu0 0.0
  %3424 = vmatprep.subr.mxu0 0.0
  %3425 = vmatpush1.msra.mxu0 0.0
  %3426 = vmatprep.subr.mxu0 0.0
  %3427 = vmatpush1.msra.mxu0 0.0
  %3428 = vmatprep.subr.mxu0 0.0
  %3429 = vmatpush1.msra.mxu0 0.0
  %3430 = vmatprep.subr.mxu0 0.0
  %3431 = vmatpush1.msra.mxu0 0.0
  %3432 = vmatprep.subr.mxu0 0.0
  %3433 = vmatpush1.msra.mxu0 0.0
  %3434 = vmatprep.subr.mxu0 0.0
  %3435 = vmatpush1.msra.mxu0 0.0
  %3436 = vmatprep.subr.mxu0 0.0
  %3437 = vmatpush1.msra.mxu0 0.0
  %3438 = vmatprep.subr.mxu0 0.0
  %3439 = vmatpush1.msra.mxu0 0.0
  %3440 = vmatprep.subr.mxu0 0.0
  %3441 = vmatpush1.msra.mxu0 0.0
  %3442 = vmatprep.subr.mxu0 0.0
  %3443 = vmatpush1.msra.mxu0 0.0
  %3444 = vmatprep.subr.mxu0 0.0
  %3445 = vmatpush1.msra.mxu0 0.0
  %3446 = vmatprep.subr.mxu0 0.0
  %3447 = vmatpush1.msra.mxu0 0.0
  %3448 = vmatprep.subr.mxu0 0.0
  %3449 = vmatpush1.msra.mxu0 0.0
  %3450 = vmatprep.subr.mxu0 0.0
  %3451 = vmatpush1.msra.mxu0 0.0
  %3452 = vmatprep.mubr.f32.mxu0 0.0
  %3453 = vmatmul.mubr.f32.gmra.mrb[0].mxu0 %v3386
  %v3454 = vpop.f32.mrb[0].mxu0
  %v3455 = vadd.f32 0.0, %v3454
  %v3456 = vpop.f32.mrb[0].mxu0
  %3457 = vdwg.mxu0
  %v3459 = vsel %vm133, %v3090, 0
  %3461 = vmatprep.subr.mxu0 0.0
  %3462 = vmatpush1.msra.mxu0 %v2146
  %3463 = vmatprep.subr.mxu0 0.0
  %3464 = vmatpush1.msra.mxu0 %v2147
  %3465 = vmatprep.subr.mxu0 0.0
  %3466 = vmatpush1.msra.mxu0 %v2148
  %3467 = vmatprep.subr.mxu0 0.0
  %3468 = vmatpush1.msra.mxu0 %v2149
  %3469 = vmatprep.subr.mxu0 0.0
  %3470 = vmatpush1.msra.mxu0 0.0
  %3471 = vmatprep.subr.mxu0 0.0
  %3472 = vmatpush1.msra.mxu0 0.0
  %3473 = vmatprep.subr.mxu0 0.0
  %3474 = vmatpush1.msra.mxu0 0.0
  %3475 = vmatprep.subr.mxu0 0.0
  %3476 = vmatpush1.msra.mxu0 0.0
  %3477 = vmatprep.subr.mxu0 0.0
  %3478 = vmatpush1.msra.mxu0 0.0
  %3479 = vmatprep.subr.mxu0 0.0
  %3480 = vmatpush1.msra.mxu0 0.0
  %3481 = vmatprep.subr.mxu0 0.0
  %3482 = vmatpush1.msra.mxu0 0.0
  %3483 = vmatprep.subr.mxu0 0.0
  %3484 = vmatpush1.msra.mxu0 0.0
  %3485 = vmatprep.subr.mxu0 0.0
  %3486 = vmatpush1.msra.mxu0 0.0
  %3487 = vmatprep.subr.mxu0 0.0
  %3488 = vmatpush1.msra.mxu0 0.0
  %3489 = vmatprep.subr.mxu0 0.0
  %3490 = vmatpush1.msra.mxu0 0.0
  %3491 = vmatprep.subr.mxu0 0.0
  %3492 = vmatpush1.msra.mxu0 0.0
  %3493 = vmatprep.subr.mxu0 0.0
  %3494 = vmatpush1.msra.mxu0 0.0
  %3495 = vmatprep.subr.mxu0 0.0
  %3496 = vmatpush1.msra.mxu0 0.0
  %3497 = vmatprep.subr.mxu0 0.0
  %3498 = vmatpush1.msra.mxu0 0.0
  %3499 = vmatprep.subr.mxu0 0.0
  %3500 = vmatpush1.msra.mxu0 0.0
  %3501 = vmatprep.subr.mxu0 0.0
  %3502 = vmatpush1.msra.mxu0 0.0
  %3503 = vmatprep.subr.mxu0 0.0
  %3504 = vmatpush1.msra.mxu0 0.0
  %3505 = vmatprep.subr.mxu0 0.0
  %3506 = vmatpush1.msra.mxu0 0.0
  %3507 = vmatprep.subr.mxu0 0.0
  %3508 = vmatpush1.msra.mxu0 0.0
  %3509 = vmatprep.subr.mxu0 0.0
  %3510 = vmatpush1.msra.mxu0 0.0
  %3511 = vmatprep.subr.mxu0 0.0
  %3512 = vmatpush1.msra.mxu0 0.0
  %3513 = vmatprep.subr.mxu0 0.0
  %3514 = vmatpush1.msra.mxu0 0.0
  %3515 = vmatprep.subr.mxu0 0.0
  %3516 = vmatpush1.msra.mxu0 0.0
  %3517 = vmatprep.subr.mxu0 0.0
  %3518 = vmatpush1.msra.mxu0 0.0
  %3519 = vmatprep.subr.mxu0 0.0
  %3520 = vmatpush1.msra.mxu0 0.0
  %3521 = vmatprep.subr.mxu0 0.0
  %3522 = vmatpush1.msra.mxu0 0.0
  %3523 = vmatprep.subr.mxu0 0.0
  %3524 = vmatpush1.msra.mxu0 0.0
  %3525 = vmatprep.mubr.f32.mxu0 0.0
  %3526 = vmatmul.mubr.f32.gmra.mrb[0].mxu0 %v3459
  %v3527 = vpop.f32.mrb[0].mxu0
  %v3528 = vadd.f32 0.0, %v3527
  %v3529 = vpop.f32.mrb[0].mxu0
  %3530 = vdwg.mxu0
  %v3532 = vsel %vm133, %v3163, 0
  %3534 = vmatprep.subr.mxu0 0.0
  %3535 = vmatpush1.msra.mxu0 %v2126
  %3536 = vmatprep.subr.mxu0 0.0
  %3537 = vmatpush1.msra.mxu0 %v2127
  %3538 = vmatprep.subr.mxu0 0.0
  %3539 = vmatpush1.msra.mxu0 %v2128
  %3540 = vmatprep.subr.mxu0 0.0
  %3541 = vmatpush1.msra.mxu0 %v2129
  %3542 = vmatprep.subr.mxu0 0.0
  %3543 = vmatpush1.msra.mxu0 0.0
  %3544 = vmatprep.subr.mxu0 0.0
  %3545 = vmatpush1.msra.mxu0 0.0
  %3546 = vmatprep.subr.mxu0 0.0
  %3547 = vmatpush1.msra.mxu0 0.0
  %3548 = vmatprep.subr.mxu0 0.0
  %3549 = vmatpush1.msra.mxu0 0.0
  %3550 = vmatprep.subr.mxu0 0.0
  %3551 = vmatpush1.msra.mxu0 0.0
  %3552 = vmatprep.subr.mxu0 0.0
  %3553 = vmatpush1.msra.mxu0 0.0
  %3554 = vmatprep.subr.mxu0 0.0
  %3555 = vmatpush1.msra.mxu0 0.0
  %3556 = vmatprep.subr.mxu0 0.0
  %3557 = vmatpush1.msra.mxu0 0.0
  %3558 = vmatprep.subr.mxu0 0.0
  %3559 = vmatpush1.msra.mxu0 0.0
  %3560 = vmatprep.subr.mxu0 0.0
  %3561 = vmatpush1.msra.mxu0 0.0
  %3562 = vmatprep.subr.mxu0 0.0
  %3563 = vmatpush1.msra.mxu0 0.0
  %3564 = vmatprep.subr.mxu0 0.0
  %3565 = vmatpush1.msra.mxu0 0.0
  %3566 = vmatprep.subr.mxu0 0.0
  %3567 = vmatpush1.msra.mxu0 0.0
  %3568 = vmatprep.subr.mxu0 0.0
  %3569 = vmatpush1.msra.mxu0 0.0
  %3570 = vmatprep.subr.mxu0 0.0
  %3571 = vmatpush1.msra.mxu0 0.0
  %3572 = vmatprep.subr.mxu0 0.0
  %3573 = vmatpush1.msra.mxu0 0.0
  %3574 = vmatprep.subr.mxu0 0.0
  %3575 = vmatpush1.msra.mxu0 0.0
  %3576 = vmatprep.subr.mxu0 0.0
  %3577 = vmatpush1.msra.mxu0 0.0
  %3578 = vmatprep.subr.mxu0 0.0
  %3579 = vmatpush1.msra.mxu0 0.0
  %3580 = vmatprep.subr.mxu0 0.0
  %3581 = vmatpush1.msra.mxu0 0.0
  %3582 = vmatprep.subr.mxu0 0.0
  %3583 = vmatpush1.msra.mxu0 0.0
  %3584 = vmatprep.subr.mxu0 0.0
  %3585 = vmatpush1.msra.mxu0 0.0
  %3586 = vmatprep.subr.mxu0 0.0
  %3587 = vmatpush1.msra.mxu0 0.0
  %3588 = vmatprep.subr.mxu0 0.0
  %3589 = vmatpush1.msra.mxu0 0.0
  %3590 = vmatprep.subr.mxu0 0.0
  %3591 = vmatpush1.msra.mxu0 0.0
  %3592 = vmatprep.subr.mxu0 0.0
  %3593 = vmatpush1.msra.mxu0 0.0
  %3594 = vmatprep.subr.mxu0 0.0
  %3595 = vmatpush1.msra.mxu0 0.0
  %3596 = vmatprep.subr.mxu0 0.0
  %3597 = vmatpush1.msra.mxu0 0.0
  %3598 = vmatprep.mubr.f32.mxu0 0.0
  %3599 = vmatmul.mubr.f32.gmra.mrb[0].mxu0 %v3532
  %v3600 = vpop.f32.mrb[0].mxu0
  %v3601 = vadd.f32 0.0, %v3600
  %v3602 = vpop.f32.mrb[0].mxu0
  %3603 = vdwg.mxu0
  %v3605 = vsel %vm133, %v3236, 0
  %3607 = vmatprep.subr.mxu0 0.0
  %3608 = vmatpush1.msra.mxu0 %v2130
  %3609 = vmatprep.subr.mxu0 0.0
  %3610 = vmatpush1.msra.mxu0 %v2131
  %3611 = vmatprep.subr.mxu0 0.0
  %3612 = vmatpush1.msra.mxu0 %v2132
  %3613 = vmatprep.subr.mxu0 0.0
  %3614 = vmatpush1.msra.mxu0 %v2133
  %3615 = vmatprep.subr.mxu0 0.0
  %3616 = vmatpush1.msra.mxu0 0.0
  %3617 = vmatprep.subr.mxu0 0.0
  %3618 = vmatpush1.msra.mxu0 0.0
  %3619 = vmatprep.subr.mxu0 0.0
  %3620 = vmatpush1.msra.mxu0 0.0
  %3621 = vmatprep.subr.mxu0 0.0
  %3622 = vmatpush1.msra.mxu0 0.0
  %3623 = vmatprep.subr.mxu0 0.0
  %3624 = vmatpush1.msra.mxu0 0.0
  %3625 = vmatprep.subr.mxu0 0.0
  %3626 = vmatpush1.msra.mxu0 0.0
  %3627 = vmatprep.subr.mxu0 0.0
  %3628 = vmatpush1.msra.mxu0 0.0
  %3629 = vmatprep.subr.mxu0 0.0
  %3630 = vmatpush1.msra.mxu0 0.0
  %3631 = vmatprep.subr.mxu0 0.0
  %3632 = vmatpush1.msra.mxu0 0.0
  %3633 = vmatprep.subr.mxu0 0.0
  %3634 = vmatpush1.msra.mxu0 0.0
  %3635 = vmatprep.subr.mxu0 0.0
  %3636 = vmatpush1.msra.mxu0 0.0
  %3637 = vmatprep.subr.mxu0 0.0
  %3638 = vmatpush1.msra.mxu0 0.0
  %3639 = vmatprep.subr.mxu0 0.0
  %3640 = vmatpush1.msra.mxu0 0.0
  %3641 = vmatprep.subr.mxu0 0.0
  %3642 = vmatpush1.msra.mxu0 0.0
  %3643 = vmatprep.subr.mxu0 0.0
  %3644 = vmatpush1.msra.mxu0 0.0
  %3645 = vmatprep.subr.mxu0 0.0
  %3646 = vmatpush1.msra.mxu0 0.0
  %3647 = vmatprep.subr.mxu0 0.0
  %3648 = vmatpush1.msra.mxu0 0.0
  %3649 = vmatprep.subr.mxu0 0.0
  %3650 = vmatpush1.msra.mxu0 0.0
  %3651 = vmatprep.subr.mxu0 0.0
  %3652 = vmatpush1.msra.mxu0 0.0
  %3653 = vmatprep.subr.mxu0 0.0
  %3654 = vmatpush1.msra.mxu0 0.0
  %3655 = vmatprep.subr.mxu0 0.0
  %3656 = vmatpush1.msra.mxu0 0.0
  %3657 = vmatprep.subr.mxu0 0.0
  %3658 = vmatpush1.msra.mxu0 0.0
  %3659 = vmatprep.subr.mxu0 0.0
  %3660 = vmatpush1.msra.mxu0 0.0
  %3661 = vmatprep.subr.mxu0 0.0
  %3662 = vmatpush1.msra.mxu0 0.0
  %3663 = vmatprep.subr.mxu0 0.0
  %3664 = vmatpush1.msra.mxu0 0.0
  %3665 = vmatprep.subr.mxu0 0.0
  %3666 = vmatpush1.msra.mxu0 0.0
  %3667 = vmatprep.subr.mxu0 0.0
  %3668 = vmatpush1.msra.mxu0 0.0
  %3669 = vmatprep.subr.mxu0 0.0
  %3670 = vmatpush1.msra.mxu0 0.0
  %3671 = vmatprep.mubr.f32.mxu0 0.0
  %3672 = vmatmul.mubr.f32.gmra.mrb[0].mxu0 %v3605
  %v3673 = vpop.f32.mrb[0].mxu0
  %v3674 = vadd.f32 0.0, %v3673
  %v3675 = vpop.f32.mrb[0].mxu0
  %3676 = vdwg.mxu0
  %v3678 = vsel %vm133, %v3309, 0
  %3680 = vmatprep.subr.mxu0 0.0
  %3681 = vmatpush1.msra.mxu0 %v2134
  %3682 = vmatprep.subr.mxu0 0.0
  %3683 = vmatpush1.msra.mxu0 %v2135
  %3684 = vmatprep.subr.mxu0 0.0
  %3685 = vmatpush1.msra.mxu0 %v2136
  %3686 = vmatprep.subr.mxu0 0.0
  %3687 = vmatpush1.msra.mxu0 %v2137
  %3688 = vmatprep.subr.mxu0 0.0
  %3689 = vmatpush1.msra.mxu0 0.0
  %3690 = vmatprep.subr.mxu0 0.0
  %3691 = vmatpush1.msra.mxu0 0.0
  %3692 = vmatprep.subr.mxu0 0.0
  %3693 = vmatpush1.msra.mxu0 0.0
  %3694 = vmatprep.subr.mxu0 0.0
  %3695 = vmatpush1.msra.mxu0 0.0
  %3696 = vmatprep.subr.mxu0 0.0
  %3697 = vmatpush1.msra.mxu0 0.0
  %3698 = vmatprep.subr.mxu0 0.0
  %3699 = vmatpush1.msra.mxu0 0.0
  %3700 = vmatprep.subr.mxu0 0.0
  %3701 = vmatpush1.msra.mxu0 0.0
  %3702 = vmatprep.subr.mxu0 0.0
  %3703 = vmatpush1.msra.mxu0 0.0
  %3704 = vmatprep.subr.mxu0 0.0
  %3705 = vmatpush1.msra.mxu0 0.0
  %3706 = vmatprep.subr.mxu0 0.0
  %3707 = vmatpush1.msra.mxu0 0.0
  %3708 = vmatprep.subr.mxu0 0.0
  %3709 = vmatpush1.msra.mxu0 0.0
  %3710 = vmatprep.subr.mxu0 0.0
  %3711 = vmatpush1.msra.mxu0 0.0
  %3712 = vmatprep.subr.mxu0 0.0
  %3713 = vmatpush1.msra.mxu0 0.0
  %3714 = vmatprep.subr.mxu0 0.0
  %3715 = vmatpush1.msra.mxu0 0.0
  %3716 = vmatprep.subr.mxu0 0.0
  %3717 = vmatpush1.msra.mxu0 0.0
  %3718 = vmatprep.subr.mxu0 0.0
  %3719 = vmatpush1.msra.mxu0 0.0
  %3720 = vmatprep.subr.mxu0 0.0
  %3721 = vmatpush1.msra.mxu0 0.0
  %3722 = vmatprep.subr.mxu0 0.0
  %3723 = vmatpush1.msra.mxu0 0.0
  %3724 = vmatprep.subr.mxu0 0.0
  %3725 = vmatpush1.msra.mxu0 0.0
  %3726 = vmatprep.subr.mxu0 0.0
  %3727 = vmatpush1.msra.mxu0 0.0
  %3728 = vmatprep.subr.mxu0 0.0
  %3729 = vmatpush1.msra.mxu0 0.0
  %3730 = vmatprep.subr.mxu0 0.0
  %3731 = vmatpush1.msra.mxu0 0.0
  %3732 = vmatprep.subr.mxu0 0.0
  %3733 = vmatpush1.msra.mxu0 0.0
  %3734 = vmatprep.subr.mxu0 0.0
  %3735 = vmatpush1.msra.mxu0 0.0
  %3736 = vmatprep.subr.mxu0 0.0
  %3737 = vmatpush1.msra.mxu0 0.0
  %3738 = vmatprep.subr.mxu0 0.0
  %3739 = vmatpush1.msra.mxu0 0.0
  %3740 = vmatprep.subr.mxu0 0.0
  %3741 = vmatpush1.msra.mxu0 0.0
  %3742 = vmatprep.subr.mxu0 0.0
  %3743 = vmatpush1.msra.mxu0 0.0
  %3744 = vmatprep.mubr.f32.mxu0 0.0
  %3745 = vmatmul.mubr.f32.gmra.mrb[0].mxu0 %v3678
  %v3746 = vpop.f32.mrb[0].mxu0
  %v3747 = vadd.f32 0.0, %v3746
  %v3748 = vpop.f32.mrb[0].mxu0
  %3749 = vdwg.mxu0
  %v3751 = vsel %vm133, %v3382, 0
  %3753 = vmatprep.subr.mxu0 0.0
  %3754 = vmatpush1.msra.mxu0 %v2138
  %3755 = vmatprep.subr.mxu0 0.0
  %3756 = vmatpush1.msra.mxu0 %v2139
  %3757 = vmatprep.subr.mxu0 0.0
  %3758 = vmatpush1.msra.mxu0 %v2140
  %3759 = vmatprep.subr.mxu0 0.0
  %3760 = vmatpush1.msra.mxu0 %v2141
  %3761 = vmatprep.subr.mxu0 0.0
  %3762 = vmatpush1.msra.mxu0 0.0
  %3763 = vmatprep.subr.mxu0 0.0
  %3764 = vmatpush1.msra.mxu0 0.0
  %3765 = vmatprep.subr.mxu0 0.0
  %3766 = vmatpush1.msra.mxu0 0.0
  %3767 = vmatprep.subr.mxu0 0.0
  %3768 = vmatpush1.msra.mxu0 0.0
  %3769 = vmatprep.subr.mxu0 0.0
  %3770 = vmatpush1.msra.mxu0 0.0
  %3771 = vmatprep.subr.mxu0 0.0
  %3772 = vmatpush1.msra.mxu0 0.0
  %3773 = vmatprep.subr.mxu0 0.0
  %3774 = vmatpush1.msra.mxu0 0.0
  %3775 = vmatprep.subr.mxu0 0.0
  %3776 = vmatpush1.msra.mxu0 0.0
  %3777 = vmatprep.subr.mxu0 0.0
  %3778 = vmatpush1.msra.mxu0 0.0
  %3779 = vmatprep.subr.mxu0 0.0
  %3780 = vmatpush1.msra.mxu0 0.0
  %3781 = vmatprep.subr.mxu0 0.0
  %3782 = vmatpush1.msra.mxu0 0.0
  %3783 = vmatprep.subr.mxu0 0.0
  %3784 = vmatpush1.msra.mxu0 0.0
  %3785 = vmatprep.subr.mxu0 0.0
  %3786 = vmatpush1.msra.mxu0 0.0
  %3787 = vmatprep.subr.mxu0 0.0
  %3788 = vmatpush1.msra.mxu0 0.0
  %3789 = vmatprep.subr.mxu0 0.0
  %3790 = vmatpush1.msra.mxu0 0.0
  %3791 = vmatprep.subr.mxu0 0.0
  %3792 = vmatpush1.msra.mxu0 0.0
  %3793 = vmatprep.subr.mxu0 0.0
  %3794 = vmatpush1.msra.mxu0 0.0
  %3795 = vmatprep.subr.mxu0 0.0
  %3796 = vmatpush1.msra.mxu0 0.0
  %3797 = vmatprep.subr.mxu0 0.0
  %3798 = vmatpush1.msra.mxu0 0.0
  %3799 = vmatprep.subr.mxu0 0.0
  %3800 = vmatpush1.msra.mxu0 0.0
  %3801 = vmatprep.subr.mxu0 0.0
  %3802 = vmatpush1.msra.mxu0 0.0
  %3803 = vmatprep.subr.mxu0 0.0
  %3804 = vmatpush1.msra.mxu0 0.0
  %3805 = vmatprep.subr.mxu0 0.0
  %3806 = vmatpush1.msra.mxu0 0.0
  %3807 = vmatprep.subr.mxu0 0.0
  %3808 = vmatpush1.msra.mxu0 0.0
  %3809 = vmatprep.subr.mxu0 0.0
  %3810 = vmatpush1.msra.mxu0 0.0
  %3811 = vmatprep.subr.mxu0 0.0
  %3812 = vmatpush1.msra.mxu0 0.0
  %3813 = vmatprep.subr.mxu0 0.0
  %3814 = vmatpush1.msra.mxu0 0.0
  %3815 = vmatprep.subr.mxu0 0.0
  %3816 = vmatpush1.msra.mxu0 0.0
  %3817 = vmatprep.mubr.f32.mxu0 0.0
  %3818 = vmatmul.mubr.f32.gmra.mrb[0].mxu0 %v3751
  %v3819 = vpop.f32.mrb[0].mxu0
  %v3820 = vadd.f32 0.0, %v3819
  %v3821 = vpop.f32.mrb[0].mxu0
  %3822 = vdwg.mxu0
  %v3824 = vsel %vm133, %v3455, 0
  %3826 = vmatprep.subr.mxu0 0.0
  %3827 = vmatpush1.msra.mxu0 %v2142
  %3828 = vmatprep.subr.mxu0 0.0
  %3829 = vmatpush1.msra.mxu0 %v2143
  %3830 = vmatprep.subr.mxu0 0.0
  %3831 = vmatpush1.msra.mxu0 %v2144
  %3832 = vmatprep.subr.mxu0 0.0
  %3833 = vmatpush1.msra.mxu0 %v2145
  %3834 = vmatprep.subr.mxu0 0.0
  %3835 = vmatpush1.msra.mxu0 0.0
  %3836 = vmatprep.subr.mxu0 0.0
  %3837 = vmatpush1.msra.mxu0 0.0
  %3838 = vmatprep.subr.mxu0 0.0
  %3839 = vmatpush1.msra.mxu0 0.0
  %3840 = vmatprep.subr.mxu0 0.0
  %3841 = vmatpush1.msra.mxu0 0.0
  %3842 = vmatprep.subr.mxu0 0.0
  %3843 = vmatpush1.msra.mxu0 0.0
  %3844 = vmatprep.subr.mxu0 0.0
  %3845 = vmatpush1.msra.mxu0 0.0
  %3846 = vmatprep.subr.mxu0 0.0
  %3847 = vmatpush1.msra.mxu0 0.0
  %3848 = vmatprep.subr.mxu0 0.0
  %3849 = vmatpush1.msra.mxu0 0.0
  %3850 = vmatprep.subr.mxu0 0.0
  %3851 = vmatpush1.msra.mxu0 0.0
  %3852 = vmatprep.subr.mxu0 0.0
  %3853 = vmatpush1.msra.mxu0 0.0
  %3854 = vmatprep.subr.mxu0 0.0
  %3855 = vmatpush1.msra.mxu0 0.0
  %3856 = vmatprep.subr.mxu0 0.0
  %3857 = vmatpush1.msra.mxu0 0.0
  %3858 = vmatprep.subr.mxu0 0.0
  %3859 = vmatpush1.msra.mxu0 0.0
  %3860 = vmatprep.subr.mxu0 0.0
  %3861 = vmatpush1.msra.mxu0 0.0
  %3862 = vmatprep.subr.mxu0 0.0
  %3863 = vmatpush1.msra.mxu0 0.0
  %3864 = vmatprep.subr.mxu0 0.0
  %3865 = vmatpush1.msra.mxu0 0.0
  %3866 = vmatprep.subr.mxu0 0.0
  %3867 = vmatpush1.msra.mxu0 0.0
  %3868 = vmatprep.subr.mxu0 0.0
  %3869 = vmatpush1.msra.mxu0 0.0
  %3870 = vmatprep.subr.mxu0 0.0
  %3871 = vmatpush1.msra.mxu0 0.0
  %3872 = vmatprep.subr.mxu0 0.0
  %3873 = vmatpush1.msra.mxu0 0.0
  %3874 = vmatprep.subr.mxu0 0.0
  %3875 = vmatpush1.msra.mxu0 0.0
  %3876 = vmatprep.subr.mxu0 0.0
  %3877 = vmatpush1.msra.mxu0 0.0
  %3878 = vmatprep.subr.mxu0 0.0
  %3879 = vmatpush1.msra.mxu0 0.0
  %3880 = vmatprep.subr.mxu0 0.0
  %3881 = vmatpush1.msra.mxu0 0.0
  %3882 = vmatprep.subr.mxu0 0.0
  %3883 = vmatpush1.msra.mxu0 0.0
  %3884 = vmatprep.subr.mxu0 0.0
  %3885 = vmatpush1.msra.mxu0 0.0
  %3886 = vmatprep.subr.mxu0 0.0
  %3887 = vmatpush1.msra.mxu0 0.0
  %3888 = vmatprep.subr.mxu0 0.0
  %3889 = vmatpush1.msra.mxu0 0.0
  %3890 = vmatprep.mubr.f32.mxu0 0.0
  %3891 = vmatmul.mubr.f32.gmra.mrb[0].mxu0 %v3824
  %v3892 = vpop.f32.mrb[0].mxu0
  %v3893 = vadd.f32 0.0, %v3892
  %v3894 = vpop.f32.mrb[0].mxu0
  %3895 = vdwg.mxu0
  %v3897 = vsel %vm133, %v3528, 0
  %3899 = vmatprep.subr.mxu0 0.0
  %3900 = vmatpush1.msra.mxu0 %v2146
  %3901 = vmatprep.subr.mxu0 0.0
  %3902 = vmatpush1.msra.mxu0 %v2147
  %3903 = vmatprep.subr.mxu0 0.0
  %3904 = vmatpush1.msra.mxu0 %v2148
  %3905 = vmatprep.subr.mxu0 0.0
  %3906 = vmatpush1.msra.mxu0 %v2149
  %3907 = vmatprep.subr.mxu0 0.0
  %3908 = vmatpush1.msra.mxu0 0.0
  %3909 = vmatprep.subr.mxu0 0.0
  %3910 = vmatpush1.msra.mxu0 0.0
  %3911 = vmatprep.subr.mxu0 0.0
  %3912 = vmatpush1.msra.mxu0 0.0
  %3913 = vmatprep.subr.mxu0 0.0
  %3914 = vmatpush1.msra.mxu0 0.0
  %3915 = vmatprep.subr.mxu0 0.0
  %3916 = vmatpush1.msra.mxu0 0.0
  %3917 = vmatprep.subr.mxu0 0.0
  %3918 = vmatpush1.msra.mxu0 0.0
  %3919 = vmatprep.subr.mxu0 0.0
  %3920 = vmatpush1.msra.mxu0 0.0
  %3921 = vmatprep.subr.mxu0 0.0
  %3922 = vmatpush1.msra.mxu0 0.0
  %3923 = vmatprep.subr.mxu0 0.0
  %3924 = vmatpush1.msra.mxu0 0.0
  %3925 = vmatprep.subr.mxu0 0.0
  %3926 = vmatpush1.msra.mxu0 0.0
  %3927 = vmatprep.subr.mxu0 0.0
  %3928 = vmatpush1.msra.mxu0 0.0
  %3929 = vmatprep.subr.mxu0 0.0
  %3930 = vmatpush1.msra.mxu0 0.0
  %3931 = vmatprep.subr.mxu0 0.0
  %3932 = vmatpush1.msra.mxu0 0.0
  %3933 = vmatprep.subr.mxu0 0.0
  %3934 = vmatpush1.msra.mxu0 0.0
  %3935 = vmatprep.subr.mxu0 0.0
  %3936 = vmatpush1.msra.mxu0 0.0
  %3937 = vmatprep.subr.mxu0 0.0
  %3938 = vmatpush1.msra.mxu0 0.0
  %3939 = vmatprep.subr.mxu0 0.0
  %3940 = vmatpush1.msra.mxu0 0.0
  %3941 = vmatprep.subr.mxu0 0.0
  %3942 = vmatpush1.msra.mxu0 0.0
  %3943 = vmatprep.subr.mxu0 0.0
  %3944 = vmatpush1.msra.mxu0 0.0
  %3945 = vmatprep.subr.mxu0 0.0
  %3946 = vmatpush1.msra.mxu0 0.0
  %3947 = vmatprep.subr.mxu0 0.0
  %3948 = vmatpush1.msra.mxu0 0.0
  %3949 = vmatprep.subr.mxu0 0.0
  %3950 = vmatpush1.msra.mxu0 0.0
  %3951 = vmatprep.subr.mxu0 0.0
  %3952 = vmatpush1.msra.mxu0 0.0
  %3953 = vmatprep.subr.mxu0 0.0
  %3954 = vmatpush1.msra.mxu0 0.0
  %3955 = vmatprep.subr.mxu0 0.0
  %3956 = vmatpush1.msra.mxu0 0.0
  %3957 = vmatprep.subr.mxu0 0.0
  %3958 = vmatpush1.msra.mxu0 0.0
  %3959 = vmatprep.subr.mxu0 0.0
  %3960 = vmatpush1.msra.mxu0 0.0
  %3961 = vmatprep.subr.mxu0 0.0
  %3962 = vmatpush1.msra.mxu0 0.0
  %3963 = vmatprep.mubr.f32.mxu0 0.0
  %3964 = vmatmul.mubr.f32.gmra.mrb[0].mxu0 %v3897
  %v3965 = vpop.f32.mrb[0].mxu0
  %v3966 = vadd.f32 0.0, %v3965
  %v3967 = vpop.f32.mrb[0].mxu0
  %3968 = vdwg.mxu0
  %v3969 = vrot.slane %v2725, 7
  %v3970 = vrot.slane %v2798, 7
  %v3971 = vrot.slane %v2871, 7
  %v3972 = vrot.slane %v2944, 7
  %v3973 = vrot.slane %v3017, 7
  %v3974 = vrot.slane %v3090, 7
  %v3981 = vrot.slane %v3163, 6
  %v3982 = vrot.slane %v3236, 6
  %v3983 = vrot.slane %v3309, 6
  %v3984 = vrot.slane %v3382, 6
  %v3985 = vrot.slane %v3455, 6
  %v3986 = vrot.slane %v3528, 6
  %v3999 = vrot.slane %v3601, 5
  %v4000 = vrot.slane %v3674, 5
  %v4001 = vrot.slane %v3747, 5
  %v4002 = vrot.slane %v3820, 5
  %v4003 = vrot.slane %v3893, 5
  %v4004 = vrot.slane %v3966, 5
  %v4011 = vsel %vm2192, %v2272, %v3969
  %v4012 = vsel %vm2192, %v2348, %v3970
  %v4013 = vsel %vm2192, %v2424, %v3971
  %v4014 = vsel %vm2192, %v2500, %v3972
  %v4015 = vsel %vm2192, %v2576, %v3973
  %v4016 = vsel %vm2192, %v2652, %v3974
  %vm4017 = vcmask 1041408
  %v4018 = vsel %vm4017, %v4011, %v3981
  %v4019 = vsel %vm4017, %v4012, %v3982
  %v4020 = vsel %vm4017, %v4013, %v3983
  %v4021 = vsel %vm4017, %v4014, %v3984
  %v4022 = vsel %vm4017, %v4015, %v3985
  %v4023 = vsel %vm4017, %v4016, %v3986
  %v4024 = vsel %vm1168, %v4018, %v3999
  %v4025 = vsel %vm1168, %v4019, %v4000
  %v4026 = vsel %vm1168, %v4020, %v4001
  %v4027 = vsel %vm1168, %v4021, %v4002
  %v4028 = vsel %vm1168, %v4022, %v4003
  %v4029 = vsel %vm1168, %v4023, %v4004
  %v4036 = vcombine.low %v2193, %v2194
  %v4037 = vcombine.low %v2195, %v2196
  %v4038 = vcombine.low %v2197, %v2198
  %v4045 = vcombine.low %v4024, %v4025
  %v4046 = vcombine.low %v4026, %v4027
  %v4047 = vcombine.low %v4028, %v4029
  %v4048 = vld [vmem:[%s3] sm:$0xff]
  %v4049 = vld [vmem:[%s3 + $0x8] sm:$0xff]
  %v4050 = vld [vmem:[%s3 + $0x10] sm:$0xff]
  %v4051 = vld [vmem:[%s3 + $0x18] sm:$0xff]
  %v4052 = vld [vmem:[%s4] sm:$0x1]
  %v4054 = vlaneseq
  %v4055 = vshrl.u32 %v4054, 7
  %v4056 = vsub.s32 0, %v4055
  %v4057 = vrot.slane %v4052, %v4056
  %v4059 = vsel %vm133, %v4036, 0
  %v4061 = vsel %vm133, %v4037, 0
  %v4063 = vsel %vm133, %v4038, 0
  %v4065 = vsel %vm133, %v4045, 0
  %v4067 = vsel %vm133, %v4046, 0
  %v4069 = vsel %vm133, %v4047, 0
  %4071 = vmatprep.subr.mxu0 0.0
  %4072 = vmatpush1.msra.mxu0 %v4048
  %4073 = vmatprep.subr.mxu0 0.0
  %4074 = vmatpush1.msra.mxu0 %v4049
  %4075 = vmatprep.subr.mxu0 0.0
  %4076 = vmatpush1.msra.mxu0 %v4050
  %4077 = vmatprep.subr.mxu0 0.0
  %4078 = vmatpush1.msra.mxu0 %v4051
  %4079 = vmatprep.subr.mxu0 0.0
  %4080 = vmatpush1.msra.mxu0 0.0
  %4081 = vmatprep.subr.mxu0 0.0
  %4082 = vmatpush1.msra.mxu0 0.0
  %4083 = vmatprep.subr.mxu0 0.0
  %4084 = vmatpush1.msra.mxu0 0.0
  %4085 = vmatprep.subr.mxu0 0.0
  %4086 = vmatpush1.msra.mxu0 0.0
  %4087 = vmatprep.subr.mxu0 0.0
  %4088 = vmatpush1.msra.mxu0 0.0
  %4089 = vmatprep.subr.mxu0 0.0
  %4090 = vmatpush1.msra.mxu0 0.0
  %4091 = vmatprep.subr.mxu0 0.0
  %4092 = vmatpush1.msra.mxu0 0.0
  %4093 = vmatprep.subr.mxu0 0.0
  %4094 = vmatpush1.msra.mxu0 0.0
  %4095 = vmatprep.subr.mxu0 0.0
  %4096 = vmatpush1.msra.mxu0 0.0
  %4097 = vmatprep.subr.mxu0 0.0
  %4098 = vmatpush1.msra.mxu0 0.0
  %4099 = vmatprep.subr.mxu0 0.0
  %4100 = vmatpush1.msra.mxu0 0.0
  %4101 = vmatprep.subr.mxu0 0.0
  %4102 = vmatpush1.msra.mxu0 0.0
  %4103 = vmatprep.subr.mxu0 0.0
  %4104 = vmatpush1.msra.mxu0 0.0
  %4105 = vmatprep.subr.mxu0 0.0
  %4106 = vmatpush1.msra.mxu0 0.0
  %4107 = vmatprep.subr.mxu0 0.0
  %4108 = vmatpush1.msra.mxu0 0.0
  %4109 = vmatprep.subr.mxu0 0.0
  %4110 = vmatpush1.msra.mxu0 0.0
  %4111 = vmatprep.subr.mxu0 0.0
  %4112 = vmatpush1.msra.mxu0 0.0
  %4113 = vmatprep.subr.mxu0 0.0
  %4114 = vmatpush1.msra.mxu0 0.0
  %4115 = vmatprep.subr.mxu0 0.0
  %4116 = vmatpush1.msra.mxu0 0.0
  %4117 = vmatprep.subr.mxu0 0.0
  %4118 = vmatpush1.msra.mxu0 0.0
  %4119 = vmatprep.subr.mxu0 0.0
  %4120 = vmatpush1.msra.mxu0 0.0
  %4121 = vmatprep.subr.mxu0 0.0
  %4122 = vmatpush1.msra.mxu0 0.0
  %4123 = vmatprep.subr.mxu0 0.0
  %4124 = vmatpush1.msra.mxu0 0.0
  %4125 = vmatprep.subr.mxu0 0.0
  %4126 = vmatpush1.msra.mxu0 0.0
  %4127 = vmatprep.subr.mxu0 0.0
  %4128 = vmatpush1.msra.mxu0 0.0
  %4129 = vmatprep.subr.mxu0 0.0
  %4130 = vmatpush1.msra.mxu0 0.0
  %4131 = vmatprep.subr.mxu0 0.0
  %4132 = vmatpush1.msra.mxu0 0.0
  %4133 = vmatprep.subr.mxu0 0.0
  %4134 = vmatpush1.msra.mxu0 0.0
  %4135 = vmatprep.mubr.f32.mxu0 0.0
  %4136 = vmatmul.mubr.f32.gmra.mrb[0].mxu0 %v4059
  %v4137 = vpop.f32.mrb[0].mxu0
  %v4138 = vadd.f32 %v4057, %v4137
  %v4139 = vpop.f32.mrb[0].mxu0
  %4140 = vmatprep.mubr.f32.mxu0 0.0
  %4141 = vmatmul.mubr.f32.gmra.mrb[0].mxu0 %v4061
  %v4142 = vpop.f32.mrb[0].mxu0
  %v4143 = vadd.f32 %v4057, %v4142
  %v4144 = vpop.f32.mrb[0].mxu0
  %4145 = vmatprep.mubr.f32.mxu0 0.0
  %4146 = vmatmul.mubr.f32.gmra.mrb[0].mxu0 %v4063
  %v4147 = vpop.f32.mrb[0].mxu0
  %v4148 = vadd.f32 %v4057, %v4147
  %v4149 = vpop.f32.mrb[0].mxu0
  %4150 = vmatprep.mubr.f32.mxu0 0.0
  %4151 = vmatmul.mubr.f32.gmra.mrb[0].mxu0 %v4065
  %v4152 = vpop.f32.mrb[0].mxu0
  %v4153 = vadd.f32 %v4057, %v4152
  %v4154 = vpop.f32.mrb[0].mxu0
  %4155 = vmatprep.mubr.f32.mxu0 0.0
  %4156 = vmatmul.mubr.f32.gmra.mrb[0].mxu0 %v4067
  %v4157 = vpop.f32.mrb[0].mxu0
  %v4158 = vadd.f32 %v4057, %v4157
  %v4159 = vpop.f32.mrb[0].mxu0
  %4160 = vmatprep.mubr.f32.mxu0 0.0
  %4161 = vmatmul.mubr.f32.gmra.mrb[0].mxu0 %v4069
  %v4162 = vpop.f32.mrb[0].mxu0
  %v4163 = vadd.f32 %v4057, %v4162
  %v4164 = vpop.f32.mrb[0].mxu0
  %4165 = vdwg.mxu0
  %4166 = vst.msk [vmem:[%s5] sm:$0xff] %vm34, %v4138
  %4167 = vst.msk [vmem:[%s5 + $0x8] sm:$0xff] %vm34, %v4143
  %4168 = vst.msk [vmem:[%s5 + $0x10] sm:$0xff] %vm34, %v4148
  %4169 = vst.msk [vmem:[%s6] sm:$0xff] %vm34, %v4153
  %4170 = vst.msk [vmem:[%s6 + $0x8] sm:$0xff] %vm34, %v4158
  %4171 = vst.msk [vmem:[%s6 + $0x10] sm:$0xff] %vm34, %v4163
  // Predicated region
  $region22: #{tpu_custom_call.1} parent=0 // pred_check
    _
  $region23: #{tpu_custom_call.1} parent=0 // pred_check_branch
    %4173 = sbr.rel (0) target = $region25
  $region24: #{tpu_custom_call.1} parent=0 // pred_region
    _
  $region25: #{tpu_custom_call.1} parent=0 // pred_fallthru
    _
  // Predicated region
  $region26: #{tpu_custom_call.1} parent=0 // pred_check
    _
  $region27: #{tpu_custom_call.1} parent=0 // pred_check_branch
    %4175 = sbr.rel (0) target = $region29
  $region28: #{tpu_custom_call.1} parent=0 // pred_region
    _
  $region29: #{tpu_custom_call.1} parent=0 // pred_fallthru
    _
  // Predicated region
  $region30: #{tpu_custom_call.1} parent=0 // pred_check
    _
  $region31: #{tpu_custom_call.1} parent=0 // pred_check_branch
    %4177 = sbr.rel (0) target = $region33
  $region32: #{tpu_custom_call.1} parent=0 // pred_region
    _
  $region33: #{tpu_custom_call.1} parent=0 // pred_fallthru
    _
  // Predicated region
  $region34: #{tpu_custom_call.1} parent=0 // pred_check
    _
  $region35: #{tpu_custom_call.1} parent=0 // pred_check_branch
    %4179 = sbr.rel (0) target = $region37
  $region36: #{tpu_custom_call.1} parent=0 // pred_region
    _
  $region37: #{tpu_custom_call.1} parent=0 // pred_fallthru
    _

</llo_original>
